<compile_context>
chip_gen: v6e
topology: v6e:2x2x1
jax: 0.10.0
libtpu: 0.0.40
codegen_flags: <defaults>
</compile_context>

<pallas_src>
import functools

import jax
import jax.numpy as jnp
from jax.experimental import pallas as pl
from jax.experimental.pallas import tpu as pltpu

EPS = 1e-5
NEG_SLOPE = 0.1
LANE = 128


# ---------------------------------------------------------------------------
# Helpers
# ---------------------------------------------------------------------------
def _round_up(x, m):
    return (x + m - 1) // m * m


def _pad_last(a, target):
    pad = target - a.shape[-1]
    if pad == 0:
        return a
    return jnp.pad(a, [(0, 0)] * (a.ndim - 1) + [(0, pad)])


def _vmem_config():
    """Scoped-VMEM request + per-pallas_call tiling budget, derived from the chip."""
    try:
        cap = int(getattr(pltpu.get_tpu_info(), "vmem_capacity_bytes", 64 << 20))
    except Exception:
        cap = 64 << 20  # conservative fallback (v7x-sized)
    limit = min(cap * 3 // 4, 96 << 20)   # ~48 MiB on v7x (64 MiB/TC), 96 MiB on v5e/v6e
    budget = limit // 3                   # headroom for scratch, f32 temporaries, spills
    return limit, budget


def _pick_tile_m(m, k_pad, cout_pad, budget_bytes):
    """Row tile for the (m, k_pad) x (k_pad, cout_pad) 1x1-conv passes."""
    per_row = (2 * k_pad * 2 + 2 * cout_pad * 4      # double-buffered in / out blocks
               + k_pad * 4 + 2 * cout_pad * 4)       # in-kernel f32 temporaries
    fixed = 2 * k_pad * cout_pad * 2                 # double-buffered bf16 weight block
    cap = max(8, (budget_bytes - fixed) // max(per_row, 1))
    cands = [c for c in (4096, 2048, 1024, 512, 256, 128, 64, 32, 16, 8)
             if c <= cap and c <= max(_round_up(m, 8), 8)] or [8]
    # Largest tile that still leaves >= 4 grid steps (v7x megacore + double buffering),
    # relaxed to >= 2 and then 1 for tiny problems.
    for min_steps in (4, 2, 1):
        for c in cands:
            if -(-m // c) >= min_steps:
                return c
    return cands[-1]


def _pick_tile_h(h, w, wtot, cin_pad, cout_pad, n_batch, budget_bytes):
    """Output-row tile for the halo-tiled 3x3 conv (tile_h must divide H)."""
    # TODO(synk): remainder row-tiles (H with no convenient divisor) are not handled;
    # tile_h falls back to a divisor of H (worst case 1).
    def need(th):
        buf = 2 * (th + 2) * wtot * cin_pad * 2                   # halo scratch (x2 slots)
        wgt = 2 * 9 * cin_pad * cout_pad * 2                      # weights (x2 buffers)
        yblk = 2 * th * w * cout_pad * 4                          # output block (x2)
        tmp = 3 * th * w * cout_pad * 4 + 2 * th * w * cin_pad * 2  # f32 acc + patch copies
        return buf + wgt + yblk + tmp

    divisors = [d for d in range(h, 0, -1) if h % d == 0]
    fitting = [d for d in divisors if need(d) <= budget_bytes] or [1]
    for d in fitting:                       # largest tile that keeps >= 4 grid steps
        if n_batch * (h // d) >= 4:
            return d
    return fitting[0]


# ---------------------------------------------------------------------------
# Kernels
# ---------------------------------------------------------------------------
def _conv1x1_stats_kernel(x_ref, w_ref, y_ref, psum_ref, psq_ref):
    """One lane-dense MXU matmul per row tile + per-channel sum / sum-of-squares."""
    acc = jnp.dot(x_ref[...], w_ref[...], preferred_element_type=jnp.float32)
    y_ref[...] = acc.astype(y_ref.dtype)
    psum_ref[...] = jnp.sum(acc, axis=0).reshape(psum_ref.shape)
    psq_ref[...] = jnp.sum(acc * acc, axis=0).reshape(psq_ref.shape)


def _fused_conv1x1_stats_kernel(x_ref, scale_ref, shift_ref, w_ref,
                                y_ref, psum_ref, psq_ref, *, tile_m, rows_valid):
    """Previous layer's BN affine + LeakyReLU fused in front of the 1x1 matmul."""
    xn = x_ref[...].astype(jnp.float32) * scale_ref[...] + shift_ref[...]
    xn = jnp.where(xn > 0, xn, NEG_SLOPE * xn)
    if rows_valid is not None:  # zero rows added by M padding (keeps BN stats exact)
        row = pl.program_id(0) * tile_m + jax.lax.broadcasted_iota(jnp.int32, xn.shape, 0)
        xn = jnp.where(row < rows_valid, xn, 0.0)
    acc = jnp.dot(xn.astype(jnp.bfloat16), w_ref[...],
                  preferred_element_type=jnp.float32)
    y_ref[...] = acc.astype(y_ref.dtype)
    psum_ref[...] = jnp.sum(acc, axis=0).reshape(psum_ref.shape)
    psq_ref[...] = jnp.sum(acc * acc, axis=0).reshape(psq_ref.shape)


def _conv3x3_kernel(a_hbm, w_ref, y_ref, psum_ref, psq_ref, buf, sem, *, tile_h, w_img):
    """Halo-tiled 3x3 conv: manual double-buffered DMA of (tile_h + 2) input rows from
    HBM, then 9 accumulated (tile_h*W, Cin) x (Cin, Cout) MXU matmuls + channel stats."""
    b = pl.program_id(0)
    i = pl.program_id(1)
    nh = pl.num_programs(1)
    halo_rows = tile_h + 2

    def start_fetch(row_blk, slot):
        pltpu.make_async_copy(
            a_hbm.at[b, pl.ds(row_blk * tile_h, halo_rows)],
            buf.at[slot],
            sem.at[slot],
        ).start()

    # Prime at the start of each image's row sweep: priming/prefetching never crosses a
    # batch boundary, so this stays correct if the batch axis is sharded across cores.
    @pl.when(i == 0)
    def _():
        start_fetch(0, 0)

    slot = i & 1
    pltpu.make_async_copy(                      # wait for this tile's halo block
        a_hbm.at[b, pl.ds(0, halo_rows)], buf.at[slot], sem.at[slot]
    ).wait()

    @pl.when(i + 1 < nh)                        # prefetch the next row tile
    def _():
        start_fetch(i + 1, (i + 1) & 1)

    x = buf[slot]                               # (tile_h+2, wtot, cin_pad) bf16
    cout_pad = w_ref.shape[-1]
    acc = jnp.zeros((tile_h * w_img, cout_pad), jnp.float32)
    for dy in range(3):
        xrow = x[dy:dy + tile_h]
        for dx in range(3):
            patch = xrow[:, dx:dx + w_img, :].reshape(tile_h * w_img, -1)
            acc = acc + jnp.dot(patch, w_ref[dy, dx],
                                preferred_element_type=jnp.float32)
    y_ref[...] = acc.reshape(y_ref.shape).astype(y_ref.dtype)
    psum_ref[...] = jnp.sum(acc, axis=0).reshape(psum_ref.shape)
    psq_ref[...] = jnp.sum(acc * acc, axis=0).reshape(psq_ref.shape)


def _bn_act_kernel(y_ref, scale_ref, shift_ref, o_ref):
    """Final-layer BatchNorm affine + LeakyReLU(0.1), lane-dense f32 output."""
    y = y_ref[...].astype(jnp.float32) * scale_ref[...] + shift_ref[...]
    o_ref[...] = jnp.where(y > 0, y, NEG_SLOPE * y).astype(o_ref.dtype)


# ---------------------------------------------------------------------------
# Layer wrappers
# ---------------------------------------------------------------------------
def _conv1x1_layer(x2d, w2d, *, budget, vmem_limit, prev=None, y_dtype=jnp.bfloat16):
    """1x1 conv pass: optional fused previous-layer BN+act, matmul, channel statistics."""
    m_in, k_pad = x2d.shape
    cout_pad = w2d.shape[-1]
    tile_m = _pick_tile_m(m_in, k_pad, cout_pad, budget)
    m_pad = _round_up(m_in, tile_m)
    if m_pad != m_in:
        x2d = jnp.pad(x2d, ((0, m_pad - m_in), (0, 0)))
    n_tiles = m_pad // tile_m

    if prev is None:
        kernel = _conv1x1_stats_kernel
        in_specs = [
            pl.BlockSpec((tile_m, k_pad), lambda i: (i, 0)),
            pl.BlockSpec((k_pad, cout_pad), lambda i: (0, 0)),
        ]
        args = (x2d, w2d)
    else:
        scale, shift = prev
        kernel = functools.partial(
            _fused_conv1x1_stats_kernel, tile_m=tile_m,
            rows_valid=m_in if m_pad != m_in else None)
        in_specs = [
            pl.BlockSpec((tile_m, k_pad), lambda i: (i, 0)),
            pl.BlockSpec((1, k_pad), lambda i: (0, 0)),
            pl.BlockSpec((1, k_pad), lambda i: (0, 0)),
            pl.BlockSpec((k_pad, cout_pad), lambda i: (0, 0)),
        ]
        args = (x2d, scale, shift, w2d)

    y, psum, psq = pl.pallas_call(
        kernel,
        out_shape=(
            jax.ShapeDtypeStruct((m_pad, cout_pad), y_dtype),
            jax.ShapeDtypeStruct((n_tiles, 1, cout_pad), jnp.float32),
            jax.ShapeDtypeStruct((n_tiles, 1, cout_pad), jnp.float32),
        ),
        grid=(n_tiles,),
        in_specs=in_specs,
        out_specs=(
            pl.BlockSpec((tile_m, cout_pad), lambda i: (i, 0)),
            pl.BlockSpec((1, 1, cout_pad), lambda i: (i, 0, 0)),
            pl.BlockSpec((1, 1, cout_pad), lambda i: (i, 0, 0)),
        ),
        compiler_params=pltpu.CompilerParams(
            dimension_semantics=("parallel",), vmem_limit_bytes=vmem_limit),
    )(*args)
    return y, jnp.sum(psum[:, 0, :], axis=0), jnp.sum(psq[:, 0, :], axis=0), tile_m


def _conv3x3_layer(a_pad, w_pad, n, h, w, budget, vmem_limit):
    """3x3 conv over a spatially zero-padded NHWC activation (no im2col)."""
    _, _, wtot, cin_pad = a_pad.shape
    cout_pad = w_pad.shape[-1]
    tile_h = _pick_tile_h(h, w, wtot, cin_pad, cout_pad, n, budget)
    nh = h // tile_h
    kernel = functools.partial(_conv3x3_kernel, tile_h=tile_h, w_img=w)

    y, psum, psq = pl.pallas_call(
        kernel,
        out_shape=(
            jax.ShapeDtypeStruct((n, h, w, cout_pad), jnp.bfloat16),
            jax.ShapeDtypeStruct((n, nh, 1, cout_pad), jnp.float32),
            jax.ShapeDtypeStruct((n, nh, 1, cout_pad), jnp.float32),
        ),
        grid=(n, nh),
        in_specs=[
            pl.BlockSpec(memory_space=pl.ANY),                    # halo rows DMA'd manually
            pl.BlockSpec((3, 3, cin_pad, cout_pad), lambda b, i: (0, 0, 0, 0)),
        ],
        out_specs=(
            pl.BlockSpec((1, tile_h, w, cout_pad), lambda b, i: (b, i, 0, 0)),
            pl.BlockSpec((1, 1, 1, cout_pad), lambda b, i: (b, i, 0, 0)),
            pl.BlockSpec((1, 1, 1, cout_pad), lambda b, i: (b, i, 0, 0)),
        ),
        scratch_shapes=[
            pltpu.VMEM((2, tile_h + 2, wtot, cin_pad), jnp.bfloat16),
            pltpu.SemaphoreType.DMA((2,)),
        ],
        compiler_params=pltpu.CompilerParams(
            dimension_semantics=("parallel", "arbitrary"),
            vmem_limit_bytes=vmem_limit),
    )(a_pad, w_pad)
    return (y,
            jnp.sum(psum[:, :, 0, :], axis=(0, 1)),
            jnp.sum(psq[:, :, 0, :], axis=(0, 1)))


def _bn_act_layer(y2d, scale, shift, tile_m, vmem_limit, out_dtype):
    m_pad, cout_pad = y2d.shape
    n_tiles = m_pad // tile_m
    return pl.pallas_call(
        _bn_act_kernel,
        out_shape=jax.ShapeDtypeStruct((m_pad, cout_pad), out_dtype),
        grid=(n_tiles,),
        in_specs=[
            pl.BlockSpec((tile_m, cout_pad), lambda i: (i, 0)),
            pl.BlockSpec((1, cout_pad), lambda i: (0, 0)),
            pl.BlockSpec((1, cout_pad), lambda i: (0, 0)),
        ],
        out_specs=pl.BlockSpec((tile_m, cout_pad), lambda i: (i, 0)),
        compiler_params=pltpu.CompilerParams(
            dimension_semantics=("parallel",), vmem_limit_bytes=vmem_limit),
    )(y2d, scale, shift)


# ---------------------------------------------------------------------------
# Conv5Block forward
# ---------------------------------------------------------------------------
def conv5_block(x_nchw, params):
    """5x [Conv2d(no bias) -> BatchNorm2d (batch stats) -> LeakyReLU(0.1)], stride 1."""
    n, cin, h, w = x_nchw.shape
    m = n * h * w
    vmem_limit, budget = _vmem_config()
    wtot = _round_up(w + 2, 8)               # spatially-padded width (lanes = channels)
    cout_true = params[-1][0].shape[-1]

    # NCHW -> NHWC in bf16 (halves transpose traffic); channel-pad once for the chain.
    # NOTE: at tiny demo channel counts (4/8/16) the 128-lane padding dominates the work;
    # at real YOLO channel widths (>= 64) the overhead is modest.
    x = jnp.transpose(x_nchw.astype(jnp.bfloat16), (0, 2, 3, 1))
    x = _pad_last(x, _round_up(cin, LANE))

    padded = []
    for wgt, gamma, beta in params:
        k, _, ci, co = wgt.shape
        ci_p, co_p = _round_up(ci, LANE), _round_up(co, LANE)
        wp = jnp.pad(wgt, ((0, 0), (0, 0), (0, ci_p - ci), (0, co_p - co))).astype(jnp.bfloat16)
        gp = jnp.pad(gamma.reshape(-1).astype(jnp.float32), (0, co_p - co))
        bp = jnp.pad(beta.reshape(-1).astype(jnp.float32), (0, co_p - co))
        padded.append((k, wp, gp, bp, ci_p, co_p))

    def bn_affine(psum, psq, gp, bp):
        mean = psum / m
        # TODO(synk): E[x^2]-E[x]^2 in f32 can lose precision at very large N*H*W;
        # switch to a shifted sum-of-squares if that regime matters.
        var = jnp.maximum(psq / m - mean * mean, 0.0)  # biased var (PyTorch training mode)
        scale = gp * jax.lax.rsqrt(var + EPS)
        shift = bp - mean * scale
        return scale.reshape(1, -1), shift.reshape(1, -1)

    def bn_act_spatial_pad(y2d, scale, shift, c_pad):
        # BN affine + LeakyReLU + 1-pixel zero border for the next 3x3 conv; XLA fuses
        # this into a single pass over the activation (no extra Pallas round trip).
        a = y2d[:m].astype(jnp.float32) * scale + shift
        a = jnp.where(a > 0, a, NEG_SLOPE * a).astype(jnp.bfloat16).reshape(n, h, w, c_pad)
        return jnp.pad(a, ((0, 0), (1, 1), (1, wtot - w - 1), (0, 0)))

    # --- layer 1: 1x1 conv (no previous BN to fuse) ---
    _, w1, g1, b1, c0p, c1p = padded[0]
    y1, s1, q1, _ = _conv1x1_layer(x.reshape(m, c0p), w1.reshape(c0p, c1p),
                                   budget=budget, vmem_limit=vmem_limit)
    sc1, sh1 = bn_affine(s1, q1, g1, b1)

    # --- layer 2: 3x3 conv, halo-tiled (no im2col) ---
    _, w2, g2, b2, _, c2p = padded[1]
    y2, s2, q2 = _conv3x3_layer(bn_act_spatial_pad(y1, sc1, sh1, c1p), w2,
                                n, h, w, budget, vmem_limit)
    sc2, sh2 = bn_affine(s2, q2, g2, b2)

    # --- layer 3: 1x1 conv, previous BN + LeakyReLU fused into the matmul pass ---
    _, w3, g3, b3, _, c3p = padded[2]
    y3, s3, q3, _ = _conv1x1_layer(y2.reshape(m, c2p), w3.reshape(c2p, c3p),
                                   budget=budget, vmem_limit=vmem_limit, prev=(sc2, sh2))
    sc3, sh3 = bn_affine(s3, q3, g3, b3)

    # --- layer 4: 3x3 conv ---
    _, w4, g4, b4, _, c4p = padded[3]
    y4, s4, q4 = _conv3x3_layer(bn_act_spatial_pad(y3, sc3, sh3, c3p), w4,
                                n, h, w, budget, vmem_limit)
    sc4, sh4 = bn_affine(s4, q4, g4, b4)

    # --- layer 5: 1x1 conv, fused; keep its pre-BN output in f32 (final layer) ---
    _, w5, g5, b5, _, c5p = padded[4]
    y5, s5, q5, tile5 = _conv1x1_layer(y4.reshape(m, c4p), w5.reshape(c4p, c5p),
                                       budget=budget, vmem_limit=vmem_limit,
                                       prev=(sc4, sh4), y_dtype=jnp.float32)
    sc5, sh5 = bn_affine(s5, q5, g5, b5)

    # --- final BN + LeakyReLU (Pallas, lane-dense f32); slice channels once; NCHW out ---
    out = _bn_act_layer(y5, sc5, sh5, tile5, vmem_limit, jnp.float32)
    out = out[:m, :cout_true].reshape(n, h, w, cout_true)
    # TODO(synk): BatchNorm2d running_mean/running_var momentum updates (training-mode
    # buffer side effect) are not emitted; only the forward normalization is computed.
    return jnp.transpose(out, (0, 3, 1, 2))


# ---------------------------------------------------------------------------
# Synthetic parameters (deterministic)
# ---------------------------------------------------------------------------
def init_params(key, in_channel, out_channel):
    """Conv weights (kH, kW, Cin, Cout); BatchNorm affine gamma/beta, per layer."""
    layer_defs = [
        (1, in_channel, out_channel),          # conv1
        (3, out_channel, out_channel * 2),     # conv2
        (1, out_channel * 2, out_channel),     # conv3
        (3, out_channel, out_channel * 2),     # conv4
        (1, out_channel * 2, out_channel),     # conv5
    ]
    params = []
    for li, (k, cin, cout) in enumerate(layer_defs):
        kw, kg, kb = jax.random.split(jax.random.fold_in(key, li), 3)
        fan_in = k * k * cin
        wgt = jax.random.normal(kw, (k, k, cin, cout), jnp.float32) / jnp.sqrt(float(fan_in))
        gamma = 1.0 + 0.1 * jax.random.normal(kg, (1, cout), jnp.float32)
        beta = 0.1 * jax.random.normal(kb, (1, cout), jnp.float32)
        params.append((wgt, gamma, beta))
    return params


if __name__ == "__main__":
    key = jax.random.PRNGKey(0)
    N, Cin, H, W = 2, 4, 16, 16
    out_channel = 8

    kx, kp = jax.random.split(key)
    x = jax.random.normal(kx, (N, Cin, H, W), jnp.float32)
    params = init_params(kp, Cin, out_channel)

    y = jax.jit(conv5_block)(x, params)
    y = jax.block_until_ready(y)

    assert y.shape == (N, out_channel, H, W), y.shape
    assert bool(jnp.all(jnp.isfinite(y)))
    print("KERNEL_OK")
</pallas_src>

<mosaic_0001>
module attributes {stable_mosaic.version = 11 : i64} {
  func.func @_conv1x1_stats_kernel(%arg0: i32, %arg1: memref<128x128xbf16, #tpu.memory_space<vmem>>, %arg2: memref<128x128xbf16, #tpu.memory_space<vmem>>, %arg3: memref<128x128xbf16, #tpu.memory_space<vmem>>, %arg4: memref<1x1x128xf32, #tpu.memory_space<vmem>>, %arg5: memref<1x1x128xf32, #tpu.memory_space<vmem>>) attributes {dimension_semantics = [#tpu.dimension_semantics<parallel>], iteration_bounds = array<i64: 4>, scalar_prefetch = 0 : i64, scratch_operands = 0 : i64, tpu.core_type = #tpu.core_type<tc>, window_params = [{transform_indices = @transform_0, window_bounds = array<i64: 128, 128>}, {pipeline_mode = #tpu.pipeline_mode<synchronous>, transform_indices = @transform_1, window_bounds = array<i64: 128, 128>}, {transform_indices = @transform_2, window_bounds = array<i64: 128, 128>}, {transform_indices = @transform_3, window_bounds = array<i64: 1, 1, 128>}, {transform_indices = @transform_4, window_bounds = array<i64: 1, 1, 128>}]} {
    %c0 = arith.constant 0 : index
    %c0_0 = arith.constant 0 : index
    %0 = vector.load %arg1[%c0, %c0_0] : memref<128x128xbf16, #tpu.memory_space<vmem>>, vector<128x128xbf16>
    %c0_1 = arith.constant 0 : index
    %c0_2 = arith.constant 0 : index
    %1 = vector.load %arg2[%c0_1, %c0_2] : memref<128x128xbf16, #tpu.memory_space<vmem>>, vector<128x128xbf16>
    %cst = arith.constant dense<0.000000e+00> : vector<128x128xf32>
    %2 = tpu.matmul %0, %1, %cst {dimension_numbers = #tpu.dot_dimension_numbers<[1], [0], [0], [1], [0, 0, 1, 1], [], []>} : vector<128x128xbf16>, vector<128x128xbf16>, vector<128x128xf32> -> vector<128x128xf32>
    %3 = arith.truncf %2 : vector<128x128xf32> to vector<128x128xbf16>
    %c0_3 = arith.constant 0 : index
    %c0_4 = arith.constant 0 : index
    %4 = vector.load %arg3[%c0_3, %c0_4] : memref<128x128xbf16, #tpu.memory_space<vmem>>, vector<128x128xbf16>
    tpu.vector_store %arg3[%c0_3, %c0_4], %3 {strides = array<i32>} : memref<128x128xbf16, #tpu.memory_space<vmem>>, vector<128x128xbf16>,
    %cst_5 = arith.constant dense<0.000000e+00> : vector<128xf32>
    %5 = vector.multi_reduction <add>, %2, %cst_5 [0] : vector<128x128xf32> to vector<128xf32>
    %6 = vector.shape_cast %5 : vector<128xf32> to vector<1x1x128xf32>
    %c0_6 = arith.constant 0 : index
    %c0_7 = arith.constant 0 : index
    %c0_8 = arith.constant 0 : index
    %7 = vector.load %arg4[%c0_6, %c0_7, %c0_8] : memref<1x1x128xf32, #tpu.memory_space<vmem>>, vector<1x1x128xf32>
    tpu.vector_store %arg4[%c0_6, %c0_7, %c0_8], %6 {strides = array<i32>} : memref<1x1x128xf32, #tpu.memory_space<vmem>>, vector<1x1x128xf32>,
    %8 = arith.mulf %2, %2 : vector<128x128xf32>
    %cst_9 = arith.constant dense<0.000000e+00> : vector<128xf32>
    %9 = vector.multi_reduction <add>, %8, %cst_9 [0] : vector<128x128xf32> to vector<128xf32>
    %10 = vector.shape_cast %9 : vector<128xf32> to vector<1x1x128xf32>
    %c0_10 = arith.constant 0 : index
    %c0_11 = arith.constant 0 : index
    %c0_12 = arith.constant 0 : index
    %11 = vector.load %arg5[%c0_10, %c0_11, %c0_12] : memref<1x1x128xf32, #tpu.memory_space<vmem>>, vector<1x1x128xf32>
    tpu.vector_store %arg5[%c0_10, %c0_11, %c0_12], %10 {strides = array<i32>} : memref<1x1x128xf32, #tpu.memory_space<vmem>>, vector<1x1x128xf32>,
    return
  }
  func.func @transform_0(%arg0: i32) -> (i32, i32) {
    %c0_i32 = arith.constant 0 : i32
    %c0_i32_0 = arith.constant 0 : i32
    return %arg0, %c0_i32 : i32, i32
  }
  func.func @transform_1(%arg0: i32) -> (i32, i32) {
    %c0_i32 = arith.constant 0 : i32
    %c0_i32_0 = arith.constant 0 : i32
    %c0_i32_1 = arith.constant 0 : i32
    return %c0_i32, %c0_i32_0 : i32, i32
  }
  func.func @transform_2(%arg0: i32) -> (i32, i32) {
    %c0_i32 = arith.constant 0 : i32
    %c0_i32_0 = arith.constant 0 : i32
    return %arg0, %c0_i32 : i32, i32
  }
  func.func @transform_3(%arg0: i32) -> (i32, i32, i32) {
    %c0_i32 = arith.constant 0 : i32
    %c0_i32_0 = arith.constant 0 : i32
    %c0_i32_1 = arith.constant 0 : i32
    return %arg0, %c0_i32, %c0_i32_0 : i32, i32, i32
  }
  func.func @transform_4(%arg0: i32) -> (i32, i32, i32) {
    %c0_i32 = arith.constant 0 : i32
    %c0_i32_0 = arith.constant 0 : i32
    %c0_i32_1 = arith.constant 0 : i32
    return %arg0, %c0_i32, %c0_i32_0 : i32, i32, i32
  }
}

module attributes {stable_mosaic.version = 11 : i64} {
  func.func @_conv3x3_kernel(%arg0: i32, %arg1: i32, %arg2: memref<2x18x24x128xbf16, #tpu.memory_space<any>>, %arg3: memref<3x3x128x128xbf16, #tpu.memory_space<vmem>>, %arg4: memref<1x8x16x128xbf16, #tpu.memory_space<vmem>>, %arg5: memref<1x1x1x128xf32, #tpu.memory_space<vmem>>, %arg6: memref<1x1x1x128xf32, #tpu.memory_space<vmem>>, %arg7: memref<2x10x24x128xbf16, #tpu.memory_space<vmem>>, %arg8: memref<2x!tpu.dma_semaphore, #tpu.memory_space<semaphore_mem>>) attributes {dimension_semantics = [#tpu.dimension_semantics<parallel>, #tpu.dimension_semantics<arbitrary>], iteration_bounds = array<i64: 2, 2>, scalar_prefetch = 0 : i64, scratch_operands = 2 : i64, tpu.core_type = #tpu.core_type<tc>, window_params = [{}, {pipeline_mode = #tpu.pipeline_mode<synchronous>, transform_indices = @transform_1, window_bounds = array<i64: 3, 3, 128, 128>}, {transform_indices = @transform_2, window_bounds = array<i64: 1, 8, 16, 128>}, {transform_indices = @transform_3, window_bounds = array<i64: 1, 1, 1, 128>}, {transform_indices = @transform_4, window_bounds = array<i64: 1, 1, 1, 128>}]} {
    %c0_i32 = arith.constant 0 : i32
    %0 = arith.cmpi eq, %arg1, %c0_i32 : i32
    %1 = arith.extui %0 : i1 to i32
    %c0_i32_0 = arith.constant 0 : i32
    %2 = arith.cmpi ne, %1, %c0_i32_0 : i32
    scf.if %2 {
      %c0_i32_68 = arith.constant 0 : i32
      %c0_i32_69 = arith.constant 0 : i32
      %c0_i32_70 = arith.constant 0 : i32
      %c0_i32_71 = arith.constant 0 : i32
      %c0_i32_72 = arith.constant 0 : i32
      %85 = tpu.memref_slice %arg2[%arg0, %c0_i32_70, %c0_i32_71, %c0_i32_72] : memref<2x18x24x128xbf16, #tpu.memory_space<any>> -> memref<1x10x24x128xbf16, #tpu.memory_space<any>>
      %86 = tpu.memref_squeeze %85 : memref<1x10x24x128xbf16, #tpu.memory_space<any>> -> memref<10x24x128xbf16, #tpu.memory_space<any>>
      %c0_i32_73 = arith.constant 0 : i32
      %c0_i32_74 = arith.constant 0 : i32
      %c0_i32_75 = arith.constant 0 : i32
      %87 = tpu.memref_slice %arg7[%c0_i32_68, %c0_i32_73, %c0_i32_74, %c0_i32_75] : memref<2x10x24x128xbf16, #tpu.memory_space<vmem>> -> memref<1x10x24x128xbf16, #tpu.memory_space<vmem>>
      %88 = tpu.memref_squeeze %87 : memref<1x10x24x128xbf16, #tpu.memory_space<vmem>> -> memref<10x24x128xbf16, #tpu.memory_space<vmem>>
      %89 = tpu.memref_slice %arg8[%c0_i32_69] : memref<2x!tpu.dma_semaphore, #tpu.memory_space<semaphore_mem>> -> memref<1x!tpu.dma_semaphore, #tpu.memory_space<semaphore_mem>>
      %90 = tpu.memref_squeeze %89 : memref<1x!tpu.dma_semaphore, #tpu.memory_space<semaphore_mem>> -> memref<!tpu.dma_semaphore, #tpu.memory_space<semaphore_mem>>
      tpu.enqueue_dma source(%86 : memref<10x24x128xbf16, #tpu.memory_space<any>>) target(%88 : memref<10x24x128xbf16, #tpu.memory_space<vmem>>) target_semaphore(%90 : memref<!tpu.dma_semaphore, #tpu.memory_space<semaphore_mem>>)
    } else {
    }
    %c1_i32 = arith.constant 1 : i32
    %3 = arith.andi %arg1, %c1_i32 : i32
    %c0_i32_1 = arith.constant 0 : i32
    %c0_i32_2 = arith.constant 0 : i32
    %c0_i32_3 = arith.constant 0 : i32
    %4 = tpu.memref_slice %arg2[%arg0, %c0_i32_1, %c0_i32_2, %c0_i32_3] : memref<2x18x24x128xbf16, #tpu.memory_space<any>> -> memref<1x10x24x128xbf16, #tpu.memory_space<any>>
    %5 = tpu.memref_squeeze %4 : memref<1x10x24x128xbf16, #tpu.memory_space<any>> -> memref<10x24x128xbf16, #tpu.memory_space<any>>
    %c0_i32_4 = arith.constant 0 : i32
    %c0_i32_5 = arith.constant 0 : i32
    %c0_i32_6 = arith.constant 0 : i32
    %6 = tpu.memref_slice %arg7[%3, %c0_i32_4, %c0_i32_5, %c0_i32_6] : memref<2x10x24x128xbf16, #tpu.memory_space<vmem>> -> memref<1x10x24x128xbf16, #tpu.memory_space<vmem>>
    %7 = tpu.memref_squeeze %6 : memref<1x10x24x128xbf16, #tpu.memory_space<vmem>> -> memref<10x24x128xbf16, #tpu.memory_space<vmem>>
    %8 = tpu.memref_slice %arg8[%3] : memref<2x!tpu.dma_semaphore, #tpu.memory_space<semaphore_mem>> -> memref<1x!tpu.dma_semaphore, #tpu.memory_space<semaphore_mem>>
    %9 = tpu.memref_squeeze %8 : memref<1x!tpu.dma_semaphore, #tpu.memory_space<semaphore_mem>> -> memref<!tpu.dma_semaphore, #tpu.memory_space<semaphore_mem>>
    tpu.wait_dma2 semaphore(%9 : memref<!tpu.dma_semaphore, #tpu.memory_space<semaphore_mem>>) src(%5 : memref<10x24x128xbf16, #tpu.memory_space<any>>) dst(%7 : memref<10x24x128xbf16, #tpu.memory_space<vmem>>)
    %c1_i32_7 = arith.constant 1 : i32
    %10 = arith.addi %arg1, %c1_i32_7 : i32
    %c2_i32 = arith.constant 2 : i32
    %11 = arith.cmpi slt, %10, %c2_i32 : i32
    %12 = arith.extui %11 : i1 to i32
    %c0_i32_8 = arith.constant 0 : i32
    %13 = arith.cmpi ne, %12, %c0_i32_8 : i32
    scf.if %13 {
      %c1_i32_68 = arith.constant 1 : i32
      %85 = arith.addi %arg1, %c1_i32_68 : i32
      %c1_i32_69 = arith.constant 1 : i32
      %86 = arith.addi %arg1, %c1_i32_69 : i32
      %c1_i32_70 = arith.constant 1 : i32
      %87 = arith.andi %86, %c1_i32_70 : i32
      %c8_i32 = arith.constant 8 : i32
      %88 = arith.muli %85, %c8_i32 : i32
      %c0_i32_71 = arith.constant 0 : i32
      %c0_i32_72 = arith.constant 0 : i32
      %89 = tpu.memref_slice %arg2[%arg0, %88, %c0_i32_71, %c0_i32_72] : memref<2x18x24x128xbf16, #tpu.memory_space<any>> -> memref<1x10x24x128xbf16, #tpu.memory_space<any>>
      %90 = tpu.memref_squeeze %89 : memref<1x10x24x128xbf16, #tpu.memory_space<any>> -> memref<10x24x128xbf16, #tpu.memory_space<any>>
      %c0_i32_73 = arith.constant 0 : i32
      %c0_i32_74 = arith.constant 0 : i32
      %c0_i32_75 = arith.constant 0 : i32
      %91 = tpu.memref_slice %arg7[%87, %c0_i32_73, %c0_i32_74, %c0_i32_75] : memref<2x10x24x128xbf16, #tpu.memory_space<vmem>> -> memref<1x10x24x128xbf16, #tpu.memory_space<vmem>>
      %92 = tpu.memref_squeeze %91 : memref<1x10x24x128xbf16, #tpu.memory_space<vmem>> -> memref<10x24x128xbf16, #tpu.memory_space<vmem>>
      %93 = tpu.memref_slice %arg8[%87] : memref<2x!tpu.dma_semaphore, #tpu.memory_space<semaphore_mem>> -> memref<1x!tpu.dma_semaphore, #tpu.memory_space<semaphore_mem>>
      %94 = tpu.memref_squeeze %93 : memref<1x!tpu.dma_semaphore, #tpu.memory_space<semaphore_mem>> -> memref<!tpu.dma_semaphore, #tpu.memory_space<semaphore_mem>>
      tpu.enqueue_dma source(%90 : memref<10x24x128xbf16, #tpu.memory_space<any>>) target(%92 : memref<10x24x128xbf16, #tpu.memory_space<vmem>>) target_semaphore(%94 : memref<!tpu.dma_semaphore, #tpu.memory_space<semaphore_mem>>)
    } else {
    }
    %14 = arith.index_cast %3 : i32 to index
    %c0 = arith.constant 0 : index
    %c0_9 = arith.constant 0 : index
    %c0_10 = arith.constant 0 : index
    %15 = vector.load %arg7[%14, %c0, %c0_9, %c0_10] : memref<2x10x24x128xbf16, #tpu.memory_space<vmem>>, vector<1x10x24x128xbf16>
    %16 = vector.shape_cast %15 : vector<1x10x24x128xbf16> to vector<10x24x128xbf16>
    %cst = arith.constant 0.000000e+00 : f32
    %17 = vector.broadcast %cst : f32 to vector<128x128xf32>
    %18 = vector.extract_strided_slice %16 {offsets = [0, 0, 0], sizes = [8, 24, 128], strides = [1, 1, 1]} : vector<10x24x128xbf16> to vector<8x24x128xbf16>
    %19 = vector.extract_strided_slice %18 {offsets = [0, 0, 0], sizes = [8, 16, 128], strides = [1, 1, 1]} : vector<8x24x128xbf16> to vector<8x16x128xbf16>
    %20 = vector.shape_cast %19 : vector<8x16x128xbf16> to vector<128x128xbf16>
    %c0_11 = arith.constant 0 : index
    %c0_12 = arith.constant 0 : index
    %c0_13 = arith.constant 0 : index
    %c0_14 = arith.constant 0 : index
    %21 = vector.load %arg3[%c0_11, %c0_12, %c0_13, %c0_14] : memref<3x3x128x128xbf16, #tpu.memory_space<vmem>>, vector<1x1x128x128xbf16>
    %22 = vector.shape_cast %21 : vector<1x1x128x128xbf16> to vector<128x128xbf16>
    %cst_15 = arith.constant dense<0.000000e+00> : vector<128x128xf32>
    %23 = tpu.matmul %20, %22, %cst_15 {dimension_numbers = #tpu.dot_dimension_numbers<[1], [0], [0], [1], [0, 0, 1, 1], [], []>} : vector<128x128xbf16>, vector<128x128xbf16>, vector<128x128xf32> -> vector<128x128xf32>
    %24 = arith.addf %17, %23 : vector<128x128xf32>
    %25 = vector.extract_strided_slice %18 {offsets = [0, 1, 0], sizes = [8, 16, 128], strides = [1, 1, 1]} : vector<8x24x128xbf16> to vector<8x16x128xbf16>
    %26 = vector.shape_cast %25 : vector<8x16x128xbf16> to vector<128x128xbf16>
    %c0_16 = arith.constant 0 : index
    %c1 = arith.constant 1 : index
    %c0_17 = arith.constant 0 : index
    %c0_18 = arith.constant 0 : index
    %27 = vector.load %arg3[%c0_16, %c1, %c0_17, %c0_18] : memref<3x3x128x128xbf16, #tpu.memory_space<vmem>>, vector<1x1x128x128xbf16>
    %28 = vector.shape_cast %27 : vector<1x1x128x128xbf16> to vector<128x128xbf16>
    %cst_19 = arith.constant dense<0.000000e+00> : vector<128x128xf32>
    %29 = tpu.matmul %26, %28, %cst_19 {dimension_numbers = #tpu.dot_dimension_numbers<[1], [0], [0], [1], [0, 0, 1, 1], [], []>} : vector<128x128xbf16>, vector<128x128xbf16>, vector<128x128xf32> -> vector<128x128xf32>
    %30 = arith.addf %24, %29 : vector<128x128xf32>
    %31 = vector.extract_strided_slice %18 {offsets = [0, 2, 0], sizes = [8, 16, 128], strides = [1, 1, 1]} : vector<8x24x128xbf16> to vector<8x16x128xbf16>
    %32 = vector.shape_cast %31 : vector<8x16x128xbf16> to vector<128x128xbf16>
    %c0_20 = arith.constant 0 : index
    %c2 = arith.constant 2 : index
    %c0_21 = arith.constant 0 : index
    %c0_22 = arith.constant 0 : index
    %33 = vector.load %arg3[%c0_20, %c2, %c0_21, %c0_22] : memref<3x3x128x128xbf16, #tpu.memory_space<vmem>>, vector<1x1x128x128xbf16>
    %34 = vector.shape_cast %33 : vector<1x1x128x128xbf16> to vector<128x128xbf16>
    %cst_23 = arith.constant dense<0.000000e+00> : vector<128x128xf32>
    %35 = tpu.matmul %32, %34, %cst_23 {dimension_numbers = #tpu.dot_dimension_numbers<[1], [0], [0], [1], [0, 0, 1, 1], [], []>} : vector<128x128xbf16>, vector<128x128xbf16>, vector<128x128xf32> -> vector<128x128xf32>
    %36 = arith.addf %30, %35 : vector<128x128xf32>
    %37 = vector.extract_strided_slice %16 {offsets = [1, 0, 0], sizes = [8, 24, 128], strides = [1, 1, 1]} : vector<10x24x128xbf16> to vector<8x24x128xbf16>
    %38 = vector.extract_strided_slice %37 {offsets = [0, 0, 0], sizes = [8, 16, 128], strides = [1, 1, 1]} : vector<8x24x128xbf16> to vector<8x16x128xbf16>
    %39 = vector.shape_cast %38 : vector<8x16x128xbf16> to vector<128x128xbf16>
    %c1_24 = arith.constant 1 : index
    %c0_25 = arith.constant 0 : index
    %c0_26 = arith.constant 0 : index
    %c0_27 = arith.constant 0 : index
    %40 = vector.load %arg3[%c1_24, %c0_25, %c0_26, %c0_27] : memref<3x3x128x128xbf16, #tpu.memory_space<vmem>>, vector<1x1x128x128xbf16>
    %41 = vector.shape_cast %40 : vector<1x1x128x128xbf16> to vector<128x128xbf16>
    %cst_28 = arith.constant dense<0.000000e+00> : vector<128x128xf32>
    %42 = tpu.matmul %39, %41, %cst_28 {dimension_numbers = #tpu.dot_dimension_numbers<[1], [0], [0], [1], [0, 0, 1, 1], [], []>} : vector<128x128xbf16>, vector<128x128xbf16>, vector<128x128xf32> -> vector<128x128xf32>
    %43 = arith.addf %36, %42 : vector<128x128xf32>
    %44 = vector.extract_strided_slice %37 {offsets = [0, 1, 0], sizes = [8, 16, 128], strides = [1, 1, 1]} : vector<8x24x128xbf16> to vector<8x16x128xbf16>
    %45 = vector.shape_cast %44 : vector<8x16x128xbf16> to vector<128x128xbf16>
    %c1_29 = arith.constant 1 : index
    %c1_30 = arith.constant 1 : index
    %c0_31 = arith.constant 0 : index
    %c0_32 = arith.constant 0 : index
    %46 = vector.load %arg3[%c1_29, %c1_30, %c0_31, %c0_32] : memref<3x3x128x128xbf16, #tpu.memory_space<vmem>>, vector<1x1x128x128xbf16>
    %47 = vector.shape_cast %46 : vector<1x1x128x128xbf16> to vector<128x128xbf16>
    %cst_33 = arith.constant dense<0.000000e+00> : vector<128x128xf32>
    %48 = tpu.matmul %45, %47, %cst_33 {dimension_numbers = #tpu.dot_dimension_numbers<[1], [0], [0], [1], [0, 0, 1, 1], [], []>} : vector<128x128xbf16>, vector<128x128xbf16>, vector<128x128xf32> -> vector<128x128xf32>
    %49 = arith.addf %43, %48 : vector<128x128xf32>
    %50 = vector.extract_strided_slice %37 {offsets = [0, 2, 0], sizes = [8, 16, 128], strides = [1, 1, 1]} : vector<8x24x128xbf16> to vector<8x16x128xbf16>
    %51 = vector.shape_cast %50 : vector<8x16x128xbf16> to vector<128x128xbf16>
    %c1_34 = arith.constant 1 : index
    %c2_35 = arith.constant 2 : index
    %c0_36 = arith.constant 0 : index
    %c0_37 = arith.constant 0 : index
    %52 = vector.load %arg3[%c1_34, %c2_35, %c0_36, %c0_37] : memref<3x3x128x128xbf16, #tpu.memory_space<vmem>>, vector<1x1x128x128xbf16>
    %53 = vector.shape_cast %52 : vector<1x1x128x128xbf16> to vector<128x128xbf16>
    %cst_38 = arith.constant dense<0.000000e+00> : vector<128x128xf32>
    %54 = tpu.matmul %51, %53, %cst_38 {dimension_numbers = #tpu.dot_dimension_numbers<[1], [0], [0], [1], [0, 0, 1, 1], [], []>} : vector<128x128xbf16>, vector<128x128xbf16>, vector<128x128xf32> -> vector<128x128xf32>
    %55 = arith.addf %49, %54 : vector<128x128xf32>
    %56 = vector.extract_strided_slice %16 {offsets = [2, 0, 0], sizes = [8, 24, 128], strides = [1, 1, 1]} : vector<10x24x128xbf16> to vector<8x24x128xbf16>
    %57 = vector.extract_strided_slice %56 {offsets = [0, 0, 0], sizes = [8, 16, 128], strides = [1, 1, 1]} : vector<8x24x128xbf16> to vector<8x16x128xbf16>
    %58 = vector.shape_cast %57 : vector<8x16x128xbf16> to vector<128x128xbf16>
    %c2_39 = arith.constant 2 : index
    %c0_40 = arith.constant 0 : index
    %c0_41 = arith.constant 0 : index
    %c0_42 = arith.constant 0 : index
    %59 = vector.load %arg3[%c2_39, %c0_40, %c0_41, %c0_42] : memref<3x3x128x128xbf16, #tpu.memory_space<vmem>>, vector<1x1x128x128xbf16>
    %60 = vector.shape_cast %59 : vector<1x1x128x128xbf16> to vector<128x128xbf16>
    %cst_43 = arith.constant dense<0.000000e+00> : vector<128x128xf32>
    %61 = tpu.matmul %58, %60, %cst_43 {dimension_numbers = #tpu.dot_dimension_numbers<[1], [0], [0], [1], [0, 0, 1, 1], [], []>} : vector<128x128xbf16>, vector<128x128xbf16>, vector<128x128xf32> -> vector<128x128xf32>
    %62 = arith.addf %55, %61 : vector<128x128xf32>
    %63 = vector.extract_strided_slice %56 {offsets = [0, 1, 0], sizes = [8, 16, 128], strides = [1, 1, 1]} : vector<8x24x128xbf16> to vector<8x16x128xbf16>
    %64 = vector.shape_cast %63 : vector<8x16x128xbf16> to vector<128x128xbf16>
    %c2_44 = arith.constant 2 : index
    %c1_45 = arith.constant 1 : index
    %c0_46 = arith.constant 0 : index
    %c0_47 = arith.constant 0 : index
    %65 = vector.load %arg3[%c2_44, %c1_45, %c0_46, %c0_47] : memref<3x3x128x128xbf16, #tpu.memory_space<vmem>>, vector<1x1x128x128xbf16>
    %66 = vector.shape_cast %65 : vector<1x1x128x128xbf16> to vector<128x128xbf16>
    %cst_48 = arith.constant dense<0.000000e+00> : vector<128x128xf32>
    %67 = tpu.matmul %64, %66, %cst_48 {dimension_numbers = #tpu.dot_dimension_numbers<[1], [0], [0], [1], [0, 0, 1, 1], [], []>} : vector<128x128xbf16>, vector<128x128xbf16>, vector<128x128xf32> -> vector<128x128xf32>
    %68 = arith.addf %62, %67 : vector<128x128xf32>
    %69 = vector.extract_strided_slice %56 {offsets = [0, 2, 0], sizes = [8, 16, 128], strides = [1, 1, 1]} : vector<8x24x128xbf16> to vector<8x16x128xbf16>
    %70 = vector.shape_cast %69 : vector<8x16x128xbf16> to vector<128x128xbf16>
    %c2_49 = arith.constant 2 : index
    %c2_50 = arith.constant 2 : index
    %c0_51 = arith.constant 0 : index
    %c0_52 = arith.constant 0 : index
    %71 = vector.load %arg3[%c2_49, %c2_50, %c0_51, %c0_52] : memref<3x3x128x128xbf16, #tpu.memory_space<vmem>>, vector<1x1x128x128xbf16>
    %72 = vector.shape_cast %71 : vector<1x1x128x128xbf16> to vector<128x128xbf16>
    %cst_53 = arith.constant dense<0.000000e+00> : vector<128x128xf32>
    %73 = tpu.matmul %70, %72, %cst_53 {dimension_numbers = #tpu.dot_dimension_numbers<[1], [0], [0], [1], [0, 0, 1, 1], [], []>} : vector<128x128xbf16>, vector<128x128xbf16>, vector<128x128xf32> -> vector<128x128xf32>
    %74 = arith.addf %68, %73 : vector<128x128xf32>
    %75 = vector.shape_cast %74 : vector<128x128xf32> to vector<1x8x16x128xf32>
    %76 = arith.truncf %75 : vector<1x8x16x128xf32> to vector<1x8x16x128xbf16>
    %c0_54 = arith.constant 0 : index
    %c0_55 = arith.constant 0 : index
    %c0_56 = arith.constant 0 : index
    %c0_57 = arith.constant 0 : index
    %77 = vector.load %arg4[%c0_54, %c0_55, %c0_56, %c0_57] : memref<1x8x16x128xbf16, #tpu.memory_space<vmem>>, vector<1x8x16x128xbf16>
    tpu.vector_store %arg4[%c0_54, %c0_55, %c0_56, %c0_57], %76 {strides = array<i32>} : memref<1x8x16x128xbf16, #tpu.memory_space<vmem>>, vector<1x8x16x128xbf16>,
    %cst_58 = arith.constant dense<0.000000e+00> : vector<128xf32>
    %78 = vector.multi_reduction <add>, %74, %cst_58 [0] : vector<128x128xf32> to vector<128xf32>
    %79 = vector.shape_cast %78 : vector<128xf32> to vector<1x1x1x128xf32>
    %c0_59 = arith.constant 0 : index
    %c0_60 = arith.constant 0 : index
    %c0_61 = arith.constant 0 : index
    %c0_62 = arith.constant 0 : index
    %80 = vector.load %arg5[%c0_59, %c0_60, %c0_61, %c0_62] : memref<1x1x1x128xf32, #tpu.memory_space<vmem>>, vector<1x1x1x128xf32>
    tpu.vector_store %arg5[%c0_59, %c0_60, %c0_61, %c0_62], %79 {strides = array<i32>} : memref<1x1x1x128xf32, #tpu.memory_space<vmem>>, vector<1x1x1x128xf32>,
    %81 = arith.mulf %74, %74 : vector<128x128xf32>
    %cst_63 = arith.constant dense<0.000000e+00> : vector<128xf32>
    %82 = vector.multi_reduction <add>, %81, %cst_63 [0] : vector<128x128xf32> to vector<128xf32>
    %83 = vector.shape_cast %82 : vector<128xf32> to vector<1x1x1x128xf32>
    %c0_64 = arith.constant 0 : index
    %c0_65 = arith.constant 0 : index
    %c0_66 = arith.constant 0 : index
    %c0_67 = arith.constant 0 : index
    %84 = vector.load %arg6[%c0_64, %c0_65, %c0_66, %c0_67] : memref<1x1x1x128xf32, #tpu.memory_space<vmem>>, vector<1x1x1x128xf32>
    tpu.vector_store %arg6[%c0_64, %c0_65, %c0_66, %c0_67], %83 {strides = array<i32>} : memref<1x1x1x128xf32, #tpu.memory_space<vmem>>, vector<1x1x1x128xf32>,
    return
  }
  func.func @transform_1(%arg0: i32, %arg1: i32) -> (i32, i32, i32, i32) {
    %c0_i32 = arith.constant 0 : i32
    %c0_i32_0 = arith.constant 0 : i32
    %c0_i32_1 = arith.constant 0 : i32
    %c0_i32_2 = arith.constant 0 : i32
    %c0_i32_3 = arith.constant 0 : i32
    return %c0_i32, %c0_i32_0, %c0_i32_1, %c0_i32_2 : i32, i32, i32, i32
  }
  func.func @transform_2(%arg0: i32, %arg1: i32) -> (i32, i32, i32, i32) {
    %c0_i32 = arith.constant 0 : i32
    %c0_i32_0 = arith.constant 0 : i32
    %c0_i32_1 = arith.constant 0 : i32
    return %arg0, %arg1, %c0_i32, %c0_i32_0 : i32, i32, i32, i32
  }
  func.func @transform_3(%arg0: i32, %arg1: i32) -> (i32, i32, i32, i32) {
    %c0_i32 = arith.constant 0 : i32
    %c0_i32_0 = arith.constant 0 : i32
    %c0_i32_1 = arith.constant 0 : i32
    return %arg0, %arg1, %c0_i32, %c0_i32_0 : i32, i32, i32, i32
  }
  func.func @transform_4(%arg0: i32, %arg1: i32) -> (i32, i32, i32, i32) {
    %c0_i32 = arith.constant 0 : i32
    %c0_i32_0 = arith.constant 0 : i32
    %c0_i32_1 = arith.constant 0 : i32
    return %arg0, %arg1, %c0_i32, %c0_i32_0 : i32, i32, i32, i32
  }
}

module attributes {stable_mosaic.version = 11 : i64} {
  func.func @_fused_conv1x1_stats_kernel(%arg0: i32, %arg1: memref<128x128xbf16, #tpu.memory_space<vmem>>, %arg2: memref<1x128xf32, #tpu.memory_space<vmem>>, %arg3: memref<1x128xf32, #tpu.memory_space<vmem>>, %arg4: memref<128x128xbf16, #tpu.memory_space<vmem>>, %arg5: memref<128x128xbf16, #tpu.memory_space<vmem>>, %arg6: memref<1x1x128xf32, #tpu.memory_space<vmem>>, %arg7: memref<1x1x128xf32, #tpu.memory_space<vmem>>) attributes {dimension_semantics = [#tpu.dimension_semantics<parallel>], iteration_bounds = array<i64: 4>, scalar_prefetch = 0 : i64, scratch_operands = 0 : i64, tpu.core_type = #tpu.core_type<tc>, window_params = [{transform_indices = @transform_0, window_bounds = array<i64: 128, 128>}, {pipeline_mode = #tpu.pipeline_mode<synchronous>, transform_indices = @transform_1, window_bounds = array<i64: 1, 128>}, {pipeline_mode = #tpu.pipeline_mode<synchronous>, transform_indices = @transform_2, window_bounds = array<i64: 1, 128>}, {pipeline_mode = #tpu.pipeline_mode<synchronous>, transform_indices = @transform_3, window_bounds = array<i64: 128, 128>}, {transform_indices = @transform_4, window_bounds = array<i64: 128, 128>}, {transform_indices = @transform_5, window_bounds = array<i64: 1, 1, 128>}, {transform_indices = @transform_6, window_bounds = array<i64: 1, 1, 128>}]} {
    %c0 = arith.constant 0 : index
    %c0_0 = arith.constant 0 : index
    %0 = vector.load %arg1[%c0, %c0_0] : memref<128x128xbf16, #tpu.memory_space<vmem>>, vector<128x128xbf16>
    %1 = arith.extf %0 : vector<128x128xbf16> to vector<128x128xf32>
    %c0_1 = arith.constant 0 : index
    %c0_2 = arith.constant 0 : index
    %2 = vector.load %arg2[%c0_1, %c0_2] : memref<1x128xf32, #tpu.memory_space<vmem>>, vector<1x128xf32>
    %3 = vector.broadcast %2 : vector<1x128xf32> to vector<128x128xf32>
    %4 = arith.mulf %1, %3 : vector<128x128xf32>
    %c0_3 = arith.constant 0 : index
    %c0_4 = arith.constant 0 : index
    %5 = vector.load %arg3[%c0_3, %c0_4] : memref<1x128xf32, #tpu.memory_space<vmem>>, vector<1x128xf32>
    %6 = vector.broadcast %5 : vector<1x128xf32> to vector<128x128xf32>
    %7 = arith.addf %4, %6 : vector<128x128xf32>
    %cst = arith.constant 0.000000e+00 : f32
    %8 = vector.broadcast %cst : f32 to vector<128x128xf32>
    %9 = arith.cmpf ogt, %7, %8 : vector<128x128xf32>
    %cst_5 = arith.constant 1.000000e-01 : f32
    %10 = vector.broadcast %cst_5 : f32 to vector<128x128xf32>
    %11 = arith.mulf %10, %7 : vector<128x128xf32>
    %12 = arith.select %9, %7, %11 : vector<128x128xi1>, vector<128x128xf32>
    %13 = arith.truncf %12 : vector<128x128xf32> to vector<128x128xbf16>
    %c0_6 = arith.constant 0 : index
    %c0_7 = arith.constant 0 : index
    %14 = vector.load %arg4[%c0_6, %c0_7] : memref<128x128xbf16, #tpu.memory_space<vmem>>, vector<128x128xbf16>
    %cst_8 = arith.constant dense<0.000000e+00> : vector<128x128xf32>
    %15 = tpu.matmul %13, %14, %cst_8 {dimension_numbers = #tpu.dot_dimension_numbers<[1], [0], [0], [1], [0, 0, 1, 1], [], []>} : vector<128x128xbf16>, vector<128x128xbf16>, vector<128x128xf32> -> vector<128x128xf32>
    %16 = arith.truncf %15 : vector<128x128xf32> to vector<128x128xbf16>
    %c0_9 = arith.constant 0 : index
    %c0_10 = arith.constant 0 : index
    %17 = vector.load %arg5[%c0_9, %c0_10] : memref<128x128xbf16, #tpu.memory_space<vmem>>, vector<128x128xbf16>
    tpu.vector_store %arg5[%c0_9, %c0_10], %16 {strides = array<i32>} : memref<128x128xbf16, #tpu.memory_space<vmem>>, vector<128x128xbf16>,
    %cst_11 = arith.constant dense<0.000000e+00> : vector<128xf32>
    %18 = vector.multi_reduction <add>, %15, %cst_11 [0] : vector<128x128xf32> to vector<128xf32>
    %19 = vector.shape_cast %18 : vector<128xf32> to vector<1x1x128xf32>
    %c0_12 = arith.constant 0 : index
    %c0_13 = arith.constant 0 : index
    %c0_14 = arith.constant 0 : index
    %20 = vector.load %arg6[%c0_12, %c0_13, %c0_14] : memref<1x1x128xf32, #tpu.memory_space<vmem>>, vector<1x1x128xf32>
    tpu.vector_store %arg6[%c0_12, %c0_13, %c0_14], %19 {strides = array<i32>} : memref<1x1x128xf32, #tpu.memory_space<vmem>>, vector<1x1x128xf32>,
    %21 = arith.mulf %15, %15 : vector<128x128xf32>
    %cst_15 = arith.constant dense<0.000000e+00> : vector<128xf32>
    %22 = vector.multi_reduction <add>, %21, %cst_15 [0] : vector<128x128xf32> to vector<128xf32>
    %23 = vector.shape_cast %22 : vector<128xf32> to vector<1x1x128xf32>
    %c0_16 = arith.constant 0 : index
    %c0_17 = arith.constant 0 : index
    %c0_18 = arith.constant 0 : index
    %24 = vector.load %arg7[%c0_16, %c0_17, %c0_18] : memref<1x1x128xf32, #tpu.memory_space<vmem>>, vector<1x1x128xf32>
    tpu.vector_store %arg7[%c0_16, %c0_17, %c0_18], %23 {strides = array<i32>} : memref<1x1x128xf32, #tpu.memory_space<vmem>>, vector<1x1x128xf32>,
    return
  }
  func.func @transform_0(%arg0: i32) -> (i32, i32) {
    %c0_i32 = arith.constant 0 : i32
    %c0_i32_0 = arith.constant 0 : i32
    return %arg0, %c0_i32 : i32, i32
  }
  func.func @transform_1(%arg0: i32) -> (i32, i32) {
    %c0_i32 = arith.constant 0 : i32
    %c0_i32_0 = arith.constant 0 : i32
    %c0_i32_1 = arith.constant 0 : i32
    return %c0_i32, %c0_i32_0 : i32, i32
  }
  func.func @transform_2(%arg0: i32) -> (i32, i32) {
    %c0_i32 = arith.constant 0 : i32
    %c0_i32_0 = arith.constant 0 : i32
    %c0_i32_1 = arith.constant 0 : i32
    return %c0_i32, %c0_i32_0 : i32, i32
  }
  func.func @transform_3(%arg0: i32) -> (i32, i32) {
    %c0_i32 = arith.constant 0 : i32
    %c0_i32_0 = arith.constant 0 : i32
    %c0_i32_1 = arith.constant 0 : i32
    return %c0_i32, %c0_i32_0 : i32, i32
  }
  func.func @transform_4(%arg0: i32) -> (i32, i32) {
    %c0_i32 = arith.constant 0 : i32
    %c0_i32_0 = arith.constant 0 : i32
    return %arg0, %c0_i32 : i32, i32
  }
  func.func @transform_5(%arg0: i32) -> (i32, i32, i32) {
    %c0_i32 = arith.constant 0 : i32
    %c0_i32_0 = arith.constant 0 : i32
    %c0_i32_1 = arith.constant 0 : i32
    return %arg0, %c0_i32, %c0_i32_0 : i32, i32, i32
  }
  func.func @transform_6(%arg0: i32) -> (i32, i32, i32) {
    %c0_i32 = arith.constant 0 : i32
    %c0_i32_0 = arith.constant 0 : i32
    %c0_i32_1 = arith.constant 0 : i32
    return %arg0, %c0_i32, %c0_i32_0 : i32, i32, i32
  }
}

module attributes {stable_mosaic.version = 11 : i64} {
  func.func @_fused_conv1x1_stats_kernel(%arg0: i32, %arg1: memref<128x128xbf16, #tpu.memory_space<vmem>>, %arg2: memref<1x128xf32, #tpu.memory_space<vmem>>, %arg3: memref<1x128xf32, #tpu.memory_space<vmem>>, %arg4: memref<128x128xbf16, #tpu.memory_space<vmem>>, %arg5: memref<128x128xf32, #tpu.memory_space<vmem>>, %arg6: memref<1x1x128xf32, #tpu.memory_space<vmem>>, %arg7: memref<1x1x128xf32, #tpu.memory_space<vmem>>) attributes {dimension_semantics = [#tpu.dimension_semantics<parallel>], iteration_bounds = array<i64: 4>, scalar_prefetch = 0 : i64, scratch_operands = 0 : i64, tpu.core_type = #tpu.core_type<tc>, window_params = [{transform_indices = @transform_0, window_bounds = array<i64: 128, 128>}, {pipeline_mode = #tpu.pipeline_mode<synchronous>, transform_indices = @transform_1, window_bounds = array<i64: 1, 128>}, {pipeline_mode = #tpu.pipeline_mode<synchronous>, transform_indices = @transform_2, window_bounds = array<i64: 1, 128>}, {pipeline_mode = #tpu.pipeline_mode<synchronous>, transform_indices = @transform_3, window_bounds = array<i64: 128, 128>}, {transform_indices = @transform_4, window_bounds = array<i64: 128, 128>}, {transform_indices = @transform_5, window_bounds = array<i64: 1, 1, 128>}, {transform_indices = @transform_6, window_bounds = array<i64: 1, 1, 128>}]} {
    %c0 = arith.constant 0 : index
    %c0_0 = arith.constant 0 : index
    %0 = vector.load %arg1[%c0, %c0_0] : memref<128x128xbf16, #tpu.memory_space<vmem>>, vector<128x128xbf16>
    %1 = arith.extf %0 : vector<128x128xbf16> to vector<128x128xf32>
    %c0_1 = arith.constant 0 : index
    %c0_2 = arith.constant 0 : index
    %2 = vector.load %arg2[%c0_1, %c0_2] : memref<1x128xf32, #tpu.memory_space<vmem>>, vector<1x128xf32>
    %3 = vector.broadcast %2 : vector<1x128xf32> to vector<128x128xf32>
    %4 = arith.mulf %1, %3 : vector<128x128xf32>
    %c0_3 = arith.constant 0 : index
    %c0_4 = arith.constant 0 : index
    %5 = vector.load %arg3[%c0_3, %c0_4] : memref<1x128xf32, #tpu.memory_space<vmem>>, vector<1x128xf32>
    %6 = vector.broadcast %5 : vector<1x128xf32> to vector<128x128xf32>
    %7 = arith.addf %4, %6 : vector<128x128xf32>
    %cst = arith.constant 0.000000e+00 : f32
    %8 = vector.broadcast %cst : f32 to vector<128x128xf32>
    %9 = arith.cmpf ogt, %7, %8 : vector<128x128xf32>
    %cst_5 = arith.constant 1.000000e-01 : f32
    %10 = vector.broadcast %cst_5 : f32 to vector<128x128xf32>
    %11 = arith.mulf %10, %7 : vector<128x128xf32>
    %12 = arith.select %9, %7, %11 : vector<128x128xi1>, vector<128x128xf32>
    %13 = arith.truncf %12 : vector<128x128xf32> to vector<128x128xbf16>
    %c0_6 = arith.constant 0 : index
    %c0_7 = arith.constant 0 : index
    %14 = vector.load %arg4[%c0_6, %c0_7] : memref<128x128xbf16, #tpu.memory_space<vmem>>, vector<128x128xbf16>
    %cst_8 = arith.constant dense<0.000000e+00> : vector<128x128xf32>
    %15 = tpu.matmul %13, %14, %cst_8 {dimension_numbers = #tpu.dot_dimension_numbers<[1], [0], [0], [1], [0, 0, 1, 1], [], []>} : vector<128x128xbf16>, vector<128x128xbf16>, vector<128x128xf32> -> vector<128x128xf32>
    %c0_9 = arith.constant 0 : index
    %c0_10 = arith.constant 0 : index
    %16 = vector.load %arg5[%c0_9, %c0_10] : memref<128x128xf32, #tpu.memory_space<vmem>>, vector<128x128xf32>
    tpu.vector_store %arg5[%c0_9, %c0_10], %15 {strides = array<i32>} : memref<128x128xf32, #tpu.memory_space<vmem>>, vector<128x128xf32>,
    %cst_11 = arith.constant dense<0.000000e+00> : vector<128xf32>
    %17 = vector.multi_reduction <add>, %15, %cst_11 [0] : vector<128x128xf32> to vector<128xf32>
    %18 = vector.shape_cast %17 : vector<128xf32> to vector<1x1x128xf32>
    %c0_12 = arith.constant 0 : index
    %c0_13 = arith.constant 0 : index
    %c0_14 = arith.constant 0 : index
    %19 = vector.load %arg6[%c0_12, %c0_13, %c0_14] : memref<1x1x128xf32, #tpu.memory_space<vmem>>, vector<1x1x128xf32>
    tpu.vector_store %arg6[%c0_12, %c0_13, %c0_14], %18 {strides = array<i32>} : memref<1x1x128xf32, #tpu.memory_space<vmem>>, vector<1x1x128xf32>,
    %20 = arith.mulf %15, %15 : vector<128x128xf32>
    %cst_15 = arith.constant dense<0.000000e+00> : vector<128xf32>
    %21 = vector.multi_reduction <add>, %20, %cst_15 [0] : vector<128x128xf32> to vector<128xf32>
    %22 = vector.shape_cast %21 : vector<128xf32> to vector<1x1x128xf32>
    %c0_16 = arith.constant 0 : index
    %c0_17 = arith.constant 0 : index
    %c0_18 = arith.constant 0 : index
    %23 = vector.load %arg7[%c0_16, %c0_17, %c0_18] : memref<1x1x128xf32, #tpu.memory_space<vmem>>, vector<1x1x128xf32>
    tpu.vector_store %arg7[%c0_16, %c0_17, %c0_18], %22 {strides = array<i32>} : memref<1x1x128xf32, #tpu.memory_space<vmem>>, vector<1x1x128xf32>,
    return
  }
  func.func @transform_0(%arg0: i32) -> (i32, i32) {
    %c0_i32 = arith.constant 0 : i32
    %c0_i32_0 = arith.constant 0 : i32
    return %arg0, %c0_i32 : i32, i32
  }
  func.func @transform_1(%arg0: i32) -> (i32, i32) {
    %c0_i32 = arith.constant 0 : i32
    %c0_i32_0 = arith.constant 0 : i32
    %c0_i32_1 = arith.constant 0 : i32
    return %c0_i32, %c0_i32_0 : i32, i32
  }
  func.func @transform_2(%arg0: i32) -> (i32, i32) {
    %c0_i32 = arith.constant 0 : i32
    %c0_i32_0 = arith.constant 0 : i32
    %c0_i32_1 = arith.constant 0 : i32
    return %c0_i32, %c0_i32_0 : i32, i32
  }
  func.func @transform_3(%arg0: i32) -> (i32, i32) {
    %c0_i32 = arith.constant 0 : i32
    %c0_i32_0 = arith.constant 0 : i32
    %c0_i32_1 = arith.constant 0 : i32
    return %c0_i32, %c0_i32_0 : i32, i32
  }
  func.func @transform_4(%arg0: i32) -> (i32, i32) {
    %c0_i32 = arith.constant 0 : i32
    %c0_i32_0 = arith.constant 0 : i32
    return %arg0, %c0_i32 : i32, i32
  }
  func.func @transform_5(%arg0: i32) -> (i32, i32, i32) {
    %c0_i32 = arith.constant 0 : i32
    %c0_i32_0 = arith.constant 0 : i32
    %c0_i32_1 = arith.constant 0 : i32
    return %arg0, %c0_i32, %c0_i32_0 : i32, i32, i32
  }
  func.func @transform_6(%arg0: i32) -> (i32, i32, i32) {
    %c0_i32 = arith.constant 0 : i32
    %c0_i32_0 = arith.constant 0 : i32
    %c0_i32_1 = arith.constant 0 : i32
    return %arg0, %c0_i32, %c0_i32_0 : i32, i32, i32
  }
}

module attributes {stable_mosaic.version = 11 : i64} {
  func.func @_bn_act_kernel(%arg0: i32, %arg1: memref<128x128xf32, #tpu.memory_space<vmem>>, %arg2: memref<1x128xf32, #tpu.memory_space<vmem>>, %arg3: memref<1x128xf32, #tpu.memory_space<vmem>>, %arg4: memref<128x128xf32, #tpu.memory_space<vmem>>) attributes {dimension_semantics = [#tpu.dimension_semantics<parallel>], iteration_bounds = array<i64: 4>, scalar_prefetch = 0 : i64, scratch_operands = 0 : i64, tpu.core_type = #tpu.core_type<tc>, window_params = [{transform_indices = @transform_0, window_bounds = array<i64: 128, 128>}, {pipeline_mode = #tpu.pipeline_mode<synchronous>, transform_indices = @transform_1, window_bounds = array<i64: 1, 128>}, {pipeline_mode = #tpu.pipeline_mode<synchronous>, transform_indices = @transform_2, window_bounds = array<i64: 1, 128>}, {transform_indices = @transform_3, window_bounds = array<i64: 128, 128>}]} {
    %c0 = arith.constant 0 : index
    %c0_0 = arith.constant 0 : index
    %0 = vector.load %arg1[%c0, %c0_0] : memref<128x128xf32, #tpu.memory_space<vmem>>, vector<128x128xf32>
    %c0_1 = arith.constant 0 : index
    %c0_2 = arith.constant 0 : index
    %1 = vector.load %arg2[%c0_1, %c0_2] : memref<1x128xf32, #tpu.memory_space<vmem>>, vector<1x128xf32>
    %2 = vector.broadcast %1 : vector<1x128xf32> to vector<128x128xf32>
    %3 = arith.mulf %0, %2 : vector<128x128xf32>
    %c0_3 = arith.constant 0 : index
    %c0_4 = arith.constant 0 : index
    %4 = vector.load %arg3[%c0_3, %c0_4] : memref<1x128xf32, #tpu.memory_space<vmem>>, vector<1x128xf32>
    %5 = vector.broadcast %4 : vector<1x128xf32> to vector<128x128xf32>
    %6 = arith.addf %3, %5 : vector<128x128xf32>
    %cst = arith.constant 0.000000e+00 : f32
    %7 = vector.broadcast %cst : f32 to vector<128x128xf32>
    %8 = arith.cmpf ogt, %6, %7 : vector<128x128xf32>
    %cst_5 = arith.constant 1.000000e-01 : f32
    %9 = vector.broadcast %cst_5 : f32 to vector<128x128xf32>
    %10 = arith.mulf %9, %6 : vector<128x128xf32>
    %11 = arith.select %8, %6, %10 : vector<128x128xi1>, vector<128x128xf32>
    %c0_6 = arith.constant 0 : index
    %c0_7 = arith.constant 0 : index
    %12 = vector.load %arg4[%c0_6, %c0_7] : memref<128x128xf32, #tpu.memory_space<vmem>>, vector<128x128xf32>
    tpu.vector_store %arg4[%c0_6, %c0_7], %11 {strides = array<i32>} : memref<128x128xf32, #tpu.memory_space<vmem>>, vector<128x128xf32>,
    return
  }
  func.func @transform_0(%arg0: i32) -> (i32, i32) {
    %c0_i32 = arith.constant 0 : i32
    %c0_i32_0 = arith.constant 0 : i32
    return %arg0, %c0_i32 : i32, i32
  }
  func.func @transform_1(%arg0: i32) -> (i32, i32) {
    %c0_i32 = arith.constant 0 : i32
    %c0_i32_0 = arith.constant 0 : i32
    %c0_i32_1 = arith.constant 0 : i32
    return %c0_i32, %c0_i32_0 : i32, i32
  }
  func.func @transform_2(%arg0: i32) -> (i32, i32) {
    %c0_i32 = arith.constant 0 : i32
    %c0_i32_0 = arith.constant 0 : i32
    %c0_i32_1 = arith.constant 0 : i32
    return %c0_i32, %c0_i32_0 : i32, i32
  }
  func.func @transform_3(%arg0: i32) -> (i32, i32) {
    %c0_i32 = arith.constant 0 : i32
    %c0_i32_0 = arith.constant 0 : i32
    return %arg0, %c0_i32 : i32, i32
  }
}

</mosaic_0001>

<llo_original>
// kernel: conv5_block.6
$region0: #{conv5_block.6}
  #allocation0 [shape = 'u32[]', space=smem, size = 0x4, offset = 0x4, fixed_abs, tag = 'smem constant byte address 0x4 - core index']
  #allocation1 [shape = 'u32[144,128]{1,0:T(1,128)}', space=vmem, size = 0x12000, scoped, tag = 'internal scratch']
  %s0 = inlined_call_operand.vmem [shape: bf16[512,128], index: 0, kind: input, shape index: {}]
  %s1 = inlined_call_operand.vmem [shape: bf16[128,128], index: 1, kind: input, shape index: {}]
  %s2 = inlined_call_operand.vmem [shape: bf16[512,128], index: 2, kind: output, shape index: {0}]
  %s3 = inlined_call_operand.vmem [shape: f32[4,1,128], index: 3, kind: output, shape index: {1}]
  %s4 = inlined_call_operand.vmem [shape: f32[4,1,128], index: 4, kind: output, shape index: {2}]
  %5 = xla_tuple %s2, %s3, %s4
  %s6 = sld [smem:[#allocation0]]
  $region57: #{conv5_block.6} parent=0
    _
  %s8 = ssub.s32 1, %s6
  %s9 = scalar_select 0, %s8, %s6
  loop: start=0, step=1, limit=6
  $region2: #{conv5_block.6} parent=0 // loop_pre_header
    _
  $region3: #{conv5_block.6} parent=0 // loop_header
    %s11 = sphi 0, %s15
    %p12 = scmp.ge.s32.totalorder %s11, 6
    %s21 = sphi 0, %s23
    %s24 = sphi 0, %s21
    %s25 = sphi 0, %s24
    %s41 = sphi 0, %s25
    %s45 = sphi 0, %s45
    %s47 = sphi 0, %s45
    %s48 = sphi 0, %s47
    %s62 = sphi 0, %s48
    %s68 = sphi 0, %s70
    %s71 = sphi 0, %s68
    %s72 = sphi 0, %s71
    %s88 = sphi 0, %s72
    %s94 = sphi 0, %s96
    %s97 = sphi 0, %s94
    %s98 = sphi 0, %s97
    %s114 = sphi 0, %s98
    %s120 = sphi 0, %s122
    %s123 = sphi 0, %s120
    %s124 = sphi 0, %s123
    %s140 = sphi 0, %s124
  $region4: #{conv5_block.6} parent=0 // loop_header_branch
    %14 = sbr.rel (%p12) target = $region8
  $region5: #{conv5_block.6} parent=0 // loop_body
    %s16 = ssub.s32 %s11, 1
    %s17 = ssub.s32 %s11, 2
    %s18 = sadd.s32 %s11, 1
    %s19 = ssub.s32 %s11, %s18
    %p20 = scmp.eq.s32.totalorder %s19, 0
    %s22 = sadd.s32 %s21, 1
    %s23 = scalar_select %p20, %s21, %s22
    %p26 = pneg %p20
    %p27 = scmp.eq.s32.totalorder %s11, 3
    %p28 = por %p26, %p27
    %p29 = scmp.ne.s32.totalorder %s21, %s24
    %p30 = scmp.eq.s32.totalorder %s11, 0
    %p31 = por %p29, %p30
    %p32 = scmp.ne.s32.totalorder %s21, %s24
    %p33 = scmp.eq.s32.totalorder %s16, 3
    %p34 = por %p32, %p33
    %p35 = scmp.ne.s32.totalorder %s24, %s25
    %p36 = scmp.eq.s32.totalorder %s16, 0
    %p37 = por %p35, %p36
    %p38 = scmp.ne.s32.totalorder %s24, %s25
    %p39 = scmp.eq.s32.totalorder %s17, 3
    %p40 = por %p38, %p39
    %p42 = scmp.ne.s32.totalorder %s25, %s41
    %p43 = scmp.eq.s32.totalorder %s17, 0
    %p44 = por %p42, %p43
    %s46 = sadd.s32 %s45, 1
    %p49 = scmp.eq.s32.totalorder %s11, 3
    %p50 = scmp.ne.s32.totalorder %s45, %s47
    %p51 = scmp.eq.s32.totalorder %s11, 0
    %p52 = por %p50, %p51
    %p53 = scmp.ne.s32.totalorder %s45, %s47
    %p54 = scmp.eq.s32.totalorder %s16, 3
    %p55 = por %p53, %p54
    %p56 = scmp.ne.s32.totalorder %s47, %s48
    %p57 = scmp.eq.s32.totalorder %s16, 0
    %p58 = por %p56, %p57
    %p59 = scmp.ne.s32.totalorder %s47, %s48
    %p60 = scmp.eq.s32.totalorder %s17, 3
    %p61 = por %p59, %p60
    %p63 = scmp.ne.s32.totalorder %s48, %s62
    %p64 = scmp.eq.s32.totalorder %s17, 0
    %p65 = por %p63, %p64
    %s66 = ssub.s32 %s11, %s18
    %p67 = scmp.eq.s32.totalorder %s66, 0
    %s69 = sadd.s32 %s68, 1
    %s70 = scalar_select %p67, %s68, %s69
    %p73 = pneg %p67
    %p74 = scmp.eq.s32.totalorder %s11, 3
    %p75 = por %p73, %p74
    %p76 = scmp.ne.s32.totalorder %s68, %s71
    %p77 = scmp.eq.s32.totalorder %s11, 0
    %p78 = por %p76, %p77
    %p79 = scmp.ne.s32.totalorder %s68, %s71
    %p80 = scmp.eq.s32.totalorder %s16, 3
    %p81 = por %p79, %p80
    %p82 = scmp.ne.s32.totalorder %s71, %s72
    %p83 = scmp.eq.s32.totalorder %s16, 0
    %p84 = por %p82, %p83
    %p85 = scmp.ne.s32.totalorder %s71, %s72
    %p86 = scmp.eq.s32.totalorder %s17, 3
    %p87 = por %p85, %p86
    %p89 = scmp.ne.s32.totalorder %s72, %s88
    %p90 = scmp.eq.s32.totalorder %s17, 0
    %p91 = por %p89, %p90
    %s92 = ssub.s32 %s11, %s18
    %p93 = scmp.eq.s32.totalorder %s92, 0
    %s95 = sadd.s32 %s94, 1
    %s96 = scalar_select %p93, %s94, %s95
    %p99 = pneg %p93
    %p100 = scmp.eq.s32.totalorder %s11, 3
    %p101 = por %p99, %p100
    %p102 = scmp.ne.s32.totalorder %s94, %s97
    %p103 = scmp.eq.s32.totalorder %s11, 0
    %p104 = por %p102, %p103
    %p105 = scmp.ne.s32.totalorder %s94, %s97
    %p106 = scmp.eq.s32.totalorder %s16, 3
    %p107 = por %p105, %p106
    %p108 = scmp.ne.s32.totalorder %s97, %s98
    %p109 = scmp.eq.s32.totalorder %s16, 0
    %p110 = por %p108, %p109
    %p111 = scmp.ne.s32.totalorder %s97, %s98
    %p112 = scmp.eq.s32.totalorder %s17, 3
    %p113 = por %p111, %p112
    %p115 = scmp.ne.s32.totalorder %s98, %s114
    %p116 = scmp.eq.s32.totalorder %s17, 0
    %p117 = por %p115, %p116
    %s118 = ssub.s32 %s11, %s18
    %p119 = scmp.eq.s32.totalorder %s118, 0
    %s121 = sadd.s32 %s120, 1
    %s122 = scalar_select %p119, %s120, %s121
    %p125 = pneg %p119
    %p126 = scmp.eq.s32.totalorder %s11, 3
    %p127 = por %p125, %p126
    %p128 = scmp.ne.s32.totalorder %s120, %s123
    %p129 = scmp.eq.s32.totalorder %s11, 0
    %p130 = por %p128, %p129
    %p131 = scmp.ne.s32.totalorder %s120, %s123
    %p132 = scmp.eq.s32.totalorder %s16, 3
    %p133 = por %p131, %p132
    %p134 = scmp.ne.s32.totalorder %s123, %s124
    %p135 = scmp.eq.s32.totalorder %s16, 0
    %p136 = por %p134, %p135
    %p137 = scmp.ne.s32.totalorder %s123, %s124
    %p138 = scmp.eq.s32.totalorder %s17, 3
    %p139 = por %p137, %p138
    %p141 = scmp.ne.s32.totalorder %s124, %s140
    %p142 = scmp.eq.s32.totalorder %s17, 0
    %p143 = por %p141, %p142
    %p144 = scmp.le.s32.totalorder 1, %s11
    %p145 = scmp.lt.s32.totalorder %s11, 5
    %p146 = pnand %p144, %p145
    %p147 = pneg %p146
    // Predicated region
    $region9: #{conv5_block.6} parent=5 // pred_check
      _
    $region10: #{conv5_block.6} parent=5 // pred_check_branch
      %149 = sbr.rel (%p146) target = $region12
    $region11: #{conv5_block.6} parent=5 // pred_region
      %s150 = ssub.s32 %s11, 1
      // Predicated region
      $region13: #{conv5_block.6} parent=11 // pred_check
        %p151 = pneg %p58
      $region14: #{conv5_block.6} parent=11 // pred_check_branch
        %153 = sbr.rel (%p151) target = $region16
      $region15: #{conv5_block.6} parent=11 // pred_region
        _
      $region16: #{conv5_block.6} parent=11 // pred_fallthru
        _
    $region12: #{conv5_block.6} parent=5 // pred_fallthru
      _
    %p154 = scmp.lt.s32.totalorder %s11, 4
    // Predicated region
    $region17: #{conv5_block.6} parent=5 // pred_check
      %p155 = pneg %p154
    $region18: #{conv5_block.6} parent=5 // pred_check_branch
      %157 = sbr.rel (%p155) target = $region20
    $region19: #{conv5_block.6} parent=5 // pred_region
      // Predicated region
      $region21: #{conv5_block.6} parent=19 // pred_check
        %p158 = pneg %p31
      $region22: #{conv5_block.6} parent=19 // pred_check_branch
        %160 = sbr.rel (%p158) target = $region24
      $region23: #{conv5_block.6} parent=19 // pred_region
        %s161 = smul.u32 16, %s11
        %p162 = scmp.lt.s32.totalorder %s161, 63
        %s163 = scalar_select %p162, %s161, 63
        %s164 = smul.addr %s163, 4
        %s165 = scalar_lea.vmem %s0, %s164
        %s166 = smul.u32 16, %s11
      $region24: #{conv5_block.6} parent=19 // pred_fallthru
        _
    $region20: #{conv5_block.6} parent=5 // pred_fallthru
      _
    %p167 = scmp.le.s32.totalorder 1, %s11
    %p168 = scmp.lt.s32.totalorder %s11, 5
    %p169 = pnand %p167, %p168
    %p170 = pneg %p169
    // Predicated region
    $region25: #{conv5_block.6} parent=5 // pred_check
      _
    $region26: #{conv5_block.6} parent=5 // pred_check_branch
      %172 = sbr.rel (%p169) target = $region28
    $region27: #{conv5_block.6} parent=5 // pred_region
      %s173 = ssub.s32 %s11, 1
      %s174 = smul.u32 16, %s16
      %p175 = scmp.lt.s32.totalorder %s174, 63
      %s176 = scalar_select %p175, %s174, 63
      %s177 = smul.addr %s176, 4
      %s178 = scalar_lea.vmem %s0, %s177
      %p179 = pneg %p37
      %p180 = pneg %p34
      %p181 = pneg %p58
      %p182 = pneg %p55
      %p183 = pneg %p84
      %p184 = pneg %p81
      %s185 = smul.u32 16, %s16
      %p186 = scmp.lt.s32.totalorder %s185, 63
      %s187 = scalar_select %p186, %s185, 63
      %s188 = smul.addr %s187, 4
      %s189 = scalar_lea.vmem %s2, %s188
      %p190 = pneg %p110
      %p191 = pneg %p107
      %p192 = scmp.lt.s32.totalorder %s16, 3
      %s193 = scalar_select %p192, %s16, 3
      %s194 = scalar_lea.vmem %s3, %s193
      %p195 = pneg %p136
      %p196 = pneg %p133
      %p197 = scmp.lt.s32.totalorder %s16, 3
      %s198 = scalar_select %p197, %s16, 3
      %s199 = scalar_lea.vmem %s4, %s198
      %s200 = smul.u32 16, %s16
      %p201 = scmp.lt.s32.totalorder %s200, 63
      %s202 = scalar_select %p201, %s200, 63
      %s203 = smul.addr %s202, 4
      %s204 = scalar_lea.vmem %s0, %s203
      %s205 = smul.u32 16, %s16
      %s206 = smul.u32 16, %s16
      %p207 = scmp.lt.s32.totalorder %s206, 63
      %s208 = scalar_select %p207, %s206, 63
      %s209 = smul.addr %s208, 4
      %s210 = scalar_lea.vmem %s2, %s209
      %s211 = smul.u32 16, %s16
      %p212 = scmp.lt.s32.totalorder %s16, 3
      %s213 = scalar_select %p212, %s16, 3
      %s214 = scalar_lea.vmem %s3, %s213
      %p215 = scmp.lt.s32.totalorder %s16, 3
      %s216 = scalar_select %p215, %s16, 3
      %s217 = scalar_lea.vmem %s4, %s216
      %v219 = vld [vmem:[%s204] sm:$0xf]
      %v220 = vld [vmem:[%s204 + $0x4] sm:$0xf]
      %v221 = vld [vmem:[%s204 + $0x8] sm:$0xf]
      %v222 = vld [vmem:[%s204 + $0xc] sm:$0xf]
      %v223 = vld [vmem:[%s204 + $0x10] sm:$0xf]
      %v224 = vld [vmem:[%s204 + $0x14] sm:$0xf]
      %v225 = vld [vmem:[%s204 + $0x18] sm:$0xf]
      %v226 = vld [vmem:[%s204 + $0x1c] sm:$0xf]
      %v227 = vld [vmem:[%s204 + $0x20] sm:$0xf]
      %v228 = vld [vmem:[%s204 + $0x24] sm:$0xf]
      %v229 = vld [vmem:[%s204 + $0x28] sm:$0xf]
      %v230 = vld [vmem:[%s204 + $0x2c] sm:$0xf]
      %v231 = vld [vmem:[%s204 + $0x30] sm:$0xf]
      %v232 = vld [vmem:[%s204 + $0x34] sm:$0xf]
      %v233 = vld [vmem:[%s204 + $0x38] sm:$0xf]
      %v234 = vld [vmem:[%s204 + $0x3c] sm:$0xf]
      %v235 = vld [vmem:[%s1] sm:$0xf]
      %v236 = vld [vmem:[%s1 + $0x4] sm:$0xf]
      %v237 = vld [vmem:[%s1 + $0x8] sm:$0xf]
      %v238 = vld [vmem:[%s1 + $0xc] sm:$0xf]
      %v239 = vld [vmem:[%s1 + $0x10] sm:$0xf]
      %v240 = vld [vmem:[%s1 + $0x14] sm:$0xf]
      %v241 = vld [vmem:[%s1 + $0x18] sm:$0xf]
      %v242 = vld [vmem:[%s1 + $0x1c] sm:$0xf]
      %v243 = vld [vmem:[%s1 + $0x20] sm:$0xf]
      %v244 = vld [vmem:[%s1 + $0x24] sm:$0xf]
      %v245 = vld [vmem:[%s1 + $0x28] sm:$0xf]
      %v246 = vld [vmem:[%s1 + $0x2c] sm:$0xf]
      %v247 = vld [vmem:[%s1 + $0x30] sm:$0xf]
      %v248 = vld [vmem:[%s1 + $0x34] sm:$0xf]
      %v249 = vld [vmem:[%s1 + $0x38] sm:$0xf]
      %v250 = vld [vmem:[%s1 + $0x3c] sm:$0xf]
      %v267 = vunpack.c.l.b16 %v219
      %v268 = vunpack.c.l.b16 %v220
      %v269 = vunpack.c.l.b16 %v221
      %v270 = vunpack.c.l.b16 %v222
      %v271 = vunpack.c.l.b16 %v223
      %v272 = vunpack.c.l.b16 %v224
      %v273 = vunpack.c.l.b16 %v225
      %v274 = vunpack.c.l.b16 %v226
      %v275 = vunpack.c.l.b16 %v227
      %v276 = vunpack.c.l.b16 %v228
      %v277 = vunpack.c.l.b16 %v229
      %v278 = vunpack.c.l.b16 %v230
      %v279 = vunpack.c.l.b16 %v231
      %v280 = vunpack.c.l.b16 %v232
      %v281 = vunpack.c.l.b16 %v233
      %v282 = vunpack.c.l.b16 %v234
      %v283 = vpack.c.b16 %v268, %v267
      %v284 = vpack.c.b16 %v270, %v269
      %v285 = vpack.c.b16 %v272, %v271
      %v286 = vpack.c.b16 %v274, %v273
      %v287 = vpack.c.b16 %v276, %v275
      %v288 = vpack.c.b16 %v278, %v277
      %v289 = vpack.c.b16 %v280, %v279
      %v290 = vpack.c.b16 %v282, %v281
      %v315 = vunpack.c.l.b16 %v235
      %v316 = vunpack.c.l.b16 %v236
      %v317 = vunpack.c.l.b16 %v237
      %v318 = vunpack.c.l.b16 %v238
      %v319 = vunpack.c.l.b16 %v239
      %v320 = vunpack.c.l.b16 %v240
      %v321 = vunpack.c.l.b16 %v241
      %v322 = vunpack.c.l.b16 %v242
      %v323 = vunpack.c.l.b16 %v243
      %v324 = vunpack.c.l.b16 %v244
      %v325 = vunpack.c.l.b16 %v245
      %v326 = vunpack.c.l.b16 %v246
      %v327 = vunpack.c.l.b16 %v247
      %v328 = vunpack.c.l.b16 %v248
      %v329 = vunpack.c.l.b16 %v249
      %v330 = vunpack.c.l.b16 %v250
      %v331 = vpack.c.b16 %v316, %v315
      %v332 = vpack.c.b16 %v318, %v317
      %v333 = vpack.c.b16 %v320, %v319
      %v334 = vpack.c.b16 %v322, %v321
      %v335 = vpack.c.b16 %v324, %v323
      %v336 = vpack.c.b16 %v326, %v325
      %v337 = vpack.c.b16 %v328, %v327
      %v338 = vpack.c.b16 %v330, %v329
      %347 = vmatprep.subr.bf16.mxu0 0
      %348 = vmatpush1.bf16.msra.mxu0 %v338
      %349 = vmatprep.subr.bf16.mxu0 0
      %350 = vmatpush1.bf16.msra.mxu0 %v337
      %351 = vmatprep.subr.bf16.mxu0 0
      %352 = vmatpush1.bf16.msra.mxu0 %v336
      %353 = vmatprep.subr.bf16.mxu0 0
      %354 = vmatpush1.bf16.msra.mxu0 %v335
      %355 = vmatprep.subr.bf16.mxu0 0
      %356 = vmatpush1.bf16.msra.mxu0 %v334
      %357 = vmatprep.subr.bf16.mxu0 0
      %358 = vmatpush1.bf16.msra.mxu0 %v333
      %359 = vmatprep.subr.bf16.mxu0 0
      %360 = vmatpush1.bf16.msra.mxu0 %v332
      %361 = vmatprep.subr.bf16.mxu0 0
      %362 = vmatpush1.bf16.msra.mxu0 %v331
      %363 = vmatprep.subr.bf16.mxu0 0
      %364 = vmatpush2.bf16.msra.mxu0 0
      %365 = vmatprep.subr.bf16.mxu0 0
      %366 = vmatpush2.bf16.msra.mxu0 0
      %367 = vmatprep.subr.bf16.mxu0 0
      %368 = vmatpush2.bf16.msra.mxu0 0
      %369 = vmatprep.subr.bf16.mxu0 0
      %370 = vmatpush2.bf16.msra.mxu0 0
      %371 = vmatprep.subr.bf16.mxu0 0
      %372 = vmatpush2.bf16.msra.mxu0 0
      %373 = vmatprep.subr.bf16.mxu0 0
      %374 = vmatpush2.bf16.msra.mxu0 0
      %375 = vmatprep.subr.bf16.mxu0 0
      %376 = vmatpush2.bf16.msra.mxu0 0
      %377 = vmatprep.subr.bf16.mxu0 0
      %378 = vmatpush2.bf16.msra.mxu0 0
      %379 = vmatprep.mubr.bf16.mxu0 0
      %380 = vmatmul.mubr.bf16.gmra.mxu0 %v283
      %v381 = vpop.f32.mrf.mxu0
      %v382 = vadd.f32 0.0, %v381
      %v383 = vpop.f32.mrf.mxu0
      %v384 = vpop.f32.mrf.mxu0
      %v385 = vadd.f32 0.0, %v384
      %v386 = vpop.f32.mrf.mxu0
      %387 = vmatprep.mubr.bf16.mxu0 0
      %388 = vmatmul.mubr.bf16.gmra.mxu0 %v284
      %v389 = vpop.f32.mrf.mxu0
      %v390 = vadd.f32 0.0, %v389
      %v391 = vpop.f32.mrf.mxu0
      %v392 = vpop.f32.mrf.mxu0
      %v393 = vadd.f32 0.0, %v392
      %v394 = vpop.f32.mrf.mxu0
      %395 = vmatprep.mubr.bf16.mxu0 0
      %396 = vmatmul.mubr.bf16.gmra.mxu0 %v285
      %v397 = vpop.f32.mrf.mxu0
      %v398 = vadd.f32 0.0, %v397
      %v399 = vpop.f32.mrf.mxu0
      %v400 = vpop.f32.mrf.mxu0
      %v401 = vadd.f32 0.0, %v400
      %v402 = vpop.f32.mrf.mxu0
      %403 = vmatprep.mubr.bf16.mxu0 0
      %404 = vmatmul.mubr.bf16.gmra.mxu0 %v286
      %v405 = vpop.f32.mrf.mxu0
      %v406 = vadd.f32 0.0, %v405
      %v407 = vpop.f32.mrf.mxu0
      %v408 = vpop.f32.mrf.mxu0
      %v409 = vadd.f32 0.0, %v408
      %v410 = vpop.f32.mrf.mxu0
      %411 = vmatprep.mubr.bf16.mxu0 0
      %412 = vmatmul.mubr.bf16.gmra.mxu0 %v287
      %v413 = vpop.f32.mrf.mxu0
      %v414 = vadd.f32 0.0, %v413
      %v415 = vpop.f32.mrf.mxu0
      %v416 = vpop.f32.mrf.mxu0
      %v417 = vadd.f32 0.0, %v416
      %v418 = vpop.f32.mrf.mxu0
      %419 = vmatprep.mubr.bf16.mxu0 0
      %420 = vmatmul.mubr.bf16.gmra.mxu0 %v288
      %v421 = vpop.f32.mrf.mxu0
      %v422 = vadd.f32 0.0, %v421
      %v423 = vpop.f32.mrf.mxu0
      %v424 = vpop.f32.mrf.mxu0
      %v425 = vadd.f32 0.0, %v424
      %v426 = vpop.f32.mrf.mxu0
      %427 = vmatprep.mubr.bf16.mxu0 0
      %428 = vmatmul.mubr.bf16.gmra.mxu0 %v289
      %v429 = vpop.f32.mrf.mxu0
      %v430 = vadd.f32 0.0, %v429
      %v431 = vpop.f32.mrf.mxu0
      %v432 = vpop.f32.mrf.mxu0
      %v433 = vadd.f32 0.0, %v432
      %v434 = vpop.f32.mrf.mxu0
      %435 = vmatprep.mubr.bf16.mxu0 0
      %436 = vmatmul.mubr.bf16.gmra.mxu0 %v290
      %v437 = vpop.f32.mrf.mxu0
      %v438 = vadd.f32 0.0, %v437
      %v439 = vpop.f32.mrf.mxu0
      %v440 = vpop.f32.mrf.mxu0
      %v441 = vadd.f32 0.0, %v440
      %v442 = vpop.f32.mrf.mxu0
      %443 = vdwg.mxu0
      %v444 = vpack.c.bf16 %v385, %v382
      %v445 = vpack.c.bf16 %v393, %v390
      %v446 = vpack.c.bf16 %v401, %v398
      %v447 = vpack.c.bf16 %v409, %v406
      %v448 = vpack.c.bf16 %v417, %v414
      %v449 = vpack.c.bf16 %v425, %v422
      %v450 = vpack.c.bf16 %v433, %v430
      %v451 = vpack.c.bf16 %v441, %v438
      %v460 = vunpack.c.l.b16 %v444
      %v461 = vunpack.c.h.b16 %v444
      %v462 = vunpack.c.l.b16 %v445
      %v463 = vunpack.c.h.b16 %v445
      %v464 = vunpack.c.l.b16 %v446
      %v465 = vunpack.c.h.b16 %v446
      %v466 = vunpack.c.l.b16 %v447
      %v467 = vunpack.c.h.b16 %v447
      %v468 = vunpack.c.l.b16 %v448
      %v469 = vunpack.c.h.b16 %v448
      %v470 = vunpack.c.l.b16 %v449
      %v471 = vunpack.c.h.b16 %v449
      %v472 = vunpack.c.l.b16 %v450
      %v473 = vunpack.c.h.b16 %v450
      %v474 = vunpack.c.l.b16 %v451
      %v475 = vunpack.c.h.b16 %v451
      %v476 = vpack.c.b16 %v460, %v460
      %v477 = vpack.c.b16 %v461, %v461
      %v478 = vpack.c.b16 %v462, %v462
      %v479 = vpack.c.b16 %v463, %v463
      %v480 = vpack.c.b16 %v464, %v464
      %v481 = vpack.c.b16 %v465, %v465
      %v482 = vpack.c.b16 %v466, %v466
      %v483 = vpack.c.b16 %v467, %v467
      %v484 = vpack.c.b16 %v468, %v468
      %v485 = vpack.c.b16 %v469, %v469
      %v486 = vpack.c.b16 %v470, %v470
      %v487 = vpack.c.b16 %v471, %v471
      %v488 = vpack.c.b16 %v472, %v472
      %v489 = vpack.c.b16 %v473, %v473
      %v490 = vpack.c.b16 %v474, %v474
      %v491 = vpack.c.b16 %v475, %v475
      %508 = vst [vmem:[%s210] sm:$0xf] %v476
      %509 = vst [vmem:[%s210 + $0x4] sm:$0xf] %v477
      %510 = vst [vmem:[%s210 + $0x8] sm:$0xf] %v478
      %511 = vst [vmem:[%s210 + $0xc] sm:$0xf] %v479
      %512 = vst [vmem:[%s210 + $0x10] sm:$0xf] %v480
      %513 = vst [vmem:[%s210 + $0x14] sm:$0xf] %v481
      %514 = vst [vmem:[%s210 + $0x18] sm:$0xf] %v482
      %515 = vst [vmem:[%s210 + $0x1c] sm:$0xf] %v483
      %516 = vst [vmem:[%s210 + $0x20] sm:$0xf] %v484
      %517 = vst [vmem:[%s210 + $0x24] sm:$0xf] %v485
      %518 = vst [vmem:[%s210 + $0x28] sm:$0xf] %v486
      %519 = vst [vmem:[%s210 + $0x2c] sm:$0xf] %v487
      %520 = vst [vmem:[%s210 + $0x30] sm:$0xf] %v488
      %521 = vst [vmem:[%s210 + $0x34] sm:$0xf] %v489
      %522 = vst [vmem:[%s210 + $0x38] sm:$0xf] %v490
      %523 = vst [vmem:[%s210 + $0x3c] sm:$0xf] %v491
      %v524 = vadd.f32 %v382, %v385
      %v525 = vadd.f32 %v524, %v390
      %v526 = vadd.f32 %v525, %v393
      %v527 = vadd.f32 %v526, %v398
      %v528 = vadd.f32 %v527, %v401
      %v529 = vadd.f32 %v528, %v406
      %v530 = vadd.f32 %v529, %v409
      %v531 = vadd.f32 %v530, %v414
      %v532 = vadd.f32 %v531, %v417
      %v533 = vadd.f32 %v532, %v422
      %v534 = vadd.f32 %v533, %v425
      %v535 = vadd.f32 %v534, %v430
      %v536 = vadd.f32 %v535, %v433
      %v537 = vadd.f32 %v536, %v438
      %v538 = vadd.f32 %v537, %v441
      %v539 = vrot.slane %v538, 4
      %v540 = vadd.f32 %v538, %v539
      %v541 = vrot.slane %v540, 2
      %v542 = vadd.f32 %v540, %v541
      %v543 = vrot.slane %v542, 1
      %v544 = vadd.f32 %v542, %v543
      %545 = vst [vmem:[%s214] sm:$0x1] %v544
      %v546 = vmul.f32 %v382, %v382
      %v547 = vmul.f32 %v385, %v385
      %v548 = vmul.f32 %v390, %v390
      %v549 = vmul.f32 %v393, %v393
      %v550 = vmul.f32 %v398, %v398
      %v551 = vmul.f32 %v401, %v401
      %v552 = vmul.f32 %v406, %v406
      %v553 = vmul.f32 %v409, %v409
      %v554 = vmul.f32 %v414, %v414
      %v555 = vmul.f32 %v417, %v417
      %v556 = vmul.f32 %v422, %v422
      %v557 = vmul.f32 %v425, %v425
      %v558 = vmul.f32 %v430, %v430
      %v559 = vmul.f32 %v433, %v433
      %v560 = vmul.f32 %v438, %v438
      %v561 = vmul.f32 %v441, %v441
      %v562 = vadd.f32 %v546, %v547
      %v563 = vadd.f32 %v562, %v548
      %v564 = vadd.f32 %v563, %v549
      %v565 = vadd.f32 %v564, %v550
      %v566 = vadd.f32 %v565, %v551
      %v567 = vadd.f32 %v566, %v552
      %v568 = vadd.f32 %v567, %v553
      %v569 = vadd.f32 %v568, %v554
      %v570 = vadd.f32 %v569, %v555
      %v571 = vadd.f32 %v570, %v556
      %v572 = vadd.f32 %v571, %v557
      %v573 = vadd.f32 %v572, %v558
      %v574 = vadd.f32 %v573, %v559
      %v575 = vadd.f32 %v574, %v560
      %v576 = vadd.f32 %v575, %v561
      %v577 = vrot.slane %v576, 4
      %v578 = vadd.f32 %v576, %v577
      %v579 = vrot.slane %v578, 2
      %v580 = vadd.f32 %v578, %v579
      %v581 = vrot.slane %v580, 1
      %v582 = vadd.f32 %v580, %v581
      %583 = vst [vmem:[%s217] sm:$0x1] %v582
      %s584 = smul.u32 16, %s16
      %p585 = scmp.lt.s32.totalorder %s584, 63
      %s586 = scalar_select %p585, %s584, 63
      %s587 = smul.addr %s586, 4
      %s588 = scalar_lea.vmem %s2, %s587
      %p589 = scmp.lt.s32.totalorder %s16, 3
      %s590 = scalar_select %p589, %s16, 3
      %s591 = scalar_lea.vmem %s3, %s590
      %p592 = scmp.lt.s32.totalorder %s16, 3
      %s593 = scalar_select %p592, %s16, 3
      %s594 = scalar_lea.vmem %s4, %s593
      // Predicated region
      $region29: #{conv5_block.6} parent=27 // pred_check
        %p595 = pneg %p81
      $region30: #{conv5_block.6} parent=27 // pred_check_branch
        %597 = sbr.rel (%p595) target = $region32
      $region31: #{conv5_block.6} parent=27 // pred_region
        %s598 = smul.u32 16, %s16
      $region32: #{conv5_block.6} parent=27 // pred_fallthru
        _
      // Predicated region
      $region33: #{conv5_block.6} parent=27 // pred_check
        %p599 = pneg %p107
      $region34: #{conv5_block.6} parent=27 // pred_check_branch
        %601 = sbr.rel (%p599) target = $region36
      $region35: #{conv5_block.6} parent=27 // pred_region
        _
      $region36: #{conv5_block.6} parent=27 // pred_fallthru
        _
      // Predicated region
      $region37: #{conv5_block.6} parent=27 // pred_check
        %p602 = pneg %p133
      $region38: #{conv5_block.6} parent=27 // pred_check_branch
        %604 = sbr.rel (%p602) target = $region40
      $region39: #{conv5_block.6} parent=27 // pred_region
        _
      $region40: #{conv5_block.6} parent=27 // pred_fallthru
        _
    $region28: #{conv5_block.6} parent=5 // pred_fallthru
      _
    %p605 = scmp.le.s32.totalorder 2, %s11
    // Predicated region
    $region41: #{conv5_block.6} parent=5 // pred_check
      %p606 = pneg %p605
    $region42: #{conv5_block.6} parent=5 // pred_check_branch
      %608 = sbr.rel (%p606) target = $region44
    $region43: #{conv5_block.6} parent=5 // pred_region
      %s609 = ssub.s32 %s11, 2
      // Predicated region
      $region45: #{conv5_block.6} parent=43 // pred_check
        %p610 = pneg %p87
      $region46: #{conv5_block.6} parent=43 // pred_check_branch
        %612 = sbr.rel (%p610) target = $region48
      $region47: #{conv5_block.6} parent=43 // pred_region
        %s613 = smul.u32 16, %s17
        %p614 = scmp.lt.s32.totalorder %s613, 63
        %s615 = scalar_select %p614, %s613, 63
        %s616 = smul.addr %s615, 4
        %s617 = scalar_lea.vmem %s2, %s616
      $region48: #{conv5_block.6} parent=43 // pred_fallthru
        _
      // Predicated region
      $region49: #{conv5_block.6} parent=43 // pred_check
        %p618 = pneg %p113
      $region50: #{conv5_block.6} parent=43 // pred_check_branch
        %620 = sbr.rel (%p618) target = $region52
      $region51: #{conv5_block.6} parent=43 // pred_region
        %p621 = scmp.lt.s32.totalorder %s17, 3
        %s622 = scalar_select %p621, %s17, 3
        %s623 = scalar_lea.vmem %s3, %s622
      $region52: #{conv5_block.6} parent=43 // pred_fallthru
        _
      // Predicated region
      $region53: #{conv5_block.6} parent=43 // pred_check
        %p624 = pneg %p139
      $region54: #{conv5_block.6} parent=43 // pred_check_branch
        %626 = sbr.rel (%p624) target = $region56
      $region55: #{conv5_block.6} parent=43 // pred_region
        %p627 = scmp.lt.s32.totalorder %s17, 3
        %s628 = scalar_select %p627, %s17, 3
        %s629 = scalar_lea.vmem %s4, %s628
      $region56: #{conv5_block.6} parent=43 // pred_fallthru
        _
    $region44: #{conv5_block.6} parent=5 // pred_fallthru
      _
  $region6: #{conv5_block.6} parent=0 // loop_footer
    %s15 = sadd.s32 1, %s11
  $region7: #{conv5_block.6} parent=0 // loop_footer_branch
    %10 = sbr.rel target = $region3
  $region8: #{conv5_block.6} parent=0 // loop_exit
    _

// kernel: conv5_block.8
$region0: #{conv5_block.8}
  #allocation0 [shape = 'u32[]', space=smem, size = 0x4, offset = 0x4, fixed_abs, tag = 'smem constant byte address 0x4 - core index']
  #allocation1 [shape = 'u32[144,128]{1,0:T(1,128)}', space=vmem, size = 0x12000, scoped, tag = 'internal scratch']
  %s0 = inlined_call_operand.vmem [shape: bf16[512,128], index: 0, kind: input, shape index: {}]
  %s1 = inlined_call_operand.vmem [shape: f32[1,128], index: 1, kind: input, shape index: {}]
  %s2 = inlined_call_operand.vmem [shape: f32[1,128], index: 2, kind: input, shape index: {}]
  %s3 = inlined_call_operand.vmem [shape: bf16[128,128], index: 3, kind: input, shape index: {}]
  %s4 = inlined_call_operand.vmem [shape: bf16[512,128], index: 4, kind: output, shape index: {0}]
  %s5 = inlined_call_operand.vmem [shape: f32[4,1,128], index: 5, kind: output, shape index: {1}]
  %s6 = inlined_call_operand.vmem [shape: f32[4,1,128], index: 6, kind: output, shape index: {2}]
  %7 = xla_tuple %s4, %s5, %s6
  %s8 = sld [smem:[#allocation0]]
  $region65: #{conv5_block.8} parent=0
    _
  %s10 = ssub.s32 1, %s8
  %s11 = scalar_select 0, %s10, %s8
  loop: start=0, step=1, limit=6
  $region2: #{conv5_block.8} parent=0 // loop_pre_header
    _
  $region3: #{conv5_block.8} parent=0 // loop_header
    %s13 = sphi 0, %s17
    %p14 = scmp.ge.s32.totalorder %s13, 6
    %s23 = sphi 0, %s25
    %s26 = sphi 0, %s23
    %s27 = sphi 0, %s26
    %s43 = sphi 0, %s27
    %s47 = sphi 0, %s47
    %s49 = sphi 0, %s47
    %s50 = sphi 0, %s49
    %s64 = sphi 0, %s50
    %s68 = sphi 0, %s68
    %s70 = sphi 0, %s68
    %s71 = sphi 0, %s70
    %s85 = sphi 0, %s71
    %s89 = sphi 0, %s89
    %s91 = sphi 0, %s89
    %s92 = sphi 0, %s91
    %s106 = sphi 0, %s92
    %s112 = sphi 0, %s114
    %s115 = sphi 0, %s112
    %s116 = sphi 0, %s115
    %s132 = sphi 0, %s116
    %s138 = sphi 0, %s140
    %s141 = sphi 0, %s138
    %s142 = sphi 0, %s141
    %s158 = sphi 0, %s142
    %s164 = sphi 0, %s166
    %s167 = sphi 0, %s164
    %s168 = sphi 0, %s167
    %s184 = sphi 0, %s168
  $region4: #{conv5_block.8} parent=0 // loop_header_branch
    %16 = sbr.rel (%p14) target = $region8
  $region5: #{conv5_block.8} parent=0 // loop_body
    %s18 = ssub.s32 %s13, 1
    %s19 = ssub.s32 %s13, 2
    %s20 = sadd.s32 %s13, 1
    %s21 = ssub.s32 %s13, %s20
    %p22 = scmp.eq.s32.totalorder %s21, 0
    %s24 = sadd.s32 %s23, 1
    %s25 = scalar_select %p22, %s23, %s24
    %p28 = pneg %p22
    %p29 = scmp.eq.s32.totalorder %s13, 3
    %p30 = por %p28, %p29
    %p31 = scmp.ne.s32.totalorder %s23, %s26
    %p32 = scmp.eq.s32.totalorder %s13, 0
    %p33 = por %p31, %p32
    %p34 = scmp.ne.s32.totalorder %s23, %s26
    %p35 = scmp.eq.s32.totalorder %s18, 3
    %p36 = por %p34, %p35
    %p37 = scmp.ne.s32.totalorder %s26, %s27
    %p38 = scmp.eq.s32.totalorder %s18, 0
    %p39 = por %p37, %p38
    %p40 = scmp.ne.s32.totalorder %s26, %s27
    %p41 = scmp.eq.s32.totalorder %s19, 3
    %p42 = por %p40, %p41
    %p44 = scmp.ne.s32.totalorder %s27, %s43
    %p45 = scmp.eq.s32.totalorder %s19, 0
    %p46 = por %p44, %p45
    %s48 = sadd.s32 %s47, 1
    %p51 = scmp.eq.s32.totalorder %s13, 3
    %p52 = scmp.ne.s32.totalorder %s47, %s49
    %p53 = scmp.eq.s32.totalorder %s13, 0
    %p54 = por %p52, %p53
    %p55 = scmp.ne.s32.totalorder %s47, %s49
    %p56 = scmp.eq.s32.totalorder %s18, 3
    %p57 = por %p55, %p56
    %p58 = scmp.ne.s32.totalorder %s49, %s50
    %p59 = scmp.eq.s32.totalorder %s18, 0
    %p60 = por %p58, %p59
    %p61 = scmp.ne.s32.totalorder %s49, %s50
    %p62 = scmp.eq.s32.totalorder %s19, 3
    %p63 = por %p61, %p62
    %p65 = scmp.ne.s32.totalorder %s50, %s64
    %p66 = scmp.eq.s32.totalorder %s19, 0
    %p67 = por %p65, %p66
    %s69 = sadd.s32 %s68, 1
    %p72 = scmp.eq.s32.totalorder %s13, 3
    %p73 = scmp.ne.s32.totalorder %s68, %s70
    %p74 = scmp.eq.s32.totalorder %s13, 0
    %p75 = por %p73, %p74
    %p76 = scmp.ne.s32.totalorder %s68, %s70
    %p77 = scmp.eq.s32.totalorder %s18, 3
    %p78 = por %p76, %p77
    %p79 = scmp.ne.s32.totalorder %s70, %s71
    %p80 = scmp.eq.s32.totalorder %s18, 0
    %p81 = por %p79, %p80
    %p82 = scmp.ne.s32.totalorder %s70, %s71
    %p83 = scmp.eq.s32.totalorder %s19, 3
    %p84 = por %p82, %p83
    %p86 = scmp.ne.s32.totalorder %s71, %s85
    %p87 = scmp.eq.s32.totalorder %s19, 0
    %p88 = por %p86, %p87
    %s90 = sadd.s32 %s89, 1
    %p93 = scmp.eq.s32.totalorder %s13, 3
    %p94 = scmp.ne.s32.totalorder %s89, %s91
    %p95 = scmp.eq.s32.totalorder %s13, 0
    %p96 = por %p94, %p95
    %p97 = scmp.ne.s32.totalorder %s89, %s91
    %p98 = scmp.eq.s32.totalorder %s18, 3
    %p99 = por %p97, %p98
    %p100 = scmp.ne.s32.totalorder %s91, %s92
    %p101 = scmp.eq.s32.totalorder %s18, 0
    %p102 = por %p100, %p101
    %p103 = scmp.ne.s32.totalorder %s91, %s92
    %p104 = scmp.eq.s32.totalorder %s19, 3
    %p105 = por %p103, %p104
    %p107 = scmp.ne.s32.totalorder %s92, %s106
    %p108 = scmp.eq.s32.totalorder %s19, 0
    %p109 = por %p107, %p108
    %s110 = ssub.s32 %s13, %s20
    %p111 = scmp.eq.s32.totalorder %s110, 0
    %s113 = sadd.s32 %s112, 1
    %s114 = scalar_select %p111, %s112, %s113
    %p117 = pneg %p111
    %p118 = scmp.eq.s32.totalorder %s13, 3
    %p119 = por %p117, %p118
    %p120 = scmp.ne.s32.totalorder %s112, %s115
    %p121 = scmp.eq.s32.totalorder %s13, 0
    %p122 = por %p120, %p121
    %p123 = scmp.ne.s32.totalorder %s112, %s115
    %p124 = scmp.eq.s32.totalorder %s18, 3
    %p125 = por %p123, %p124
    %p126 = scmp.ne.s32.totalorder %s115, %s116
    %p127 = scmp.eq.s32.totalorder %s18, 0
    %p128 = por %p126, %p127
    %p129 = scmp.ne.s32.totalorder %s115, %s116
    %p130 = scmp.eq.s32.totalorder %s19, 3
    %p131 = por %p129, %p130
    %p133 = scmp.ne.s32.totalorder %s116, %s132
    %p134 = scmp.eq.s32.totalorder %s19, 0
    %p135 = por %p133, %p134
    %s136 = ssub.s32 %s13, %s20
    %p137 = scmp.eq.s32.totalorder %s136, 0
    %s139 = sadd.s32 %s138, 1
    %s140 = scalar_select %p137, %s138, %s139
    %p143 = pneg %p137
    %p144 = scmp.eq.s32.totalorder %s13, 3
    %p145 = por %p143, %p144
    %p146 = scmp.ne.s32.totalorder %s138, %s141
    %p147 = scmp.eq.s32.totalorder %s13, 0
    %p148 = por %p146, %p147
    %p149 = scmp.ne.s32.totalorder %s138, %s141
    %p150 = scmp.eq.s32.totalorder %s18, 3
    %p151 = por %p149, %p150
    %p152 = scmp.ne.s32.totalorder %s141, %s142
    %p153 = scmp.eq.s32.totalorder %s18, 0
    %p154 = por %p152, %p153
    %p155 = scmp.ne.s32.totalorder %s141, %s142
    %p156 = scmp.eq.s32.totalorder %s19, 3
    %p157 = por %p155, %p156
    %p159 = scmp.ne.s32.totalorder %s142, %s158
    %p160 = scmp.eq.s32.totalorder %s19, 0
    %p161 = por %p159, %p160
    %s162 = ssub.s32 %s13, %s20
    %p163 = scmp.eq.s32.totalorder %s162, 0
    %s165 = sadd.s32 %s164, 1
    %s166 = scalar_select %p163, %s164, %s165
    %p169 = pneg %p163
    %p170 = scmp.eq.s32.totalorder %s13, 3
    %p171 = por %p169, %p170
    %p172 = scmp.ne.s32.totalorder %s164, %s167
    %p173 = scmp.eq.s32.totalorder %s13, 0
    %p174 = por %p172, %p173
    %p175 = scmp.ne.s32.totalorder %s164, %s167
    %p176 = scmp.eq.s32.totalorder %s18, 3
    %p177 = por %p175, %p176
    %p178 = scmp.ne.s32.totalorder %s167, %s168
    %p179 = scmp.eq.s32.totalorder %s18, 0
    %p180 = por %p178, %p179
    %p181 = scmp.ne.s32.totalorder %s167, %s168
    %p182 = scmp.eq.s32.totalorder %s19, 3
    %p183 = por %p181, %p182
    %p185 = scmp.ne.s32.totalorder %s168, %s184
    %p186 = scmp.eq.s32.totalorder %s19, 0
    %p187 = por %p185, %p186
    %p188 = scmp.le.s32.totalorder 1, %s13
    %p189 = scmp.lt.s32.totalorder %s13, 5
    %p190 = pnand %p188, %p189
    %p191 = pneg %p190
    // Predicated region
    $region9: #{conv5_block.8} parent=5 // pred_check
      _
    $region10: #{conv5_block.8} parent=5 // pred_check_branch
      %193 = sbr.rel (%p190) target = $region12
    $region11: #{conv5_block.8} parent=5 // pred_region
      %s194 = ssub.s32 %s13, 1
      // Predicated region
      $region13: #{conv5_block.8} parent=11 // pred_check
        %p195 = pneg %p60
      $region14: #{conv5_block.8} parent=11 // pred_check_branch
        %197 = sbr.rel (%p195) target = $region16
      $region15: #{conv5_block.8} parent=11 // pred_region
        _
      $region16: #{conv5_block.8} parent=11 // pred_fallthru
        _
      // Predicated region
      $region17: #{conv5_block.8} parent=11 // pred_check
        %p198 = pneg %p81
      $region18: #{conv5_block.8} parent=11 // pred_check_branch
        %200 = sbr.rel (%p198) target = $region20
      $region19: #{conv5_block.8} parent=11 // pred_region
        _
      $region20: #{conv5_block.8} parent=11 // pred_fallthru
        _
      // Predicated region
      $region21: #{conv5_block.8} parent=11 // pred_check
        %p201 = pneg %p102
      $region22: #{conv5_block.8} parent=11 // pred_check_branch
        %203 = sbr.rel (%p201) target = $region24
      $region23: #{conv5_block.8} parent=11 // pred_region
        _
      $region24: #{conv5_block.8} parent=11 // pred_fallthru
        _
    $region12: #{conv5_block.8} parent=5 // pred_fallthru
      _
    %p204 = scmp.lt.s32.totalorder %s13, 4
    // Predicated region
    $region25: #{conv5_block.8} parent=5 // pred_check
      %p205 = pneg %p204
    $region26: #{conv5_block.8} parent=5 // pred_check_branch
      %207 = sbr.rel (%p205) target = $region28
    $region27: #{conv5_block.8} parent=5 // pred_region
      // Predicated region
      $region29: #{conv5_block.8} parent=27 // pred_check
        %p208 = pneg %p33
      $region30: #{conv5_block.8} parent=27 // pred_check_branch
        %210 = sbr.rel (%p208) target = $region32
      $region31: #{conv5_block.8} parent=27 // pred_region
        %s211 = smul.u32 16, %s13
        %p212 = scmp.lt.s32.totalorder %s211, 63
        %s213 = scalar_select %p212, %s211, 63
        %s214 = smul.addr %s213, 4
        %s215 = scalar_lea.vmem %s0, %s214
        %s216 = smul.u32 16, %s13
      $region32: #{conv5_block.8} parent=27 // pred_fallthru
        _
    $region28: #{conv5_block.8} parent=5 // pred_fallthru
      _
    %p217 = scmp.le.s32.totalorder 1, %s13
    %p218 = scmp.lt.s32.totalorder %s13, 5
    %p219 = pnand %p217, %p218
    %p220 = pneg %p219
    // Predicated region
    $region33: #{conv5_block.8} parent=5 // pred_check
      _
    $region34: #{conv5_block.8} parent=5 // pred_check_branch
      %222 = sbr.rel (%p219) target = $region36
    $region35: #{conv5_block.8} parent=5 // pred_region
      %s223 = ssub.s32 %s13, 1
      %s224 = smul.u32 16, %s18
      %p225 = scmp.lt.s32.totalorder %s224, 63
      %s226 = scalar_select %p225, %s224, 63
      %s227 = smul.addr %s226, 4
      %s228 = scalar_lea.vmem %s0, %s227
      %p229 = pneg %p39
      %p230 = pneg %p36
      %p231 = pneg %p60
      %p232 = pneg %p57
      %p233 = pneg %p81
      %p234 = pneg %p78
      %p235 = pneg %p102
      %p236 = pneg %p99
      %p237 = pneg %p128
      %p238 = pneg %p125
      %s239 = smul.u32 16, %s18
      %p240 = scmp.lt.s32.totalorder %s239, 63
      %s241 = scalar_select %p240, %s239, 63
      %s242 = smul.addr %s241, 4
      %s243 = scalar_lea.vmem %s4, %s242
      %p244 = pneg %p154
      %p245 = pneg %p151
      %p246 = scmp.lt.s32.totalorder %s18, 3
      %s247 = scalar_select %p246, %s18, 3
      %s248 = scalar_lea.vmem %s5, %s247
      %p249 = pneg %p180
      %p250 = pneg %p177
      %p251 = scmp.lt.s32.totalorder %s18, 3
      %s252 = scalar_select %p251, %s18, 3
      %s253 = scalar_lea.vmem %s6, %s252
      %s254 = smul.u32 16, %s18
      %p255 = scmp.lt.s32.totalorder %s254, 63
      %s256 = scalar_select %p255, %s254, 63
      %s257 = smul.addr %s256, 4
      %s258 = scalar_lea.vmem %s0, %s257
      %s259 = smul.u32 16, %s18
      %s260 = smul.u32 16, %s18
      %p261 = scmp.lt.s32.totalorder %s260, 63
      %s262 = scalar_select %p261, %s260, 63
      %s263 = smul.addr %s262, 4
      %s264 = scalar_lea.vmem %s4, %s263
      %s265 = smul.u32 16, %s18
      %p266 = scmp.lt.s32.totalorder %s18, 3
      %s267 = scalar_select %p266, %s18, 3
      %s268 = scalar_lea.vmem %s5, %s267
      %p269 = scmp.lt.s32.totalorder %s18, 3
      %s270 = scalar_select %p269, %s18, 3
      %s271 = scalar_lea.vmem %s6, %s270
      %v273 = vld [vmem:[%s258] sm:$0xf]
      %v274 = vld [vmem:[%s258 + $0x4] sm:$0xf]
      %v275 = vld [vmem:[%s258 + $0x8] sm:$0xf]
      %v276 = vld [vmem:[%s258 + $0xc] sm:$0xf]
      %v277 = vld [vmem:[%s258 + $0x10] sm:$0xf]
      %v278 = vld [vmem:[%s258 + $0x14] sm:$0xf]
      %v279 = vld [vmem:[%s258 + $0x18] sm:$0xf]
      %v280 = vld [vmem:[%s258 + $0x1c] sm:$0xf]
      %v281 = vld [vmem:[%s258 + $0x20] sm:$0xf]
      %v282 = vld [vmem:[%s258 + $0x24] sm:$0xf]
      %v283 = vld [vmem:[%s258 + $0x28] sm:$0xf]
      %v284 = vld [vmem:[%s258 + $0x2c] sm:$0xf]
      %v285 = vld [vmem:[%s258 + $0x30] sm:$0xf]
      %v286 = vld [vmem:[%s258 + $0x34] sm:$0xf]
      %v287 = vld [vmem:[%s258 + $0x38] sm:$0xf]
      %v288 = vld [vmem:[%s258 + $0x3c] sm:$0xf]
      %v289 = vunpack.c.l.bf16 %v273
      %v290 = vunpack.c.l.bf16 %v274
      %v291 = vunpack.c.l.bf16 %v275
      %v292 = vunpack.c.l.bf16 %v276
      %v293 = vunpack.c.l.bf16 %v277
      %v294 = vunpack.c.l.bf16 %v278
      %v295 = vunpack.c.l.bf16 %v279
      %v296 = vunpack.c.l.bf16 %v280
      %v297 = vunpack.c.l.bf16 %v281
      %v298 = vunpack.c.l.bf16 %v282
      %v299 = vunpack.c.l.bf16 %v283
      %v300 = vunpack.c.l.bf16 %v284
      %v301 = vunpack.c.l.bf16 %v285
      %v302 = vunpack.c.l.bf16 %v286
      %v303 = vunpack.c.l.bf16 %v287
      %v304 = vunpack.c.l.bf16 %v288
      %v305 = vld [vmem:[%s1] sm:$0x1]
      %v307 = vlaneseq
      %v308 = vshrl.u32 %v307, 7
      %v309 = vsub.s32 0, %v308
      %v310 = vrot.slane %v305, %v309
      %v312 = vmul.f32 %v289, %v310
      %v313 = vmul.f32 %v290, %v310
      %v314 = vmul.f32 %v291, %v310
      %v315 = vmul.f32 %v292, %v310
      %v316 = vmul.f32 %v293, %v310
      %v317 = vmul.f32 %v294, %v310
      %v318 = vmul.f32 %v295, %v310
      %v319 = vmul.f32 %v296, %v310
      %v320 = vmul.f32 %v297, %v310
      %v321 = vmul.f32 %v298, %v310
      %v322 = vmul.f32 %v299, %v310
      %v323 = vmul.f32 %v300, %v310
      %v324 = vmul.f32 %v301, %v310
      %v325 = vmul.f32 %v302, %v310
      %v326 = vmul.f32 %v303, %v310
      %v327 = vmul.f32 %v304, %v310
      %v328 = vld [vmem:[%s2] sm:$0x1]
      %v330 = vlaneseq
      %v331 = vshrl.u32 %v330, 7
      %v332 = vsub.s32 0, %v331
      %v333 = vrot.slane %v328, %v332
      %v335 = vadd.f32 %v312, %v333
      %v336 = vadd.f32 %v313, %v333
      %v337 = vadd.f32 %v314, %v333
      %v338 = vadd.f32 %v315, %v333
      %v339 = vadd.f32 %v316, %v333
      %v340 = vadd.f32 %v317, %v333
      %v341 = vadd.f32 %v318, %v333
      %v342 = vadd.f32 %v319, %v333
      %v343 = vadd.f32 %v320, %v333
      %v344 = vadd.f32 %v321, %v333
      %v345 = vadd.f32 %v322, %v333
      %v346 = vadd.f32 %v323, %v333
      %v347 = vadd.f32 %v324, %v333
      %v348 = vadd.f32 %v325, %v333
      %v349 = vadd.f32 %v326, %v333
      %v350 = vadd.f32 %v327, %v333
      %vm351 = vcmp.gt.f32.partialorder %v335, 0.0
      %vm352 = vcmp.gt.f32.partialorder %v336, 0.0
      %vm353 = vcmp.gt.f32.partialorder %v337, 0.0
      %vm354 = vcmp.gt.f32.partialorder %v338, 0.0
      %vm355 = vcmp.gt.f32.partialorder %v339, 0.0
      %vm356 = vcmp.gt.f32.partialorder %v340, 0.0
      %vm357 = vcmp.gt.f32.partialorder %v341, 0.0
      %vm358 = vcmp.gt.f32.partialorder %v342, 0.0
      %vm359 = vcmp.gt.f32.partialorder %v343, 0.0
      %vm360 = vcmp.gt.f32.partialorder %v344, 0.0
      %vm361 = vcmp.gt.f32.partialorder %v345, 0.0
      %vm362 = vcmp.gt.f32.partialorder %v346, 0.0
      %vm363 = vcmp.gt.f32.partialorder %v347, 0.0
      %vm364 = vcmp.gt.f32.partialorder %v348, 0.0
      %vm365 = vcmp.gt.f32.partialorder %v349, 0.0
      %vm366 = vcmp.gt.f32.partialorder %v350, 0.0
      %v367 = vmul.f32 %v335, 0.1
      %v368 = vmul.f32 %v336, 0.1
      %v369 = vmul.f32 %v337, 0.1
      %v370 = vmul.f32 %v338, 0.1
      %v371 = vmul.f32 %v339, 0.1
      %v372 = vmul.f32 %v340, 0.1
      %v373 = vmul.f32 %v341, 0.1
      %v374 = vmul.f32 %v342, 0.1
      %v375 = vmul.f32 %v343, 0.1
      %v376 = vmul.f32 %v344, 0.1
      %v377 = vmul.f32 %v345, 0.1
      %v378 = vmul.f32 %v346, 0.1
      %v379 = vmul.f32 %v347, 0.1
      %v380 = vmul.f32 %v348, 0.1
      %v381 = vmul.f32 %v349, 0.1
      %v382 = vmul.f32 %v350, 0.1
      %v383 = vsel %vm351, %v335, %v367
      %v384 = vsel %vm352, %v336, %v368
      %v385 = vsel %vm353, %v337, %v369
      %v386 = vsel %vm354, %v338, %v370
      %v387 = vsel %vm355, %v339, %v371
      %v388 = vsel %vm356, %v340, %v372
      %v389 = vsel %vm357, %v341, %v373
      %v390 = vsel %vm358, %v342, %v374
      %v391 = vsel %vm359, %v343, %v375
      %v392 = vsel %vm360, %v344, %v376
      %v393 = vsel %vm361, %v345, %v377
      %v394 = vsel %vm362, %v346, %v378
      %v395 = vsel %vm363, %v347, %v379
      %v396 = vsel %vm364, %v348, %v380
      %v397 = vsel %vm365, %v349, %v381
      %v398 = vsel %vm366, %v350, %v382
      %v399 = vpack.c.bf16 %v384, %v383
      %v400 = vpack.c.bf16 %v386, %v385
      %v401 = vpack.c.bf16 %v388, %v387
      %v402 = vpack.c.bf16 %v390, %v389
      %v403 = vpack.c.bf16 %v392, %v391
      %v404 = vpack.c.bf16 %v394, %v393
      %v405 = vpack.c.bf16 %v396, %v395
      %v406 = vpack.c.bf16 %v398, %v397
      %v407 = vld [vmem:[%s3] sm:$0xf]
      %v408 = vld [vmem:[%s3 + $0x4] sm:$0xf]
      %v409 = vld [vmem:[%s3 + $0x8] sm:$0xf]
      %v410 = vld [vmem:[%s3 + $0xc] sm:$0xf]
      %v411 = vld [vmem:[%s3 + $0x10] sm:$0xf]
      %v412 = vld [vmem:[%s3 + $0x14] sm:$0xf]
      %v413 = vld [vmem:[%s3 + $0x18] sm:$0xf]
      %v414 = vld [vmem:[%s3 + $0x1c] sm:$0xf]
      %v415 = vld [vmem:[%s3 + $0x20] sm:$0xf]
      %v416 = vld [vmem:[%s3 + $0x24] sm:$0xf]
      %v417 = vld [vmem:[%s3 + $0x28] sm:$0xf]
      %v418 = vld [vmem:[%s3 + $0x2c] sm:$0xf]
      %v419 = vld [vmem:[%s3 + $0x30] sm:$0xf]
      %v420 = vld [vmem:[%s3 + $0x34] sm:$0xf]
      %v421 = vld [vmem:[%s3 + $0x38] sm:$0xf]
      %v422 = vld [vmem:[%s3 + $0x3c] sm:$0xf]
      %v439 = vunpack.c.l.b16 %v407
      %v440 = vunpack.c.l.b16 %v408
      %v441 = vunpack.c.l.b16 %v409
      %v442 = vunpack.c.l.b16 %v410
      %v443 = vunpack.c.l.b16 %v411
      %v444 = vunpack.c.l.b16 %v412
      %v445 = vunpack.c.l.b16 %v413
      %v446 = vunpack.c.l.b16 %v414
      %v447 = vunpack.c.l.b16 %v415
      %v448 = vunpack.c.l.b16 %v416
      %v449 = vunpack.c.l.b16 %v417
      %v450 = vunpack.c.l.b16 %v418
      %v451 = vunpack.c.l.b16 %v419
      %v452 = vunpack.c.l.b16 %v420
      %v453 = vunpack.c.l.b16 %v421
      %v454 = vunpack.c.l.b16 %v422
      %v455 = vpack.c.b16 %v440, %v439
      %v456 = vpack.c.b16 %v442, %v441
      %v457 = vpack.c.b16 %v444, %v443
      %v458 = vpack.c.b16 %v446, %v445
      %v459 = vpack.c.b16 %v448, %v447
      %v460 = vpack.c.b16 %v450, %v449
      %v461 = vpack.c.b16 %v452, %v451
      %v462 = vpack.c.b16 %v454, %v453
      %471 = vmatprep.subr.bf16.mxu0 0
      %472 = vmatpush1.bf16.msra.mxu0 %v462
      %473 = vmatprep.subr.bf16.mxu0 0
      %474 = vmatpush1.bf16.msra.mxu0 %v461
      %475 = vmatprep.subr.bf16.mxu0 0
      %476 = vmatpush1.bf16.msra.mxu0 %v460
      %477 = vmatprep.subr.bf16.mxu0 0
      %478 = vmatpush1.bf16.msra.mxu0 %v459
      %479 = vmatprep.subr.bf16.mxu0 0
      %480 = vmatpush1.bf16.msra.mxu0 %v458
      %481 = vmatprep.subr.bf16.mxu0 0
      %482 = vmatpush1.bf16.msra.mxu0 %v457
      %483 = vmatprep.subr.bf16.mxu0 0
      %484 = vmatpush1.bf16.msra.mxu0 %v456
      %485 = vmatprep.subr.bf16.mxu0 0
      %486 = vmatpush1.bf16.msra.mxu0 %v455
      %487 = vmatprep.subr.bf16.mxu0 0
      %488 = vmatpush2.bf16.msra.mxu0 0
      %489 = vmatprep.subr.bf16.mxu0 0
      %490 = vmatpush2.bf16.msra.mxu0 0
      %491 = vmatprep.subr.bf16.mxu0 0
      %492 = vmatpush2.bf16.msra.mxu0 0
      %493 = vmatprep.subr.bf16.mxu0 0
      %494 = vmatpush2.bf16.msra.mxu0 0
      %495 = vmatprep.subr.bf16.mxu0 0
      %496 = vmatpush2.bf16.msra.mxu0 0
      %497 = vmatprep.subr.bf16.mxu0 0
      %498 = vmatpush2.bf16.msra.mxu0 0
      %499 = vmatprep.subr.bf16.mxu0 0
      %500 = vmatpush2.bf16.msra.mxu0 0
      %501 = vmatprep.subr.bf16.mxu0 0
      %502 = vmatpush2.bf16.msra.mxu0 0
      %503 = vmatprep.mubr.bf16.mxu0 0
      %504 = vmatmul.mubr.bf16.gmra.mxu0 %v399
      %v505 = vpop.f32.mrf.mxu0
      %v506 = vadd.f32 0.0, %v505
      %v507 = vpop.f32.mrf.mxu0
      %v508 = vpop.f32.mrf.mxu0
      %v509 = vadd.f32 0.0, %v508
      %v510 = vpop.f32.mrf.mxu0
      %511 = vmatprep.mubr.bf16.mxu0 0
      %512 = vmatmul.mubr.bf16.gmra.mxu0 %v400
      %v513 = vpop.f32.mrf.mxu0
      %v514 = vadd.f32 0.0, %v513
      %v515 = vpop.f32.mrf.mxu0
      %v516 = vpop.f32.mrf.mxu0
      %v517 = vadd.f32 0.0, %v516
      %v518 = vpop.f32.mrf.mxu0
      %519 = vmatprep.mubr.bf16.mxu0 0
      %520 = vmatmul.mubr.bf16.gmra.mxu0 %v401
      %v521 = vpop.f32.mrf.mxu0
      %v522 = vadd.f32 0.0, %v521
      %v523 = vpop.f32.mrf.mxu0
      %v524 = vpop.f32.mrf.mxu0
      %v525 = vadd.f32 0.0, %v524
      %v526 = vpop.f32.mrf.mxu0
      %527 = vmatprep.mubr.bf16.mxu0 0
      %528 = vmatmul.mubr.bf16.gmra.mxu0 %v402
      %v529 = vpop.f32.mrf.mxu0
      %v530 = vadd.f32 0.0, %v529
      %v531 = vpop.f32.mrf.mxu0
      %v532 = vpop.f32.mrf.mxu0
      %v533 = vadd.f32 0.0, %v532
      %v534 = vpop.f32.mrf.mxu0
      %535 = vmatprep.mubr.bf16.mxu0 0
      %536 = vmatmul.mubr.bf16.gmra.mxu0 %v403
      %v537 = vpop.f32.mrf.mxu0
      %v538 = vadd.f32 0.0, %v537
      %v539 = vpop.f32.mrf.mxu0
      %v540 = vpop.f32.mrf.mxu0
      %v541 = vadd.f32 0.0, %v540
      %v542 = vpop.f32.mrf.mxu0
      %543 = vmatprep.mubr.bf16.mxu0 0
      %544 = vmatmul.mubr.bf16.gmra.mxu0 %v404
      %v545 = vpop.f32.mrf.mxu0
      %v546 = vadd.f32 0.0, %v545
      %v547 = vpop.f32.mrf.mxu0
      %v548 = vpop.f32.mrf.mxu0
      %v549 = vadd.f32 0.0, %v548
      %v550 = vpop.f32.mrf.mxu0
      %551 = vmatprep.mubr.bf16.mxu0 0
      %552 = vmatmul.mubr.bf16.gmra.mxu0 %v405
      %v553 = vpop.f32.mrf.mxu0
      %v554 = vadd.f32 0.0, %v553
      %v555 = vpop.f32.mrf.mxu0
      %v556 = vpop.f32.mrf.mxu0
      %v557 = vadd.f32 0.0, %v556
      %v558 = vpop.f32.mrf.mxu0
      %559 = vmatprep.mubr.bf16.mxu0 0
      %560 = vmatmul.mubr.bf16.gmra.mxu0 %v406
      %v561 = vpop.f32.mrf.mxu0
      %v562 = vadd.f32 0.0, %v561
      %v563 = vpop.f32.mrf.mxu0
      %v564 = vpop.f32.mrf.mxu0
      %v565 = vadd.f32 0.0, %v564
      %v566 = vpop.f32.mrf.mxu0
      %567 = vdwg.mxu0
      %v568 = vpack.c.bf16 %v509, %v506
      %v569 = vpack.c.bf16 %v517, %v514
      %v570 = vpack.c.bf16 %v525, %v522
      %v571 = vpack.c.bf16 %v533, %v530
      %v572 = vpack.c.bf16 %v541, %v538
      %v573 = vpack.c.bf16 %v549, %v546
      %v574 = vpack.c.bf16 %v557, %v554
      %v575 = vpack.c.bf16 %v565, %v562
      %v584 = vunpack.c.l.b16 %v568
      %v585 = vunpack.c.h.b16 %v568
      %v586 = vunpack.c.l.b16 %v569
      %v587 = vunpack.c.h.b16 %v569
      %v588 = vunpack.c.l.b16 %v570
      %v589 = vunpack.c.h.b16 %v570
      %v590 = vunpack.c.l.b16 %v571
      %v591 = vunpack.c.h.b16 %v571
      %v592 = vunpack.c.l.b16 %v572
      %v593 = vunpack.c.h.b16 %v572
      %v594 = vunpack.c.l.b16 %v573
      %v595 = vunpack.c.h.b16 %v573
      %v596 = vunpack.c.l.b16 %v574
      %v597 = vunpack.c.h.b16 %v574
      %v598 = vunpack.c.l.b16 %v575
      %v599 = vunpack.c.h.b16 %v575
      %v600 = vpack.c.b16 %v584, %v584
      %v601 = vpack.c.b16 %v585, %v585
      %v602 = vpack.c.b16 %v586, %v586
      %v603 = vpack.c.b16 %v587, %v587
      %v604 = vpack.c.b16 %v588, %v588
      %v605 = vpack.c.b16 %v589, %v589
      %v606 = vpack.c.b16 %v590, %v590
      %v607 = vpack.c.b16 %v591, %v591
      %v608 = vpack.c.b16 %v592, %v592
      %v609 = vpack.c.b16 %v593, %v593
      %v610 = vpack.c.b16 %v594, %v594
      %v611 = vpack.c.b16 %v595, %v595
      %v612 = vpack.c.b16 %v596, %v596
      %v613 = vpack.c.b16 %v597, %v597
      %v614 = vpack.c.b16 %v598, %v598
      %v615 = vpack.c.b16 %v599, %v599
      %632 = vst [vmem:[%s264] sm:$0xf] %v600
      %633 = vst [vmem:[%s264 + $0x4] sm:$0xf] %v601
      %634 = vst [vmem:[%s264 + $0x8] sm:$0xf] %v602
      %635 = vst [vmem:[%s264 + $0xc] sm:$0xf] %v603
      %636 = vst [vmem:[%s264 + $0x10] sm:$0xf] %v604
      %637 = vst [vmem:[%s264 + $0x14] sm:$0xf] %v605
      %638 = vst [vmem:[%s264 + $0x18] sm:$0xf] %v606
      %639 = vst [vmem:[%s264 + $0x1c] sm:$0xf] %v607
      %640 = vst [vmem:[%s264 + $0x20] sm:$0xf] %v608
      %641 = vst [vmem:[%s264 + $0x24] sm:$0xf] %v609
      %642 = vst [vmem:[%s264 + $0x28] sm:$0xf] %v610
      %643 = vst [vmem:[%s264 + $0x2c] sm:$0xf] %v611
      %644 = vst [vmem:[%s264 + $0x30] sm:$0xf] %v612
      %645 = vst [vmem:[%s264 + $0x34] sm:$0xf] %v613
      %646 = vst [vmem:[%s264 + $0x38] sm:$0xf] %v614
      %647 = vst [vmem:[%s264 + $0x3c] sm:$0xf] %v615
      %v648 = vadd.f32 %v506, %v509
      %v649 = vadd.f32 %v648, %v514
      %v650 = vadd.f32 %v649, %v517
      %v651 = vadd.f32 %v650, %v522
      %v652 = vadd.f32 %v651, %v525
      %v653 = vadd.f32 %v652, %v530
      %v654 = vadd.f32 %v653, %v533
      %v655 = vadd.f32 %v654, %v538
      %v656 = vadd.f32 %v655, %v541
      %v657 = vadd.f32 %v656, %v546
      %v658 = vadd.f32 %v657, %v549
      %v659 = vadd.f32 %v658, %v554
      %v660 = vadd.f32 %v659, %v557
      %v661 = vadd.f32 %v660, %v562
      %v662 = vadd.f32 %v661, %v565
      %v663 = vrot.slane %v662, 4
      %v664 = vadd.f32 %v662, %v663
      %v665 = vrot.slane %v664, 2
      %v666 = vadd.f32 %v664, %v665
      %v667 = vrot.slane %v666, 1
      %v668 = vadd.f32 %v666, %v667
      %669 = vst [vmem:[%s268] sm:$0x1] %v668
      %v670 = vmul.f32 %v506, %v506
      %v671 = vmul.f32 %v509, %v509
      %v672 = vmul.f32 %v514, %v514
      %v673 = vmul.f32 %v517, %v517
      %v674 = vmul.f32 %v522, %v522
      %v675 = vmul.f32 %v525, %v525
      %v676 = vmul.f32 %v530, %v530
      %v677 = vmul.f32 %v533, %v533
      %v678 = vmul.f32 %v538, %v538
      %v679 = vmul.f32 %v541, %v541
      %v680 = vmul.f32 %v546, %v546
      %v681 = vmul.f32 %v549, %v549
      %v682 = vmul.f32 %v554, %v554
      %v683 = vmul.f32 %v557, %v557
      %v684 = vmul.f32 %v562, %v562
      %v685 = vmul.f32 %v565, %v565
      %v686 = vadd.f32 %v670, %v671
      %v687 = vadd.f32 %v686, %v672
      %v688 = vadd.f32 %v687, %v673
      %v689 = vadd.f32 %v688, %v674
      %v690 = vadd.f32 %v689, %v675
      %v691 = vadd.f32 %v690, %v676
      %v692 = vadd.f32 %v691, %v677
      %v693 = vadd.f32 %v692, %v678
      %v694 = vadd.f32 %v693, %v679
      %v695 = vadd.f32 %v694, %v680
      %v696 = vadd.f32 %v695, %v681
      %v697 = vadd.f32 %v696, %v682
      %v698 = vadd.f32 %v697, %v683
      %v699 = vadd.f32 %v698, %v684
      %v700 = vadd.f32 %v699, %v685
      %v701 = vrot.slane %v700, 4
      %v702 = vadd.f32 %v700, %v701
      %v703 = vrot.slane %v702, 2
      %v704 = vadd.f32 %v702, %v703
      %v705 = vrot.slane %v704, 1
      %v706 = vadd.f32 %v704, %v705
      %707 = vst [vmem:[%s271] sm:$0x1] %v706
      %s708 = smul.u32 16, %s18
      %p709 = scmp.lt.s32.totalorder %s708, 63
      %s710 = scalar_select %p709, %s708, 63
      %s711 = smul.addr %s710, 4
      %s712 = scalar_lea.vmem %s4, %s711
      %p713 = scmp.lt.s32.totalorder %s18, 3
      %s714 = scalar_select %p713, %s18, 3
      %s715 = scalar_lea.vmem %s5, %s714
      %p716 = scmp.lt.s32.totalorder %s18, 3
      %s717 = scalar_select %p716, %s18, 3
      %s718 = scalar_lea.vmem %s6, %s717
      // Predicated region
      $region37: #{conv5_block.8} parent=35 // pred_check
        %p719 = pneg %p125
      $region38: #{conv5_block.8} parent=35 // pred_check_branch
        %721 = sbr.rel (%p719) target = $region40
      $region39: #{conv5_block.8} parent=35 // pred_region
        %s722 = smul.u32 16, %s18
      $region40: #{conv5_block.8} parent=35 // pred_fallthru
        _
      // Predicated region
      $region41: #{conv5_block.8} parent=35 // pred_check
        %p723 = pneg %p151
      $region42: #{conv5_block.8} parent=35 // pred_check_branch
        %725 = sbr.rel (%p723) target = $region44
      $region43: #{conv5_block.8} parent=35 // pred_region
        _
      $region44: #{conv5_block.8} parent=35 // pred_fallthru
        _
      // Predicated region
      $region45: #{conv5_block.8} parent=35 // pred_check
        %p726 = pneg %p177
      $region46: #{conv5_block.8} parent=35 // pred_check_branch
        %728 = sbr.rel (%p726) target = $region48
      $region47: #{conv5_block.8} parent=35 // pred_region
        _
      $region48: #{conv5_block.8} parent=35 // pred_fallthru
        _
    $region36: #{conv5_block.8} parent=5 // pred_fallthru
      _
    %p729 = scmp.le.s32.totalorder 2, %s13
    // Predicated region
    $region49: #{conv5_block.8} parent=5 // pred_check
      %p730 = pneg %p729
    $region50: #{conv5_block.8} parent=5 // pred_check_branch
      %732 = sbr.rel (%p730) target = $region52
    $region51: #{conv5_block.8} parent=5 // pred_region
      %s733 = ssub.s32 %s13, 2
      // Predicated region
      $region53: #{conv5_block.8} parent=51 // pred_check
        %p734 = pneg %p131
      $region54: #{conv5_block.8} parent=51 // pred_check_branch
        %736 = sbr.rel (%p734) target = $region56
      $region55: #{conv5_block.8} parent=51 // pred_region
        %s737 = smul.u32 16, %s19
        %p738 = scmp.lt.s32.totalorder %s737, 63
        %s739 = scalar_select %p738, %s737, 63
        %s740 = smul.addr %s739, 4
        %s741 = scalar_lea.vmem %s4, %s740
      $region56: #{conv5_block.8} parent=51 // pred_fallthru
        _
      // Predicated region
      $region57: #{conv5_block.8} parent=51 // pred_check
        %p742 = pneg %p157
      $region58: #{conv5_block.8} parent=51 // pred_check_branch
        %744 = sbr.rel (%p742) target = $region60
      $region59: #{conv5_block.8} parent=51 // pred_region
        %p745 = scmp.lt.s32.totalorder %s19, 3
        %s746 = scalar_select %p745, %s19, 3
        %s747 = scalar_lea.vmem %s5, %s746
      $region60: #{conv5_block.8} parent=51 // pred_fallthru
        _
      // Predicated region
      $region61: #{conv5_block.8} parent=51 // pred_check
        %p748 = pneg %p183
      $region62: #{conv5_block.8} parent=51 // pred_check_branch
        %750 = sbr.rel (%p748) target = $region64
      $region63: #{conv5_block.8} parent=51 // pred_region
        %p751 = scmp.lt.s32.totalorder %s19, 3
        %s752 = scalar_select %p751, %s19, 3
        %s753 = scalar_lea.vmem %s6, %s752
      $region64: #{conv5_block.8} parent=51 // pred_fallthru
        _
    $region52: #{conv5_block.8} parent=5 // pred_fallthru
      _
  $region6: #{conv5_block.8} parent=0 // loop_footer
    %s17 = sadd.s32 1, %s13
  $region7: #{conv5_block.8} parent=0 // loop_footer_branch
    %12 = sbr.rel target = $region3
  $region8: #{conv5_block.8} parent=0 // loop_exit
    _

// kernel: conv5_block.10
$region0: #{conv5_block.10}
  #allocation0 [shape = 'u32[]', space=smem, size = 0x4, offset = 0x4, fixed_abs, tag = 'smem constant byte address 0x4 - core index']
  #allocation1 [shape = 'u32[144,128]{1,0:T(1,128)}', space=vmem, size = 0x12000, scoped, tag = 'internal scratch']
  %s0 = inlined_call_operand.vmem [shape: bf16[512,128], index: 0, kind: input, shape index: {}]
  %s1 = inlined_call_operand.vmem [shape: f32[1,128], index: 1, kind: input, shape index: {}]
  %s2 = inlined_call_operand.vmem [shape: f32[1,128], index: 2, kind: input, shape index: {}]
  %s3 = inlined_call_operand.vmem [shape: bf16[128,128], index: 3, kind: input, shape index: {}]
  %s4 = inlined_call_operand.vmem [shape: f32[512,128], index: 4, kind: output, shape index: {0}]
  %s5 = inlined_call_operand.vmem [shape: f32[4,1,128], index: 5, kind: output, shape index: {1}]
  %s6 = inlined_call_operand.vmem [shape: f32[4,1,128], index: 6, kind: output, shape index: {2}]
  %7 = xla_tuple %s4, %s5, %s6
  %s8 = sld [smem:[#allocation0]]
  $region65: #{conv5_block.10} parent=0
    _
  %s10 = ssub.s32 1, %s8
  %s11 = scalar_select 0, %s10, %s8
  loop: start=0, step=1, limit=6
  $region2: #{conv5_block.10} parent=0 // loop_pre_header
    _
  $region3: #{conv5_block.10} parent=0 // loop_header
    %s13 = sphi 0, %s17
    %p14 = scmp.ge.s32.totalorder %s13, 6
    %s23 = sphi 0, %s25
    %s26 = sphi 0, %s23
    %s27 = sphi 0, %s26
    %s43 = sphi 0, %s27
    %s47 = sphi 0, %s47
    %s49 = sphi 0, %s47
    %s50 = sphi 0, %s49
    %s64 = sphi 0, %s50
    %s68 = sphi 0, %s68
    %s70 = sphi 0, %s68
    %s71 = sphi 0, %s70
    %s85 = sphi 0, %s71
    %s89 = sphi 0, %s89
    %s91 = sphi 0, %s89
    %s92 = sphi 0, %s91
    %s106 = sphi 0, %s92
    %s112 = sphi 0, %s114
    %s115 = sphi 0, %s112
    %s116 = sphi 0, %s115
    %s132 = sphi 0, %s116
    %s138 = sphi 0, %s140
    %s141 = sphi 0, %s138
    %s142 = sphi 0, %s141
    %s158 = sphi 0, %s142
    %s164 = sphi 0, %s166
    %s167 = sphi 0, %s164
    %s168 = sphi 0, %s167
    %s184 = sphi 0, %s168
  $region4: #{conv5_block.10} parent=0 // loop_header_branch
    %16 = sbr.rel (%p14) target = $region8
  $region5: #{conv5_block.10} parent=0 // loop_body
    %s18 = ssub.s32 %s13, 1
    %s19 = ssub.s32 %s13, 2
    %s20 = sadd.s32 %s13, 1
    %s21 = ssub.s32 %s13, %s20
    %p22 = scmp.eq.s32.totalorder %s21, 0
    %s24 = sadd.s32 %s23, 1
    %s25 = scalar_select %p22, %s23, %s24
    %p28 = pneg %p22
    %p29 = scmp.eq.s32.totalorder %s13, 3
    %p30 = por %p28, %p29
    %p31 = scmp.ne.s32.totalorder %s23, %s26
    %p32 = scmp.eq.s32.totalorder %s13, 0
    %p33 = por %p31, %p32
    %p34 = scmp.ne.s32.totalorder %s23, %s26
    %p35 = scmp.eq.s32.totalorder %s18, 3
    %p36 = por %p34, %p35
    %p37 = scmp.ne.s32.totalorder %s26, %s27
    %p38 = scmp.eq.s32.totalorder %s18, 0
    %p39 = por %p37, %p38
    %p40 = scmp.ne.s32.totalorder %s26, %s27
    %p41 = scmp.eq.s32.totalorder %s19, 3
    %p42 = por %p40, %p41
    %p44 = scmp.ne.s32.totalorder %s27, %s43
    %p45 = scmp.eq.s32.totalorder %s19, 0
    %p46 = por %p44, %p45
    %s48 = sadd.s32 %s47, 1
    %p51 = scmp.eq.s32.totalorder %s13, 3
    %p52 = scmp.ne.s32.totalorder %s47, %s49
    %p53 = scmp.eq.s32.totalorder %s13, 0
    %p54 = por %p52, %p53
    %p55 = scmp.ne.s32.totalorder %s47, %s49
    %p56 = scmp.eq.s32.totalorder %s18, 3
    %p57 = por %p55, %p56
    %p58 = scmp.ne.s32.totalorder %s49, %s50
    %p59 = scmp.eq.s32.totalorder %s18, 0
    %p60 = por %p58, %p59
    %p61 = scmp.ne.s32.totalorder %s49, %s50
    %p62 = scmp.eq.s32.totalorder %s19, 3
    %p63 = por %p61, %p62
    %p65 = scmp.ne.s32.totalorder %s50, %s64
    %p66 = scmp.eq.s32.totalorder %s19, 0
    %p67 = por %p65, %p66
    %s69 = sadd.s32 %s68, 1
    %p72 = scmp.eq.s32.totalorder %s13, 3
    %p73 = scmp.ne.s32.totalorder %s68, %s70
    %p74 = scmp.eq.s32.totalorder %s13, 0
    %p75 = por %p73, %p74
    %p76 = scmp.ne.s32.totalorder %s68, %s70
    %p77 = scmp.eq.s32.totalorder %s18, 3
    %p78 = por %p76, %p77
    %p79 = scmp.ne.s32.totalorder %s70, %s71
    %p80 = scmp.eq.s32.totalorder %s18, 0
    %p81 = por %p79, %p80
    %p82 = scmp.ne.s32.totalorder %s70, %s71
    %p83 = scmp.eq.s32.totalorder %s19, 3
    %p84 = por %p82, %p83
    %p86 = scmp.ne.s32.totalorder %s71, %s85
    %p87 = scmp.eq.s32.totalorder %s19, 0
    %p88 = por %p86, %p87
    %s90 = sadd.s32 %s89, 1
    %p93 = scmp.eq.s32.totalorder %s13, 3
    %p94 = scmp.ne.s32.totalorder %s89, %s91
    %p95 = scmp.eq.s32.totalorder %s13, 0
    %p96 = por %p94, %p95
    %p97 = scmp.ne.s32.totalorder %s89, %s91
    %p98 = scmp.eq.s32.totalorder %s18, 3
    %p99 = por %p97, %p98
    %p100 = scmp.ne.s32.totalorder %s91, %s92
    %p101 = scmp.eq.s32.totalorder %s18, 0
    %p102 = por %p100, %p101
    %p103 = scmp.ne.s32.totalorder %s91, %s92
    %p104 = scmp.eq.s32.totalorder %s19, 3
    %p105 = por %p103, %p104
    %p107 = scmp.ne.s32.totalorder %s92, %s106
    %p108 = scmp.eq.s32.totalorder %s19, 0
    %p109 = por %p107, %p108
    %s110 = ssub.s32 %s13, %s20
    %p111 = scmp.eq.s32.totalorder %s110, 0
    %s113 = sadd.s32 %s112, 1
    %s114 = scalar_select %p111, %s112, %s113
    %p117 = pneg %p111
    %p118 = scmp.eq.s32.totalorder %s13, 3
    %p119 = por %p117, %p118
    %p120 = scmp.ne.s32.totalorder %s112, %s115
    %p121 = scmp.eq.s32.totalorder %s13, 0
    %p122 = por %p120, %p121
    %p123 = scmp.ne.s32.totalorder %s112, %s115
    %p124 = scmp.eq.s32.totalorder %s18, 3
    %p125 = por %p123, %p124
    %p126 = scmp.ne.s32.totalorder %s115, %s116
    %p127 = scmp.eq.s32.totalorder %s18, 0
    %p128 = por %p126, %p127
    %p129 = scmp.ne.s32.totalorder %s115, %s116
    %p130 = scmp.eq.s32.totalorder %s19, 3
    %p131 = por %p129, %p130
    %p133 = scmp.ne.s32.totalorder %s116, %s132
    %p134 = scmp.eq.s32.totalorder %s19, 0
    %p135 = por %p133, %p134
    %s136 = ssub.s32 %s13, %s20
    %p137 = scmp.eq.s32.totalorder %s136, 0
    %s139 = sadd.s32 %s138, 1
    %s140 = scalar_select %p137, %s138, %s139
    %p143 = pneg %p137
    %p144 = scmp.eq.s32.totalorder %s13, 3
    %p145 = por %p143, %p144
    %p146 = scmp.ne.s32.totalorder %s138, %s141
    %p147 = scmp.eq.s32.totalorder %s13, 0
    %p148 = por %p146, %p147
    %p149 = scmp.ne.s32.totalorder %s138, %s141
    %p150 = scmp.eq.s32.totalorder %s18, 3
    %p151 = por %p149, %p150
    %p152 = scmp.ne.s32.totalorder %s141, %s142
    %p153 = scmp.eq.s32.totalorder %s18, 0
    %p154 = por %p152, %p153
    %p155 = scmp.ne.s32.totalorder %s141, %s142
    %p156 = scmp.eq.s32.totalorder %s19, 3
    %p157 = por %p155, %p156
    %p159 = scmp.ne.s32.totalorder %s142, %s158
    %p160 = scmp.eq.s32.totalorder %s19, 0
    %p161 = por %p159, %p160
    %s162 = ssub.s32 %s13, %s20
    %p163 = scmp.eq.s32.totalorder %s162, 0
    %s165 = sadd.s32 %s164, 1
    %s166 = scalar_select %p163, %s164, %s165
    %p169 = pneg %p163
    %p170 = scmp.eq.s32.totalorder %s13, 3
    %p171 = por %p169, %p170
    %p172 = scmp.ne.s32.totalorder %s164, %s167
    %p173 = scmp.eq.s32.totalorder %s13, 0
    %p174 = por %p172, %p173
    %p175 = scmp.ne.s32.totalorder %s164, %s167
    %p176 = scmp.eq.s32.totalorder %s18, 3
    %p177 = por %p175, %p176
    %p178 = scmp.ne.s32.totalorder %s167, %s168
    %p179 = scmp.eq.s32.totalorder %s18, 0
    %p180 = por %p178, %p179
    %p181 = scmp.ne.s32.totalorder %s167, %s168
    %p182 = scmp.eq.s32.totalorder %s19, 3
    %p183 = por %p181, %p182
    %p185 = scmp.ne.s32.totalorder %s168, %s184
    %p186 = scmp.eq.s32.totalorder %s19, 0
    %p187 = por %p185, %p186
    %p188 = scmp.le.s32.totalorder 1, %s13
    %p189 = scmp.lt.s32.totalorder %s13, 5
    %p190 = pnand %p188, %p189
    %p191 = pneg %p190
    // Predicated region
    $region9: #{conv5_block.10} parent=5 // pred_check
      _
    $region10: #{conv5_block.10} parent=5 // pred_check_branch
      %193 = sbr.rel (%p190) target = $region12
    $region11: #{conv5_block.10} parent=5 // pred_region
      %s194 = ssub.s32 %s13, 1
      // Predicated region
      $region13: #{conv5_block.10} parent=11 // pred_check
        %p195 = pneg %p60
      $region14: #{conv5_block.10} parent=11 // pred_check_branch
        %197 = sbr.rel (%p195) target = $region16
      $region15: #{conv5_block.10} parent=11 // pred_region
        _
      $region16: #{conv5_block.10} parent=11 // pred_fallthru
        _
      // Predicated region
      $region17: #{conv5_block.10} parent=11 // pred_check
        %p198 = pneg %p81
      $region18: #{conv5_block.10} parent=11 // pred_check_branch
        %200 = sbr.rel (%p198) target = $region20
      $region19: #{conv5_block.10} parent=11 // pred_region
        _
      $region20: #{conv5_block.10} parent=11 // pred_fallthru
        _
      // Predicated region
      $region21: #{conv5_block.10} parent=11 // pred_check
        %p201 = pneg %p102
      $region22: #{conv5_block.10} parent=11 // pred_check_branch
        %203 = sbr.rel (%p201) target = $region24
      $region23: #{conv5_block.10} parent=11 // pred_region
        _
      $region24: #{conv5_block.10} parent=11 // pred_fallthru
        _
    $region12: #{conv5_block.10} parent=5 // pred_fallthru
      _
    %p204 = scmp.lt.s32.totalorder %s13, 4
    // Predicated region
    $region25: #{conv5_block.10} parent=5 // pred_check
      %p205 = pneg %p204
    $region26: #{conv5_block.10} parent=5 // pred_check_branch
      %207 = sbr.rel (%p205) target = $region28
    $region27: #{conv5_block.10} parent=5 // pred_region
      // Predicated region
      $region29: #{conv5_block.10} parent=27 // pred_check
        %p208 = pneg %p33
      $region30: #{conv5_block.10} parent=27 // pred_check_branch
        %210 = sbr.rel (%p208) target = $region32
      $region31: #{conv5_block.10} parent=27 // pred_region
        %s211 = smul.u32 16, %s13
        %p212 = scmp.lt.s32.totalorder %s211, 63
        %s213 = scalar_select %p212, %s211, 63
        %s214 = smul.addr %s213, 4
        %s215 = scalar_lea.vmem %s0, %s214
        %s216 = smul.u32 16, %s13
      $region32: #{conv5_block.10} parent=27 // pred_fallthru
        _
    $region28: #{conv5_block.10} parent=5 // pred_fallthru
      _
    %p217 = scmp.le.s32.totalorder 1, %s13
    %p218 = scmp.lt.s32.totalorder %s13, 5
    %p219 = pnand %p217, %p218
    %p220 = pneg %p219
    // Predicated region
    $region33: #{conv5_block.10} parent=5 // pred_check
      _
    $region34: #{conv5_block.10} parent=5 // pred_check_branch
      %222 = sbr.rel (%p219) target = $region36
    $region35: #{conv5_block.10} parent=5 // pred_region
      %s223 = ssub.s32 %s13, 1
      %s224 = smul.u32 16, %s18
      %p225 = scmp.lt.s32.totalorder %s224, 63
      %s226 = scalar_select %p225, %s224, 63
      %s227 = smul.addr %s226, 4
      %s228 = scalar_lea.vmem %s0, %s227
      %p229 = pneg %p39
      %p230 = pneg %p36
      %p231 = pneg %p60
      %p232 = pneg %p57
      %p233 = pneg %p81
      %p234 = pneg %p78
      %p235 = pneg %p102
      %p236 = pneg %p99
      %p237 = pneg %p128
      %p238 = pneg %p125
      %s239 = smul.u32 16, %s18
      %p240 = scmp.lt.s32.totalorder %s239, 63
      %s241 = scalar_select %p240, %s239, 63
      %s242 = smul.addr %s241, 8
      %s243 = scalar_lea.vmem %s4, %s242
      %p244 = pneg %p154
      %p245 = pneg %p151
      %p246 = scmp.lt.s32.totalorder %s18, 3
      %s247 = scalar_select %p246, %s18, 3
      %s248 = scalar_lea.vmem %s5, %s247
      %p249 = pneg %p180
      %p250 = pneg %p177
      %p251 = scmp.lt.s32.totalorder %s18, 3
      %s252 = scalar_select %p251, %s18, 3
      %s253 = scalar_lea.vmem %s6, %s252
      %s254 = smul.u32 16, %s18
      %p255 = scmp.lt.s32.totalorder %s254, 63
      %s256 = scalar_select %p255, %s254, 63
      %s257 = smul.addr %s256, 4
      %s258 = scalar_lea.vmem %s0, %s257
      %s259 = smul.u32 16, %s18
      %s260 = smul.u32 16, %s18
      %p261 = scmp.lt.s32.totalorder %s260, 63
      %s262 = scalar_select %p261, %s260, 63
      %s263 = smul.addr %s262, 8
      %s264 = scalar_lea.vmem %s4, %s263
      %s265 = smul.u32 16, %s18
      %p266 = scmp.lt.s32.totalorder %s18, 3
      %s267 = scalar_select %p266, %s18, 3
      %s268 = scalar_lea.vmem %s5, %s267
      %p269 = scmp.lt.s32.totalorder %s18, 3
      %s270 = scalar_select %p269, %s18, 3
      %s271 = scalar_lea.vmem %s6, %s270
      %v273 = vld [vmem:[%s258] sm:$0xf]
      %v274 = vld [vmem:[%s258 + $0x4] sm:$0xf]
      %v275 = vld [vmem:[%s258 + $0x8] sm:$0xf]
      %v276 = vld [vmem:[%s258 + $0xc] sm:$0xf]
      %v277 = vld [vmem:[%s258 + $0x10] sm:$0xf]
      %v278 = vld [vmem:[%s258 + $0x14] sm:$0xf]
      %v279 = vld [vmem:[%s258 + $0x18] sm:$0xf]
      %v280 = vld [vmem:[%s258 + $0x1c] sm:$0xf]
      %v281 = vld [vmem:[%s258 + $0x20] sm:$0xf]
      %v282 = vld [vmem:[%s258 + $0x24] sm:$0xf]
      %v283 = vld [vmem:[%s258 + $0x28] sm:$0xf]
      %v284 = vld [vmem:[%s258 + $0x2c] sm:$0xf]
      %v285 = vld [vmem:[%s258 + $0x30] sm:$0xf]
      %v286 = vld [vmem:[%s258 + $0x34] sm:$0xf]
      %v287 = vld [vmem:[%s258 + $0x38] sm:$0xf]
      %v288 = vld [vmem:[%s258 + $0x3c] sm:$0xf]
      %v289 = vunpack.c.l.bf16 %v273
      %v290 = vunpack.c.l.bf16 %v274
      %v291 = vunpack.c.l.bf16 %v275
      %v292 = vunpack.c.l.bf16 %v276
      %v293 = vunpack.c.l.bf16 %v277
      %v294 = vunpack.c.l.bf16 %v278
      %v295 = vunpack.c.l.bf16 %v279
      %v296 = vunpack.c.l.bf16 %v280
      %v297 = vunpack.c.l.bf16 %v281
      %v298 = vunpack.c.l.bf16 %v282
      %v299 = vunpack.c.l.bf16 %v283
      %v300 = vunpack.c.l.bf16 %v284
      %v301 = vunpack.c.l.bf16 %v285
      %v302 = vunpack.c.l.bf16 %v286
      %v303 = vunpack.c.l.bf16 %v287
      %v304 = vunpack.c.l.bf16 %v288
      %v305 = vld [vmem:[%s1] sm:$0x1]
      %v307 = vlaneseq
      %v308 = vshrl.u32 %v307, 7
      %v309 = vsub.s32 0, %v308
      %v310 = vrot.slane %v305, %v309
      %v312 = vmul.f32 %v289, %v310
      %v313 = vmul.f32 %v290, %v310
      %v314 = vmul.f32 %v291, %v310
      %v315 = vmul.f32 %v292, %v310
      %v316 = vmul.f32 %v293, %v310
      %v317 = vmul.f32 %v294, %v310
      %v318 = vmul.f32 %v295, %v310
      %v319 = vmul.f32 %v296, %v310
      %v320 = vmul.f32 %v297, %v310
      %v321 = vmul.f32 %v298, %v310
      %v322 = vmul.f32 %v299, %v310
      %v323 = vmul.f32 %v300, %v310
      %v324 = vmul.f32 %v301, %v310
      %v325 = vmul.f32 %v302, %v310
      %v326 = vmul.f32 %v303, %v310
      %v327 = vmul.f32 %v304, %v310
      %v328 = vld [vmem:[%s2] sm:$0x1]
      %v330 = vlaneseq
      %v331 = vshrl.u32 %v330, 7
      %v332 = vsub.s32 0, %v331
      %v333 = vrot.slane %v328, %v332
      %v335 = vadd.f32 %v312, %v333
      %v336 = vadd.f32 %v313, %v333
      %v337 = vadd.f32 %v314, %v333
      %v338 = vadd.f32 %v315, %v333
      %v339 = vadd.f32 %v316, %v333
      %v340 = vadd.f32 %v317, %v333
      %v341 = vadd.f32 %v318, %v333
      %v342 = vadd.f32 %v319, %v333
      %v343 = vadd.f32 %v320, %v333
      %v344 = vadd.f32 %v321, %v333
      %v345 = vadd.f32 %v322, %v333
      %v346 = vadd.f32 %v323, %v333
      %v347 = vadd.f32 %v324, %v333
      %v348 = vadd.f32 %v325, %v333
      %v349 = vadd.f32 %v326, %v333
      %v350 = vadd.f32 %v327, %v333
      %vm351 = vcmp.gt.f32.partialorder %v335, 0.0
      %vm352 = vcmp.gt.f32.partialorder %v336, 0.0
      %vm353 = vcmp.gt.f32.partialorder %v337, 0.0
      %vm354 = vcmp.gt.f32.partialorder %v338, 0.0
      %vm355 = vcmp.gt.f32.partialorder %v339, 0.0
      %vm356 = vcmp.gt.f32.partialorder %v340, 0.0
      %vm357 = vcmp.gt.f32.partialorder %v341, 0.0
      %vm358 = vcmp.gt.f32.partialorder %v342, 0.0
      %vm359 = vcmp.gt.f32.partialorder %v343, 0.0
      %vm360 = vcmp.gt.f32.partialorder %v344, 0.0
      %vm361 = vcmp.gt.f32.partialorder %v345, 0.0
      %vm362 = vcmp.gt.f32.partialorder %v346, 0.0
      %vm363 = vcmp.gt.f32.partialorder %v347, 0.0
      %vm364 = vcmp.gt.f32.partialorder %v348, 0.0
      %vm365 = vcmp.gt.f32.partialorder %v349, 0.0
      %vm366 = vcmp.gt.f32.partialorder %v350, 0.0
      %v367 = vmul.f32 %v335, 0.1
      %v368 = vmul.f32 %v336, 0.1
      %v369 = vmul.f32 %v337, 0.1
      %v370 = vmul.f32 %v338, 0.1
      %v371 = vmul.f32 %v339, 0.1
      %v372 = vmul.f32 %v340, 0.1
      %v373 = vmul.f32 %v341, 0.1
      %v374 = vmul.f32 %v342, 0.1
      %v375 = vmul.f32 %v343, 0.1
      %v376 = vmul.f32 %v344, 0.1
      %v377 = vmul.f32 %v345, 0.1
      %v378 = vmul.f32 %v346, 0.1
      %v379 = vmul.f32 %v347, 0.1
      %v380 = vmul.f32 %v348, 0.1
      %v381 = vmul.f32 %v349, 0.1
      %v382 = vmul.f32 %v350, 0.1
      %v383 = vsel %vm351, %v335, %v367
      %v384 = vsel %vm352, %v336, %v368
      %v385 = vsel %vm353, %v337, %v369
      %v386 = vsel %vm354, %v338, %v370
      %v387 = vsel %vm355, %v339, %v371
      %v388 = vsel %vm356, %v340, %v372
      %v389 = vsel %vm357, %v341, %v373
      %v390 = vsel %vm358, %v342, %v374
      %v391 = vsel %vm359, %v343, %v375
      %v392 = vsel %vm360, %v344, %v376
      %v393 = vsel %vm361, %v345, %v377
      %v394 = vsel %vm362, %v346, %v378
      %v395 = vsel %vm363, %v347, %v379
      %v396 = vsel %vm364, %v348, %v380
      %v397 = vsel %vm365, %v349, %v381
      %v398 = vsel %vm366, %v350, %v382
      %v399 = vpack.c.bf16 %v384, %v383
      %v400 = vpack.c.bf16 %v386, %v385
      %v401 = vpack.c.bf16 %v388, %v387
      %v402 = vpack.c.bf16 %v390, %v389
      %v403 = vpack.c.bf16 %v392, %v391
      %v404 = vpack.c.bf16 %v394, %v393
      %v405 = vpack.c.bf16 %v396, %v395
      %v406 = vpack.c.bf16 %v398, %v397
      %v407 = vld [vmem:[%s3] sm:$0xf]
      %v408 = vld [vmem:[%s3 + $0x4] sm:$0xf]
      %v409 = vld [vmem:[%s3 + $0x8] sm:$0xf]
      %v410 = vld [vmem:[%s3 + $0xc] sm:$0xf]
      %v411 = vld [vmem:[%s3 + $0x10] sm:$0xf]
      %v412 = vld [vmem:[%s3 + $0x14] sm:$0xf]
      %v413 = vld [vmem:[%s3 + $0x18] sm:$0xf]
      %v414 = vld [vmem:[%s3 + $0x1c] sm:$0xf]
      %v415 = vld [vmem:[%s3 + $0x20] sm:$0xf]
      %v416 = vld [vmem:[%s3 + $0x24] sm:$0xf]
      %v417 = vld [vmem:[%s3 + $0x28] sm:$0xf]
      %v418 = vld [vmem:[%s3 + $0x2c] sm:$0xf]
      %v419 = vld [vmem:[%s3 + $0x30] sm:$0xf]
      %v420 = vld [vmem:[%s3 + $0x34] sm:$0xf]
      %v421 = vld [vmem:[%s3 + $0x38] sm:$0xf]
      %v422 = vld [vmem:[%s3 + $0x3c] sm:$0xf]
      %v439 = vunpack.c.l.b16 %v407
      %v440 = vunpack.c.l.b16 %v408
      %v441 = vunpack.c.l.b16 %v409
      %v442 = vunpack.c.l.b16 %v410
      %v443 = vunpack.c.l.b16 %v411
      %v444 = vunpack.c.l.b16 %v412
      %v445 = vunpack.c.l.b16 %v413
      %v446 = vunpack.c.l.b16 %v414
      %v447 = vunpack.c.l.b16 %v415
      %v448 = vunpack.c.l.b16 %v416
      %v449 = vunpack.c.l.b16 %v417
      %v450 = vunpack.c.l.b16 %v418
      %v451 = vunpack.c.l.b16 %v419
      %v452 = vunpack.c.l.b16 %v420
      %v453 = vunpack.c.l.b16 %v421
      %v454 = vunpack.c.l.b16 %v422
      %v455 = vpack.c.b16 %v440, %v439
      %v456 = vpack.c.b16 %v442, %v441
      %v457 = vpack.c.b16 %v444, %v443
      %v458 = vpack.c.b16 %v446, %v445
      %v459 = vpack.c.b16 %v448, %v447
      %v460 = vpack.c.b16 %v450, %v449
      %v461 = vpack.c.b16 %v452, %v451
      %v462 = vpack.c.b16 %v454, %v453
      %471 = vmatprep.subr.bf16.mxu0 0
      %472 = vmatpush1.bf16.msra.mxu0 %v462
      %473 = vmatprep.subr.bf16.mxu0 0
      %474 = vmatpush1.bf16.msra.mxu0 %v461
      %475 = vmatprep.subr.bf16.mxu0 0
      %476 = vmatpush1.bf16.msra.mxu0 %v460
      %477 = vmatprep.subr.bf16.mxu0 0
      %478 = vmatpush1.bf16.msra.mxu0 %v459
      %479 = vmatprep.subr.bf16.mxu0 0
      %480 = vmatpush1.bf16.msra.mxu0 %v458
      %481 = vmatprep.subr.bf16.mxu0 0
      %482 = vmatpush1.bf16.msra.mxu0 %v457
      %483 = vmatprep.subr.bf16.mxu0 0
      %484 = vmatpush1.bf16.msra.mxu0 %v456
      %485 = vmatprep.subr.bf16.mxu0 0
      %486 = vmatpush1.bf16.msra.mxu0 %v455
      %487 = vmatprep.subr.bf16.mxu0 0
      %488 = vmatpush2.bf16.msra.mxu0 0
      %489 = vmatprep.subr.bf16.mxu0 0
      %490 = vmatpush2.bf16.msra.mxu0 0
      %491 = vmatprep.subr.bf16.mxu0 0
      %492 = vmatpush2.bf16.msra.mxu0 0
      %493 = vmatprep.subr.bf16.mxu0 0
      %494 = vmatpush2.bf16.msra.mxu0 0
      %495 = vmatprep.subr.bf16.mxu0 0
      %496 = vmatpush2.bf16.msra.mxu0 0
      %497 = vmatprep.subr.bf16.mxu0 0
      %498 = vmatpush2.bf16.msra.mxu0 0
      %499 = vmatprep.subr.bf16.mxu0 0
      %500 = vmatpush2.bf16.msra.mxu0 0
      %501 = vmatprep.subr.bf16.mxu0 0
      %502 = vmatpush2.bf16.msra.mxu0 0
      %503 = vmatprep.mubr.bf16.mxu0 0
      %504 = vmatmul.mubr.bf16.gmra.mxu0 %v399
      %v505 = vpop.f32.mrf.mxu0
      %v506 = vadd.f32 0.0, %v505
      %v507 = vpop.f32.mrf.mxu0
      %v508 = vpop.f32.mrf.mxu0
      %v509 = vadd.f32 0.0, %v508
      %v510 = vpop.f32.mrf.mxu0
      %511 = vmatprep.mubr.bf16.mxu0 0
      %512 = vmatmul.mubr.bf16.gmra.mxu0 %v400
      %v513 = vpop.f32.mrf.mxu0
      %v514 = vadd.f32 0.0, %v513
      %v515 = vpop.f32.mrf.mxu0
      %v516 = vpop.f32.mrf.mxu0
      %v517 = vadd.f32 0.0, %v516
      %v518 = vpop.f32.mrf.mxu0
      %519 = vmatprep.mubr.bf16.mxu0 0
      %520 = vmatmul.mubr.bf16.gmra.mxu0 %v401
      %v521 = vpop.f32.mrf.mxu0
      %v522 = vadd.f32 0.0, %v521
      %v523 = vpop.f32.mrf.mxu0
      %v524 = vpop.f32.mrf.mxu0
      %v525 = vadd.f32 0.0, %v524
      %v526 = vpop.f32.mrf.mxu0
      %527 = vmatprep.mubr.bf16.mxu0 0
      %528 = vmatmul.mubr.bf16.gmra.mxu0 %v402
      %v529 = vpop.f32.mrf.mxu0
      %v530 = vadd.f32 0.0, %v529
      %v531 = vpop.f32.mrf.mxu0
      %v532 = vpop.f32.mrf.mxu0
      %v533 = vadd.f32 0.0, %v532
      %v534 = vpop.f32.mrf.mxu0
      %535 = vmatprep.mubr.bf16.mxu0 0
      %536 = vmatmul.mubr.bf16.gmra.mxu0 %v403
      %v537 = vpop.f32.mrf.mxu0
      %v538 = vadd.f32 0.0, %v537
      %v539 = vpop.f32.mrf.mxu0
      %v540 = vpop.f32.mrf.mxu0
      %v541 = vadd.f32 0.0, %v540
      %v542 = vpop.f32.mrf.mxu0
      %543 = vmatprep.mubr.bf16.mxu0 0
      %544 = vmatmul.mubr.bf16.gmra.mxu0 %v404
      %v545 = vpop.f32.mrf.mxu0
      %v546 = vadd.f32 0.0, %v545
      %v547 = vpop.f32.mrf.mxu0
      %v548 = vpop.f32.mrf.mxu0
      %v549 = vadd.f32 0.0, %v548
      %v550 = vpop.f32.mrf.mxu0
      %551 = vmatprep.mubr.bf16.mxu0 0
      %552 = vmatmul.mubr.bf16.gmra.mxu0 %v405
      %v553 = vpop.f32.mrf.mxu0
      %v554 = vadd.f32 0.0, %v553
      %v555 = vpop.f32.mrf.mxu0
      %v556 = vpop.f32.mrf.mxu0
      %v557 = vadd.f32 0.0, %v556
      %v558 = vpop.f32.mrf.mxu0
      %559 = vmatprep.mubr.bf16.mxu0 0
      %560 = vmatmul.mubr.bf16.gmra.mxu0 %v406
      %v561 = vpop.f32.mrf.mxu0
      %v562 = vadd.f32 0.0, %v561
      %v563 = vpop.f32.mrf.mxu0
      %v564 = vpop.f32.mrf.mxu0
      %v565 = vadd.f32 0.0, %v564
      %v566 = vpop.f32.mrf.mxu0
      %567 = vdwg.mxu0
      %568 = vst [vmem:[%s264] sm:$0xff] %v506
      %569 = vst [vmem:[%s264 + $0x8] sm:$0xff] %v509
      %570 = vst [vmem:[%s264 + $0x10] sm:$0xff] %v514
      %571 = vst [vmem:[%s264 + $0x18] sm:$0xff] %v517
      %572 = vst [vmem:[%s264 + $0x20] sm:$0xff] %v522
      %573 = vst [vmem:[%s264 + $0x28] sm:$0xff] %v525
      %574 = vst [vmem:[%s264 + $0x30] sm:$0xff] %v530
      %575 = vst [vmem:[%s264 + $0x38] sm:$0xff] %v533
      %576 = vst [vmem:[%s264 + $0x40] sm:$0xff] %v538
      %577 = vst [vmem:[%s264 + $0x48] sm:$0xff] %v541
      %578 = vst [vmem:[%s264 + $0x50] sm:$0xff] %v546
      %579 = vst [vmem:[%s264 + $0x58] sm:$0xff] %v549
      %580 = vst [vmem:[%s264 + $0x60] sm:$0xff] %v554
      %581 = vst [vmem:[%s264 + $0x68] sm:$0xff] %v557
      %582 = vst [vmem:[%s264 + $0x70] sm:$0xff] %v562
      %583 = vst [vmem:[%s264 + $0x78] sm:$0xff] %v565
      %v584 = vadd.f32 %v506, %v509
      %v585 = vadd.f32 %v584, %v514
      %v586 = vadd.f32 %v585, %v517
      %v587 = vadd.f32 %v586, %v522
      %v588 = vadd.f32 %v587, %v525
      %v589 = vadd.f32 %v588, %v530
      %v590 = vadd.f32 %v589, %v533
      %v591 = vadd.f32 %v590, %v538
      %v592 = vadd.f32 %v591, %v541
      %v593 = vadd.f32 %v592, %v546
      %v594 = vadd.f32 %v593, %v549
      %v595 = vadd.f32 %v594, %v554
      %v596 = vadd.f32 %v595, %v557
      %v597 = vadd.f32 %v596, %v562
      %v598 = vadd.f32 %v597, %v565
      %v599 = vrot.slane %v598, 4
      %v600 = vadd.f32 %v598, %v599
      %v601 = vrot.slane %v600, 2
      %v602 = vadd.f32 %v600, %v601
      %v603 = vrot.slane %v602, 1
      %v604 = vadd.f32 %v602, %v603
      %605 = vst [vmem:[%s268] sm:$0x1] %v604
      %v606 = vmul.f32 %v506, %v506
      %v607 = vmul.f32 %v509, %v509
      %v608 = vmul.f32 %v514, %v514
      %v609 = vmul.f32 %v517, %v517
      %v610 = vmul.f32 %v522, %v522
      %v611 = vmul.f32 %v525, %v525
      %v612 = vmul.f32 %v530, %v530
      %v613 = vmul.f32 %v533, %v533
      %v614 = vmul.f32 %v538, %v538
      %v615 = vmul.f32 %v541, %v541
      %v616 = vmul.f32 %v546, %v546
      %v617 = vmul.f32 %v549, %v549
      %v618 = vmul.f32 %v554, %v554
      %v619 = vmul.f32 %v557, %v557
      %v620 = vmul.f32 %v562, %v562
      %v621 = vmul.f32 %v565, %v565
      %v622 = vadd.f32 %v606, %v607
      %v623 = vadd.f32 %v622, %v608
      %v624 = vadd.f32 %v623, %v609
      %v625 = vadd.f32 %v624, %v610
      %v626 = vadd.f32 %v625, %v611
      %v627 = vadd.f32 %v626, %v612
      %v628 = vadd.f32 %v627, %v613
      %v629 = vadd.f32 %v628, %v614
      %v630 = vadd.f32 %v629, %v615
      %v631 = vadd.f32 %v630, %v616
      %v632 = vadd.f32 %v631, %v617
      %v633 = vadd.f32 %v632, %v618
      %v634 = vadd.f32 %v633, %v619
      %v635 = vadd.f32 %v634, %v620
      %v636 = vadd.f32 %v635, %v621
      %v637 = vrot.slane %v636, 4
      %v638 = vadd.f32 %v636, %v637
      %v639 = vrot.slane %v638, 2
      %v640 = vadd.f32 %v638, %v639
      %v641 = vrot.slane %v640, 1
      %v642 = vadd.f32 %v640, %v641
      %643 = vst [vmem:[%s271] sm:$0x1] %v642
      %s644 = smul.u32 16, %s18
      %p645 = scmp.lt.s32.totalorder %s644, 63
      %s646 = scalar_select %p645, %s644, 63
      %s647 = smul.addr %s646, 8
      %s648 = scalar_lea.vmem %s4, %s647
      %p649 = scmp.lt.s32.totalorder %s18, 3
      %s650 = scalar_select %p649, %s18, 3
      %s651 = scalar_lea.vmem %s5, %s650
      %p652 = scmp.lt.s32.totalorder %s18, 3
      %s653 = scalar_select %p652, %s18, 3
      %s654 = scalar_lea.vmem %s6, %s653
      // Predicated region
      $region37: #{conv5_block.10} parent=35 // pred_check
        %p655 = pneg %p125
      $region38: #{conv5_block.10} parent=35 // pred_check_branch
        %657 = sbr.rel (%p655) target = $region40
      $region39: #{conv5_block.10} parent=35 // pred_region
        %s658 = smul.u32 16, %s18
      $region40: #{conv5_block.10} parent=35 // pred_fallthru
        _
      // Predicated region
      $region41: #{conv5_block.10} parent=35 // pred_check
        %p659 = pneg %p151
      $region42: #{conv5_block.10} parent=35 // pred_check_branch
        %661 = sbr.rel (%p659) target = $region44
      $region43: #{conv5_block.10} parent=35 // pred_region
        _
      $region44: #{conv5_block.10} parent=35 // pred_fallthru
        _
      // Predicated region
      $region45: #{conv5_block.10} parent=35 // pred_check
        %p662 = pneg %p177
      $region46: #{conv5_block.10} parent=35 // pred_check_branch
        %664 = sbr.rel (%p662) target = $region48
      $region47: #{conv5_block.10} parent=35 // pred_region
        _
      $region48: #{conv5_block.10} parent=35 // pred_fallthru
        _
    $region36: #{conv5_block.10} parent=5 // pred_fallthru
      _
    %p665 = scmp.le.s32.totalorder 2, %s13
    // Predicated region
    $region49: #{conv5_block.10} parent=5 // pred_check
      %p666 = pneg %p665
    $region50: #{conv5_block.10} parent=5 // pred_check_branch
      %668 = sbr.rel (%p666) target = $region52
    $region51: #{conv5_block.10} parent=5 // pred_region
      %s669 = ssub.s32 %s13, 2
      // Predicated region
      $region53: #{conv5_block.10} parent=51 // pred_check
        %p670 = pneg %p131
      $region54: #{conv5_block.10} parent=51 // pred_check_branch
        %672 = sbr.rel (%p670) target = $region56
      $region55: #{conv5_block.10} parent=51 // pred_region
        %s673 = smul.u32 16, %s19
        %p674 = scmp.lt.s32.totalorder %s673, 63
        %s675 = scalar_select %p674, %s673, 63
        %s676 = smul.addr %s675, 8
        %s677 = scalar_lea.vmem %s4, %s676
      $region56: #{conv5_block.10} parent=51 // pred_fallthru
        _
      // Predicated region
      $region57: #{conv5_block.10} parent=51 // pred_check
        %p678 = pneg %p157
      $region58: #{conv5_block.10} parent=51 // pred_check_branch
        %680 = sbr.rel (%p678) target = $region60
      $region59: #{conv5_block.10} parent=51 // pred_region
        %p681 = scmp.lt.s32.totalorder %s19, 3
        %s682 = scalar_select %p681, %s19, 3
        %s683 = scalar_lea.vmem %s5, %s682
      $region60: #{conv5_block.10} parent=51 // pred_fallthru
        _
      // Predicated region
      $region61: #{conv5_block.10} parent=51 // pred_check
        %p684 = pneg %p183
      $region62: #{conv5_block.10} parent=51 // pred_check_branch
        %686 = sbr.rel (%p684) target = $region64
      $region63: #{conv5_block.10} parent=51 // pred_region
        %p687 = scmp.lt.s32.totalorder %s19, 3
        %s688 = scalar_select %p687, %s19, 3
        %s689 = scalar_lea.vmem %s6, %s688
      $region64: #{conv5_block.10} parent=51 // pred_fallthru
        _
    $region52: #{conv5_block.10} parent=5 // pred_fallthru
      _
  $region6: #{conv5_block.10} parent=0 // loop_footer
    %s17 = sadd.s32 1, %s13
  $region7: #{conv5_block.10} parent=0 // loop_footer_branch
    %12 = sbr.rel target = $region3
  $region8: #{conv5_block.10} parent=0 // loop_exit
    _

// kernel: conv5_block.11
$region0: #{conv5_block.11}
  #allocation0 [shape = 'u32[]', space=smem, size = 0x4, offset = 0x4, fixed_abs, tag = 'smem constant byte address 0x4 - core index']
  #allocation1 [shape = 'u32[144,128]{1,0:T(1,128)}', space=vmem, size = 0x12000, scoped, tag = 'internal scratch']
  %s0 = inlined_call_operand.vmem [shape: f32[512,128], index: 0, kind: input, shape index: {}]
  %s1 = inlined_call_operand.vmem [shape: f32[1,128], index: 1, kind: input, shape index: {}]
  %s2 = inlined_call_operand.vmem [shape: f32[1,128], index: 2, kind: input, shape index: {}]
  %s3 = inlined_call_operand.vmem [shape: f32[512,128], index: 3, kind: output, shape index: {}]
  %s4 = sld [smem:[#allocation0]]
  $region45: #{conv5_block.11} parent=0
    _
  %s6 = ssub.s32 1, %s4
  %s7 = scalar_select 0, %s6, %s4
  loop: start=0, step=1, limit=6
  $region2: #{conv5_block.11} parent=0 // loop_pre_header
    _
  $region3: #{conv5_block.11} parent=0 // loop_header
    %s9 = sphi 0, %s13
    %p10 = scmp.ge.s32.totalorder %s9, 6
    %s19 = sphi 0, %s21
    %s22 = sphi 0, %s19
    %s23 = sphi 0, %s22
    %s39 = sphi 0, %s23
    %s43 = sphi 0, %s43
    %s45 = sphi 0, %s43
    %s46 = sphi 0, %s45
    %s60 = sphi 0, %s46
    %s64 = sphi 0, %s64
    %s66 = sphi 0, %s64
    %s67 = sphi 0, %s66
    %s81 = sphi 0, %s67
    %s87 = sphi 0, %s89
    %s90 = sphi 0, %s87
    %s91 = sphi 0, %s90
    %s107 = sphi 0, %s91
  $region4: #{conv5_block.11} parent=0 // loop_header_branch
    %12 = sbr.rel (%p10) target = $region8
  $region5: #{conv5_block.11} parent=0 // loop_body
    %s14 = ssub.s32 %s9, 1
    %s15 = ssub.s32 %s9, 2
    %s16 = sadd.s32 %s9, 1
    %s17 = ssub.s32 %s9, %s16
    %p18 = scmp.eq.s32.totalorder %s17, 0
    %s20 = sadd.s32 %s19, 1
    %s21 = scalar_select %p18, %s19, %s20
    %p24 = pneg %p18
    %p25 = scmp.eq.s32.totalorder %s9, 3
    %p26 = por %p24, %p25
    %p27 = scmp.ne.s32.totalorder %s19, %s22
    %p28 = scmp.eq.s32.totalorder %s9, 0
    %p29 = por %p27, %p28
    %p30 = scmp.ne.s32.totalorder %s19, %s22
    %p31 = scmp.eq.s32.totalorder %s14, 3
    %p32 = por %p30, %p31
    %p33 = scmp.ne.s32.totalorder %s22, %s23
    %p34 = scmp.eq.s32.totalorder %s14, 0
    %p35 = por %p33, %p34
    %p36 = scmp.ne.s32.totalorder %s22, %s23
    %p37 = scmp.eq.s32.totalorder %s15, 3
    %p38 = por %p36, %p37
    %p40 = scmp.ne.s32.totalorder %s23, %s39
    %p41 = scmp.eq.s32.totalorder %s15, 0
    %p42 = por %p40, %p41
    %s44 = sadd.s32 %s43, 1
    %p47 = scmp.eq.s32.totalorder %s9, 3
    %p48 = scmp.ne.s32.totalorder %s43, %s45
    %p49 = scmp.eq.s32.totalorder %s9, 0
    %p50 = por %p48, %p49
    %p51 = scmp.ne.s32.totalorder %s43, %s45
    %p52 = scmp.eq.s32.totalorder %s14, 3
    %p53 = por %p51, %p52
    %p54 = scmp.ne.s32.totalorder %s45, %s46
    %p55 = scmp.eq.s32.totalorder %s14, 0
    %p56 = por %p54, %p55
    %p57 = scmp.ne.s32.totalorder %s45, %s46
    %p58 = scmp.eq.s32.totalorder %s15, 3
    %p59 = por %p57, %p58
    %p61 = scmp.ne.s32.totalorder %s46, %s60
    %p62 = scmp.eq.s32.totalorder %s15, 0
    %p63 = por %p61, %p62
    %s65 = sadd.s32 %s64, 1
    %p68 = scmp.eq.s32.totalorder %s9, 3
    %p69 = scmp.ne.s32.totalorder %s64, %s66
    %p70 = scmp.eq.s32.totalorder %s9, 0
    %p71 = por %p69, %p70
    %p72 = scmp.ne.s32.totalorder %s64, %s66
    %p73 = scmp.eq.s32.totalorder %s14, 3
    %p74 = por %p72, %p73
    %p75 = scmp.ne.s32.totalorder %s66, %s67
    %p76 = scmp.eq.s32.totalorder %s14, 0
    %p77 = por %p75, %p76
    %p78 = scmp.ne.s32.totalorder %s66, %s67
    %p79 = scmp.eq.s32.totalorder %s15, 3
    %p80 = por %p78, %p79
    %p82 = scmp.ne.s32.totalorder %s67, %s81
    %p83 = scmp.eq.s32.totalorder %s15, 0
    %p84 = por %p82, %p83
    %s85 = ssub.s32 %s9, %s16
    %p86 = scmp.eq.s32.totalorder %s85, 0
    %s88 = sadd.s32 %s87, 1
    %s89 = scalar_select %p86, %s87, %s88
    %p92 = pneg %p86
    %p93 = scmp.eq.s32.totalorder %s9, 3
    %p94 = por %p92, %p93
    %p95 = scmp.ne.s32.totalorder %s87, %s90
    %p96 = scmp.eq.s32.totalorder %s9, 0
    %p97 = por %p95, %p96
    %p98 = scmp.ne.s32.totalorder %s87, %s90
    %p99 = scmp.eq.s32.totalorder %s14, 3
    %p100 = por %p98, %p99
    %p101 = scmp.ne.s32.totalorder %s90, %s91
    %p102 = scmp.eq.s32.totalorder %s14, 0
    %p103 = por %p101, %p102
    %p104 = scmp.ne.s32.totalorder %s90, %s91
    %p105 = scmp.eq.s32.totalorder %s15, 3
    %p106 = por %p104, %p105
    %p108 = scmp.ne.s32.totalorder %s91, %s107
    %p109 = scmp.eq.s32.totalorder %s15, 0
    %p110 = por %p108, %p109
    %p111 = scmp.le.s32.totalorder 1, %s9
    %p112 = scmp.lt.s32.totalorder %s9, 5
    %p113 = pnand %p111, %p112
    %p114 = pneg %p113
    // Predicated region
    $region9: #{conv5_block.11} parent=5 // pred_check
      _
    $region10: #{conv5_block.11} parent=5 // pred_check_branch
      %116 = sbr.rel (%p113) target = $region12
    $region11: #{conv5_block.11} parent=5 // pred_region
      %s117 = ssub.s32 %s9, 1
      // Predicated region
      $region13: #{conv5_block.11} parent=11 // pred_check
        %p118 = pneg %p56
      $region14: #{conv5_block.11} parent=11 // pred_check_branch
        %120 = sbr.rel (%p118) target = $region16
      $region15: #{conv5_block.11} parent=11 // pred_region
        _
      $region16: #{conv5_block.11} parent=11 // pred_fallthru
        _
      // Predicated region
      $region17: #{conv5_block.11} parent=11 // pred_check
        %p121 = pneg %p77
      $region18: #{conv5_block.11} parent=11 // pred_check_branch
        %123 = sbr.rel (%p121) target = $region20
      $region19: #{conv5_block.11} parent=11 // pred_region
        _
      $region20: #{conv5_block.11} parent=11 // pred_fallthru
        _
    $region12: #{conv5_block.11} parent=5 // pred_fallthru
      _
    %p124 = scmp.lt.s32.totalorder %s9, 4
    // Predicated region
    $region21: #{conv5_block.11} parent=5 // pred_check
      %p125 = pneg %p124
    $region22: #{conv5_block.11} parent=5 // pred_check_branch
      %127 = sbr.rel (%p125) target = $region24
    $region23: #{conv5_block.11} parent=5 // pred_region
      // Predicated region
      $region25: #{conv5_block.11} parent=23 // pred_check
        %p128 = pneg %p29
      $region26: #{conv5_block.11} parent=23 // pred_check_branch
        %130 = sbr.rel (%p128) target = $region28
      $region27: #{conv5_block.11} parent=23 // pred_region
        %s131 = smul.u32 16, %s9
        %p132 = scmp.lt.s32.totalorder %s131, 63
        %s133 = scalar_select %p132, %s131, 63
        %s134 = smul.addr %s133, 8
        %s135 = scalar_lea.vmem %s0, %s134
        %s136 = smul.u32 16, %s9
      $region28: #{conv5_block.11} parent=23 // pred_fallthru
        _
    $region24: #{conv5_block.11} parent=5 // pred_fallthru
      _
    %p137 = scmp.le.s32.totalorder 1, %s9
    %p138 = scmp.lt.s32.totalorder %s9, 5
    %p139 = pnand %p137, %p138
    %p140 = pneg %p139
    // Predicated region
    $region29: #{conv5_block.11} parent=5 // pred_check
      _
    $region30: #{conv5_block.11} parent=5 // pred_check_branch
      %142 = sbr.rel (%p139) target = $region32
    $region31: #{conv5_block.11} parent=5 // pred_region
      %s143 = ssub.s32 %s9, 1
      %s144 = smul.u32 16, %s14
      %p145 = scmp.lt.s32.totalorder %s144, 63
      %s146 = scalar_select %p145, %s144, 63
      %s147 = smul.addr %s146, 8
      %s148 = scalar_lea.vmem %s0, %s147
      %p149 = pneg %p35
      %p150 = pneg %p32
      %p151 = pneg %p56
      %p152 = pneg %p53
      %p153 = pneg %p77
      %p154 = pneg %p74
      %p155 = pneg %p103
      %p156 = pneg %p100
      %s157 = smul.u32 16, %s14
      %p158 = scmp.lt.s32.totalorder %s157, 63
      %s159 = scalar_select %p158, %s157, 63
      %s160 = smul.addr %s159, 8
      %s161 = scalar_lea.vmem %s3, %s160
      %s162 = smul.u32 16, %s14
      %p163 = scmp.lt.s32.totalorder %s162, 63
      %s164 = scalar_select %p163, %s162, 63
      %s165 = smul.addr %s164, 8
      %s166 = scalar_lea.vmem %s0, %s165
      %s167 = smul.u32 16, %s14
      %s168 = smul.u32 16, %s14
      %p169 = scmp.lt.s32.totalorder %s168, 63
      %s170 = scalar_select %p169, %s168, 63
      %s171 = smul.addr %s170, 8
      %s172 = scalar_lea.vmem %s3, %s171
      %s173 = smul.u32 16, %s14
      %v174 = vld [vmem:[%s166] sm:$0xff]
      %v175 = vld [vmem:[%s166 + $0x8] sm:$0xff]
      %v176 = vld [vmem:[%s166 + $0x10] sm:$0xff]
      %v177 = vld [vmem:[%s166 + $0x18] sm:$0xff]
      %v178 = vld [vmem:[%s166 + $0x20] sm:$0xff]
      %v179 = vld [vmem:[%s166 + $0x28] sm:$0xff]
      %v180 = vld [vmem:[%s166 + $0x30] sm:$0xff]
      %v181 = vld [vmem:[%s166 + $0x38] sm:$0xff]
      %v182 = vld [vmem:[%s166 + $0x40] sm:$0xff]
      %v183 = vld [vmem:[%s166 + $0x48] sm:$0xff]
      %v184 = vld [vmem:[%s166 + $0x50] sm:$0xff]
      %v185 = vld [vmem:[%s166 + $0x58] sm:$0xff]
      %v186 = vld [vmem:[%s166 + $0x60] sm:$0xff]
      %v187 = vld [vmem:[%s166 + $0x68] sm:$0xff]
      %v188 = vld [vmem:[%s166 + $0x70] sm:$0xff]
      %v189 = vld [vmem:[%s166 + $0x78] sm:$0xff]
      %v190 = vld [vmem:[%s1] sm:$0x1]
      %v192 = vlaneseq
      %v193 = vshrl.u32 %v192, 7
      %v194 = vsub.s32 0, %v193
      %v195 = vrot.slane %v190, %v194
      %v197 = vmul.f32 %v174, %v195
      %v198 = vmul.f32 %v175, %v195
      %v199 = vmul.f32 %v176, %v195
      %v200 = vmul.f32 %v177, %v195
      %v201 = vmul.f32 %v178, %v195
      %v202 = vmul.f32 %v179, %v195
      %v203 = vmul.f32 %v180, %v195
      %v204 = vmul.f32 %v181, %v195
      %v205 = vmul.f32 %v182, %v195
      %v206 = vmul.f32 %v183, %v195
      %v207 = vmul.f32 %v184, %v195
      %v208 = vmul.f32 %v185, %v195
      %v209 = vmul.f32 %v186, %v195
      %v210 = vmul.f32 %v187, %v195
      %v211 = vmul.f32 %v188, %v195
      %v212 = vmul.f32 %v189, %v195
      %v213 = vld [vmem:[%s2] sm:$0x1]
      %v215 = vlaneseq
      %v216 = vshrl.u32 %v215, 7
      %v217 = vsub.s32 0, %v216
      %v218 = vrot.slane %v213, %v217
      %v220 = vadd.f32 %v197, %v218
      %v221 = vadd.f32 %v198, %v218
      %v222 = vadd.f32 %v199, %v218
      %v223 = vadd.f32 %v200, %v218
      %v224 = vadd.f32 %v201, %v218
      %v225 = vadd.f32 %v202, %v218
      %v226 = vadd.f32 %v203, %v218
      %v227 = vadd.f32 %v204, %v218
      %v228 = vadd.f32 %v205, %v218
      %v229 = vadd.f32 %v206, %v218
      %v230 = vadd.f32 %v207, %v218
      %v231 = vadd.f32 %v208, %v218
      %v232 = vadd.f32 %v209, %v218
      %v233 = vadd.f32 %v210, %v218
      %v234 = vadd.f32 %v211, %v218
      %v235 = vadd.f32 %v212, %v218
      %vm236 = vcmp.gt.f32.partialorder %v220, 0.0
      %vm237 = vcmp.gt.f32.partialorder %v221, 0.0
      %vm238 = vcmp.gt.f32.partialorder %v222, 0.0
      %vm239 = vcmp.gt.f32.partialorder %v223, 0.0
      %vm240 = vcmp.gt.f32.partialorder %v224, 0.0
      %vm241 = vcmp.gt.f32.partialorder %v225, 0.0
      %vm242 = vcmp.gt.f32.partialorder %v226, 0.0
      %vm243 = vcmp.gt.f32.partialorder %v227, 0.0
      %vm244 = vcmp.gt.f32.partialorder %v228, 0.0
      %vm245 = vcmp.gt.f32.partialorder %v229, 0.0
      %vm246 = vcmp.gt.f32.partialorder %v230, 0.0
      %vm247 = vcmp.gt.f32.partialorder %v231, 0.0
      %vm248 = vcmp.gt.f32.partialorder %v232, 0.0
      %vm249 = vcmp.gt.f32.partialorder %v233, 0.0
      %vm250 = vcmp.gt.f32.partialorder %v234, 0.0
      %vm251 = vcmp.gt.f32.partialorder %v235, 0.0
      %v252 = vmul.f32 %v220, 0.1
      %v253 = vmul.f32 %v221, 0.1
      %v254 = vmul.f32 %v222, 0.1
      %v255 = vmul.f32 %v223, 0.1
      %v256 = vmul.f32 %v224, 0.1
      %v257 = vmul.f32 %v225, 0.1
      %v258 = vmul.f32 %v226, 0.1
      %v259 = vmul.f32 %v227, 0.1
      %v260 = vmul.f32 %v228, 0.1
      %v261 = vmul.f32 %v229, 0.1
      %v262 = vmul.f32 %v230, 0.1
      %v263 = vmul.f32 %v231, 0.1
      %v264 = vmul.f32 %v232, 0.1
      %v265 = vmul.f32 %v233, 0.1
      %v266 = vmul.f32 %v234, 0.1
      %v267 = vmul.f32 %v235, 0.1
      %v268 = vsel %vm236, %v220, %v252
      %v269 = vsel %vm237, %v221, %v253
      %v270 = vsel %vm238, %v222, %v254
      %v271 = vsel %vm239, %v223, %v255
      %v272 = vsel %vm240, %v224, %v256
      %v273 = vsel %vm241, %v225, %v257
      %v274 = vsel %vm242, %v226, %v258
      %v275 = vsel %vm243, %v227, %v259
      %v276 = vsel %vm244, %v228, %v260
      %v277 = vsel %vm245, %v229, %v261
      %v278 = vsel %vm246, %v230, %v262
      %v279 = vsel %vm247, %v231, %v263
      %v280 = vsel %vm248, %v232, %v264
      %v281 = vsel %vm249, %v233, %v265
      %v282 = vsel %vm250, %v234, %v266
      %v283 = vsel %vm251, %v235, %v267
      %284 = vst [vmem:[%s172] sm:$0xff] %v268
      %285 = vst [vmem:[%s172 + $0x8] sm:$0xff] %v269
      %286 = vst [vmem:[%s172 + $0x10] sm:$0xff] %v270
      %287 = vst [vmem:[%s172 + $0x18] sm:$0xff] %v271
      %288 = vst [vmem:[%s172 + $0x20] sm:$0xff] %v272
      %289 = vst [vmem:[%s172 + $0x28] sm:$0xff] %v273
      %290 = vst [vmem:[%s172 + $0x30] sm:$0xff] %v274
      %291 = vst [vmem:[%s172 + $0x38] sm:$0xff] %v275
      %292 = vst [vmem:[%s172 + $0x40] sm:$0xff] %v276
      %293 = vst [vmem:[%s172 + $0x48] sm:$0xff] %v277
      %294 = vst [vmem:[%s172 + $0x50] sm:$0xff] %v278
      %295 = vst [vmem:[%s172 + $0x58] sm:$0xff] %v279
      %296 = vst [vmem:[%s172 + $0x60] sm:$0xff] %v280
      %297 = vst [vmem:[%s172 + $0x68] sm:$0xff] %v281
      %298 = vst [vmem:[%s172 + $0x70] sm:$0xff] %v282
      %299 = vst [vmem:[%s172 + $0x78] sm:$0xff] %v283
      %s300 = smul.u32 16, %s14
      %p301 = scmp.lt.s32.totalorder %s300, 63
      %s302 = scalar_select %p301, %s300, 63
      %s303 = smul.addr %s302, 8
      %s304 = scalar_lea.vmem %s3, %s303
      // Predicated region
      $region33: #{conv5_block.11} parent=31 // pred_check
        %p305 = pneg %p100
      $region34: #{conv5_block.11} parent=31 // pred_check_branch
        %307 = sbr.rel (%p305) target = $region36
      $region35: #{conv5_block.11} parent=31 // pred_region
        %s308 = smul.u32 16, %s14
      $region36: #{conv5_block.11} parent=31 // pred_fallthru
        _
    $region32: #{conv5_block.11} parent=5 // pred_fallthru
      _
    %p309 = scmp.le.s32.totalorder 2, %s9
    // Predicated region
    $region37: #{conv5_block.11} parent=5 // pred_check
      %p310 = pneg %p309
    $region38: #{conv5_block.11} parent=5 // pred_check_branch
      %312 = sbr.rel (%p310) target = $region40
    $region39: #{conv5_block.11} parent=5 // pred_region
      %s313 = ssub.s32 %s9, 2
      // Predicated region
      $region41: #{conv5_block.11} parent=39 // pred_check
        %p314 = pneg %p106
      $region42: #{conv5_block.11} parent=39 // pred_check_branch
        %316 = sbr.rel (%p314) target = $region44
      $region43: #{conv5_block.11} parent=39 // pred_region
        %s317 = smul.u32 16, %s15
        %p318 = scmp.lt.s32.totalorder %s317, 63
        %s319 = scalar_select %p318, %s317, 63
        %s320 = smul.addr %s319, 8
        %s321 = scalar_lea.vmem %s3, %s320
      $region44: #{conv5_block.11} parent=39 // pred_fallthru
        _
    $region40: #{conv5_block.11} parent=5 // pred_fallthru
      _
  $region6: #{conv5_block.11} parent=0 // loop_footer
    %s13 = sadd.s32 1, %s9
  $region7: #{conv5_block.11} parent=0 // loop_footer_branch
    %8 = sbr.rel target = $region3
  $region8: #{conv5_block.11} parent=0 // loop_exit
    _

// kernel: conv5_block.7
$region0: #{conv5_block.7}
  #allocation0 [shape = 'u32[]', space=smem, size = 0x4, offset = 0x4, fixed_abs, tag = 'smem constant byte address 0x4 - core index']
  #allocation1 [shape = 'u32[144,128]{1,0:T(1,128)}', space=vmem, size = 0x12000, scoped, tag = 'internal scratch']
  #allocation2 [shape = 'bf16[2,10,24,128]{3,2,1,0:T(8,128)(2,1)}', space=vmem, size = 0x1e000, scoped, tag = 'scratch operand']
  #allocation3 [shape = 's32[2]{0}', space=sflag, size = 0x8, scoped, tag = 'scratch operand']
  #allocation4 [shape = 's32[]', space=sflag, size = 0x4, offset = 0, fixed_abs, tag = 'sflag constant byte address 0x0 - dummy sync flag']
  #allocation5 [shape = 's32[]', space=sflag, size = 0x4, offset = 0, fixed_abs, tag = 'sflag constant byte address 0x0 - dummy sync flag']
  %s0 = inlined_call_operand.vmem [shape: bf16[2,18,24,128], index: 0, kind: input, shape index: {}]
  %s1 = inlined_call_operand.vmem [shape: bf16[3,3,128,128], index: 1, kind: input, shape index: {}]
  %s2 = inlined_call_operand.vmem [shape: bf16[2,16,16,128], index: 2, kind: output, shape index: {0}]
  %s3 = inlined_call_operand.vmem [shape: f32[2,2,1,128], index: 3, kind: output, shape index: {1}]
  %s4 = inlined_call_operand.vmem [shape: f32[2,2,1,128], index: 4, kind: output, shape index: {2}]
  %5 = xla_tuple %s2, %s3, %s4
  %s6 = sld [smem:[#allocation0]]
  $region129: #{conv5_block.7} parent=0
    _
  %s8 = ssub.s32 1, %s6
  %s9 = scalar_select 0, %s8, %s6
  loop: start=0, step=1, limit=6
  $region2: #{conv5_block.7} parent=0 // loop_pre_header
    _
  $region3: #{conv5_block.7} parent=0 // loop_header
    %s11 = sphi 0, %s15
    %p12 = scmp.ge.s32.totalorder %s11, 6
    %s18 = sphi 0, %s30
    %s19 = sphi 0, %s26
    %s20 = sphi 0, %s18
    %s21 = sphi 0, %s19
    %s22 = sphi 0, %s20
    %s23 = sphi 0, %s21
    %s31 = sphi 0, %s31
    %s33 = sphi 0, %s31
    %s34 = sphi 0, %s33
    %s48 = sphi 0, %s34
    %s56 = sphi 0, %s58
    %s59 = sphi 0, %s56
    %s60 = sphi 0, %s59
    %s76 = sphi 0, %s60
    %s84 = sphi 0, %s86
    %s87 = sphi 0, %s84
    %s88 = sphi 0, %s87
    %s104 = sphi 0, %s88
    %s112 = sphi 0, %s114
    %s115 = sphi 0, %s112
    %s116 = sphi 0, %s115
    %s132 = sphi 0, %s116
  $region4: #{conv5_block.7} parent=0 // loop_header_branch
    %14 = sbr.rel (%p12) target = $region8
  $region5: #{conv5_block.7} parent=0 // loop_body
    %s16 = ssub.s32 %s11, 1
    %s17 = ssub.s32 %s11, 2
    %s24 = sadd.s32 1, %s19
    %p25 = scmp.ge.s32.totalorder %s24, 2
    %s26 = scalar_select %p25, 0, %s24
    %s27 = sadd.s32 1, %s18
    %s28 = scalar_select %p25, %s27, %s18
    %p29 = scmp.ge.s32.totalorder %s28, 2
    %s30 = scalar_select %p29, 0, %s28
    %s32 = sadd.s32 %s31, 1
    %p35 = scmp.eq.s32.totalorder %s11, 3
    %p36 = scmp.ne.s32.totalorder %s31, %s33
    %p37 = scmp.eq.s32.totalorder %s11, 0
    %p38 = por %p36, %p37
    %p39 = scmp.ne.s32.totalorder %s31, %s33
    %p40 = scmp.eq.s32.totalorder %s16, 3
    %p41 = por %p39, %p40
    %p42 = scmp.ne.s32.totalorder %s33, %s34
    %p43 = scmp.eq.s32.totalorder %s16, 0
    %p44 = por %p42, %p43
    %p45 = scmp.ne.s32.totalorder %s33, %s34
    %p46 = scmp.eq.s32.totalorder %s17, 3
    %p47 = por %p45, %p46
    %p49 = scmp.ne.s32.totalorder %s34, %s48
    %p50 = scmp.eq.s32.totalorder %s17, 0
    %p51 = por %p49, %p50
    %s52 = ssub.s32 %s18, %s30
    %s53 = ssub.s32 %s19, %s26
    %s54 = sor.u32 %s52, %s53
    %p55 = scmp.eq.s32.totalorder %s54, 0
    %s57 = sadd.s32 %s56, 1
    %s58 = scalar_select %p55, %s56, %s57
    %p61 = pneg %p55
    %p62 = scmp.eq.s32.totalorder %s11, 3
    %p63 = por %p61, %p62
    %p64 = scmp.ne.s32.totalorder %s56, %s59
    %p65 = scmp.eq.s32.totalorder %s11, 0
    %p66 = por %p64, %p65
    %p67 = scmp.ne.s32.totalorder %s56, %s59
    %p68 = scmp.eq.s32.totalorder %s16, 3
    %p69 = por %p67, %p68
    %p70 = scmp.ne.s32.totalorder %s59, %s60
    %p71 = scmp.eq.s32.totalorder %s16, 0
    %p72 = por %p70, %p71
    %p73 = scmp.ne.s32.totalorder %s59, %s60
    %p74 = scmp.eq.s32.totalorder %s17, 3
    %p75 = por %p73, %p74
    %p77 = scmp.ne.s32.totalorder %s60, %s76
    %p78 = scmp.eq.s32.totalorder %s17, 0
    %p79 = por %p77, %p78
    %s80 = ssub.s32 %s18, %s30
    %s81 = ssub.s32 %s19, %s26
    %s82 = sor.u32 %s80, %s81
    %p83 = scmp.eq.s32.totalorder %s82, 0
    %s85 = sadd.s32 %s84, 1
    %s86 = scalar_select %p83, %s84, %s85
    %p89 = pneg %p83
    %p90 = scmp.eq.s32.totalorder %s11, 3
    %p91 = por %p89, %p90
    %p92 = scmp.ne.s32.totalorder %s84, %s87
    %p93 = scmp.eq.s32.totalorder %s11, 0
    %p94 = por %p92, %p93
    %p95 = scmp.ne.s32.totalorder %s84, %s87
    %p96 = scmp.eq.s32.totalorder %s16, 3
    %p97 = por %p95, %p96
    %p98 = scmp.ne.s32.totalorder %s87, %s88
    %p99 = scmp.eq.s32.totalorder %s16, 0
    %p100 = por %p98, %p99
    %p101 = scmp.ne.s32.totalorder %s87, %s88
    %p102 = scmp.eq.s32.totalorder %s17, 3
    %p103 = por %p101, %p102
    %p105 = scmp.ne.s32.totalorder %s88, %s104
    %p106 = scmp.eq.s32.totalorder %s17, 0
    %p107 = por %p105, %p106
    %s108 = ssub.s32 %s18, %s30
    %s109 = ssub.s32 %s19, %s26
    %s110 = sor.u32 %s108, %s109
    %p111 = scmp.eq.s32.totalorder %s110, 0
    %s113 = sadd.s32 %s112, 1
    %s114 = scalar_select %p111, %s112, %s113
    %p117 = pneg %p111
    %p118 = scmp.eq.s32.totalorder %s11, 3
    %p119 = por %p117, %p118
    %p120 = scmp.ne.s32.totalorder %s112, %s115
    %p121 = scmp.eq.s32.totalorder %s11, 0
    %p122 = por %p120, %p121
    %p123 = scmp.ne.s32.totalorder %s112, %s115
    %p124 = scmp.eq.s32.totalorder %s16, 3
    %p125 = por %p123, %p124
    %p126 = scmp.ne.s32.totalorder %s115, %s116
    %p127 = scmp.eq.s32.totalorder %s16, 0
    %p128 = por %p126, %p127
    %p129 = scmp.ne.s32.totalorder %s115, %s116
    %p130 = scmp.eq.s32.totalorder %s17, 3
    %p131 = por %p129, %p130
    %p133 = scmp.ne.s32.totalorder %s116, %s132
    %p134 = scmp.eq.s32.totalorder %s17, 0
    %p135 = por %p133, %p134
    %p136 = scmp.le.s32.totalorder 1, %s11
    %p137 = scmp.lt.s32.totalorder %s11, 5
    %p138 = pnand %p136, %p137
    %p139 = pneg %p138
    // Predicated region
    $region9: #{conv5_block.7} parent=5 // pred_check
      _
    $region10: #{conv5_block.7} parent=5 // pred_check_branch
      %141 = sbr.rel (%p138) target = $region12
    $region11: #{conv5_block.7} parent=5 // pred_region
      %s142 = ssub.s32 %s11, 1
      // Predicated region
      $region13: #{conv5_block.7} parent=11 // pred_check
        %p143 = pneg %p44
      $region14: #{conv5_block.7} parent=11 // pred_check_branch
        %145 = sbr.rel (%p143) target = $region16
      $region15: #{conv5_block.7} parent=11 // pred_region
        _
      $region16: #{conv5_block.7} parent=11 // pred_fallthru
        _
    $region12: #{conv5_block.7} parent=5 // pred_fallthru
      _
    %p146 = scmp.lt.s32.totalorder %s11, 4
    // Predicated region
    $region17: #{conv5_block.7} parent=5 // pred_check
      %p147 = pneg %p146
    $region18: #{conv5_block.7} parent=5 // pred_check_branch
      %149 = sbr.rel (%p147) target = $region20
    $region19: #{conv5_block.7} parent=5 // pred_region
      _
    $region20: #{conv5_block.7} parent=5 // pred_fallthru
      _
    %p150 = scmp.le.s32.totalorder 1, %s11
    %p151 = scmp.lt.s32.totalorder %s11, 5
    %p152 = pnand %p150, %p151
    %p153 = pneg %p152
    // Predicated region
    $region21: #{conv5_block.7} parent=5 // pred_check
      _
    $region22: #{conv5_block.7} parent=5 // pred_check_branch
      %155 = sbr.rel (%p152) target = $region24
    $region23: #{conv5_block.7} parent=5 // pred_region
      %s156 = ssub.s32 %s11, 1
      %p157 = pneg %p44
      %p158 = pneg %p41
      %p159 = pneg %p72
      %p160 = pneg %p69
      %s161 = smul.u32 8, %s21
      %p162 = scmp.lt.s32.totalorder %s20, 1
      %s163 = scalar_select %p162, %s20, 1
      %p164 = scmp.lt.s32.totalorder %s161, 15
      %s165 = scalar_select %p164, %s161, 15
      %s166 = smul.addr %s165, 2
      %s167 = smul.addr %s163, 32
      %s168 = sadd.s32 %s166, %s167
      %s169 = smul.addr %s168, 4
      %s170 = scalar_lea.vmem %s2, %s169
      %p171 = pneg %p100
      %p172 = pneg %p97
      %p173 = scmp.lt.s32.totalorder %s20, 1
      %s174 = scalar_select %p173, %s20, 1
      %p175 = scmp.lt.s32.totalorder %s21, 1
      %s176 = scalar_select %p175, %s21, 1
      %s177 = smul.addr %s174, 2
      %s178 = sadd.s32 %s176, %s177
      %s179 = scalar_lea.vmem %s3, %s178
      %p180 = pneg %p128
      %p181 = pneg %p125
      %p182 = scmp.lt.s32.totalorder %s20, 1
      %s183 = scalar_select %p182, %s20, 1
      %p184 = scmp.lt.s32.totalorder %s21, 1
      %s185 = scalar_select %p184, %s21, 1
      %s186 = smul.addr %s183, 2
      %s187 = sadd.s32 %s185, %s186
      %s188 = scalar_lea.vmem %s4, %s187
      %s189 = smul.u32 8, %s21
      %p190 = scmp.lt.s32.totalorder %s20, 1
      %s191 = scalar_select %p190, %s20, 1
      %p192 = scmp.lt.s32.totalorder %s189, 15
      %s193 = scalar_select %p192, %s189, 15
      %s194 = smul.addr %s193, 2
      %s195 = smul.addr %s191, 32
      %s196 = sadd.s32 %s194, %s195
      %s197 = smul.addr %s196, 4
      %s198 = scalar_lea.vmem %s2, %s197
      %s199 = smul.u32 8, %s21
      %p200 = scmp.lt.s32.totalorder %s20, 1
      %s201 = scalar_select %p200, %s20, 1
      %p202 = scmp.lt.s32.totalorder %s21, 1
      %s203 = scalar_select %p202, %s21, 1
      %s204 = smul.addr %s201, 2
      %s205 = sadd.s32 %s203, %s204
      %s206 = scalar_lea.vmem %s3, %s205
      %p207 = scmp.lt.s32.totalorder %s20, 1
      %s208 = scalar_select %p207, %s20, 1
      %p209 = scmp.lt.s32.totalorder %s21, 1
      %s210 = scalar_select %p209, %s21, 1
      %s211 = smul.addr %s208, 2
      %s212 = sadd.s32 %s210, %s211
      %s213 = scalar_lea.vmem %s4, %s212
      %p215 = scmp.eq.s32.totalorder %s21, 0
      // Predicated region
      $region25: #{conv5_block.7} parent=23 // pred_check
        %p216 = pneg %p215
      $region26: #{conv5_block.7} parent=23 // pred_check_branch
        %218 = sbr.rel (%p216) target = $region28
      $region27: #{conv5_block.7} parent=23 // pred_region
        %s219 = smul.u32 %s20, 54
        %s220 = smul.addr %s219, 4
        %s221 = scalar_lea.vmem %s0, %s220
        %p223 = scmp.lt.u32.totalorder 120, 8
        %p224 = pneg %p223
        // Predicated region
        $region29: #{conv5_block.7} parent=27 // pred_check
          _
        $region30: #{conv5_block.7} parent=27 // pred_check_branch
          %226 = sbr.rel (%p223) target = $region32
        $region31: #{conv5_block.7} parent=27 // pred_region
          %s242 = sand.u32 120, 7
          %p243 = scmp.eq.s32.totalorder %s242, 0
          // Predicated region
          $region44: #{conv5_block.7} parent=31 // pred_check
            %p244 = pneg %p243
          $region45: #{conv5_block.7} parent=31 // pred_check_branch
            %246 = sbr.rel (%p244) target = $region47
          $region46: #{conv5_block.7} parent=31 // pred_region
            loop: start=0, step=1, limit=1
            $region48: #{conv5_block.7} parent=46 // loop_pre_header
              _
            $region49: #{conv5_block.7} parent=46 // loop_header
              %s248 = sphi 0, %s252
              %p249 = scmp.ge.s32.totalorder %s248, 1
              %s253 = sphi %s221, %s221
              %s254 = sphi [#allocation2], [#allocation2]
            $region50: #{conv5_block.7} parent=46 // loop_header_branch
              %251 = sbr.rel (%p249) target = $region54
            $region51: #{conv5_block.7} parent=46 // loop_body
              %v255 = vld [vmem:[%s253] sm:$0xff]
              %256 = vst [vmem:[%s254] sm:$0xff] %v255
              %v257 = vld [vmem:[%s253 + $0x8] sm:$0xff]
              %258 = vst [vmem:[%s254 + $0x8] sm:$0xff] %v257
              %v259 = vld [vmem:[%s253 + $0x10] sm:$0xff]
              %260 = vst [vmem:[%s254 + $0x10] sm:$0xff] %v259
              %v261 = vld [vmem:[%s253 + $0x18] sm:$0xff]
              %262 = vst [vmem:[%s254 + $0x18] sm:$0xff] %v261
              %v263 = vld [vmem:[%s253 + $0x20] sm:$0xff]
              %264 = vst [vmem:[%s254 + $0x20] sm:$0xff] %v263
              %v265 = vld [vmem:[%s253 + $0x28] sm:$0xff]
              %266 = vst [vmem:[%s254 + $0x28] sm:$0xff] %v265
              %v267 = vld [vmem:[%s253 + $0x30] sm:$0xff]
              %268 = vst [vmem:[%s254 + $0x30] sm:$0xff] %v267
              %v269 = vld [vmem:[%s253 + $0x38] sm:$0xff]
              %270 = vst [vmem:[%s254 + $0x38] sm:$0xff] %v269
              %v271 = vld [vmem:[%s253 + $0x40] sm:$0xff]
              %272 = vst [vmem:[%s254 + $0x40] sm:$0xff] %v271
              %v273 = vld [vmem:[%s253 + $0x48] sm:$0xff]
              %274 = vst [vmem:[%s254 + $0x48] sm:$0xff] %v273
              %v275 = vld [vmem:[%s253 + $0x50] sm:$0xff]
              %276 = vst [vmem:[%s254 + $0x50] sm:$0xff] %v275
              %v277 = vld [vmem:[%s253 + $0x58] sm:$0xff]
              %278 = vst [vmem:[%s254 + $0x58] sm:$0xff] %v277
              %v279 = vld [vmem:[%s253 + $0x60] sm:$0xff]
              %280 = vst [vmem:[%s254 + $0x60] sm:$0xff] %v279
              %v281 = vld [vmem:[%s253 + $0x68] sm:$0xff]
              %282 = vst [vmem:[%s254 + $0x68] sm:$0xff] %v281
              %v283 = vld [vmem:[%s253 + $0x70] sm:$0xff]
              %284 = vst [vmem:[%s254 + $0x70] sm:$0xff] %v283
            $region52: #{conv5_block.7} parent=46 // loop_footer
              %s252 = sadd.s32 1, %s248
            $region53: #{conv5_block.7} parent=46 // loop_footer_branch
              %247 = sbr.rel target = $region49
            $region54: #{conv5_block.7} parent=46 // loop_exit
              _
          $region47: #{conv5_block.7} parent=31 // pred_fallthru
            _
          %p285 = pneg %p243
          // Predicated region
          $region55: #{conv5_block.7} parent=31 // pred_check
            _
          $region56: #{conv5_block.7} parent=31 // pred_check_branch
            %287 = sbr.rel (%p243) target = $region58
          $region57: #{conv5_block.7} parent=31 // pred_region
            %s288 = sand.u32 120, 7
          $region58: #{conv5_block.7} parent=31 // pred_fallthru
            _
        $region32: #{conv5_block.7} parent=27 // pred_fallthru
          _
        // Predicated region
        $region33: #{conv5_block.7} parent=27 // pred_check
          %p227 = pneg %p223
        $region34: #{conv5_block.7} parent=27 // pred_check_branch
          %229 = sbr.rel (%p227) target = $region36
        $region35: #{conv5_block.7} parent=27 // pred_region
          %s230 = sshll.u32 1, 120
          %s231 = ssub.s32 %s230, 1
          loop: start=0, step=1, limit=1
          $region37: #{conv5_block.7} parent=35 // loop_pre_header
            _
          $region38: #{conv5_block.7} parent=35 // loop_header
            %s233 = sphi 0, %s237
            %p234 = scmp.ge.s32.totalorder %s233, 1
            %s238 = sphi %s221, %s221
            %s239 = sphi [#allocation2], [#allocation2]
          $region39: #{conv5_block.7} parent=35 // loop_header_branch
            %236 = sbr.rel (%p234) target = $region43
          $region40: #{conv5_block.7} parent=35 // loop_body
            %v240 = vld [vmem:[%s238] sm:%s231]
            %241 = vst [vmem:[%s239] sm:%s231] %v240
          $region41: #{conv5_block.7} parent=35 // loop_footer
            %s237 = sadd.s32 1, %s233
          $region42: #{conv5_block.7} parent=35 // loop_footer_branch
            %232 = sbr.rel target = $region38
          $region43: #{conv5_block.7} parent=35 // loop_exit
            _
        $region36: #{conv5_block.7} parent=27 // pred_fallthru
          _
        // Predicated region
        $region59: #{conv5_block.7} parent=27 // pred_check
          _
        $region60: #{conv5_block.7} parent=27 // pred_check_branch
          %291 = sbr.rel (0) target = $region62
        $region61: #{conv5_block.7} parent=27 // pred_region
          %292 = vsyncadd [#allocation3], 1920
        $region62: #{conv5_block.7} parent=27 // pred_fallthru
          _
      $region28: #{conv5_block.7} parent=23 // pred_fallthru
        _
      %s293 = sand.u32 %s21, 1
      %s294 = smul.u32 %s293, 30
      %s295 = smul.addr %s294, 4
      %s296 = scalar_lea.vmem [#allocation2], %s295
      %s297 = scalar_lea.sflag [#allocation3], %s293
      %s298 = smul.u32 4, 10
      %s299 = smul.u32 %s298, 3
      %s300 = smul.u32 %s299, 1
      %s301 = sshll.u32 %s300, 4
      %302 = dma.done %s297, %s301
      %s303 = sadd.s32 %s21, 1
      %p304 = scmp.lt.s32.totalorder %s303, 2
      // Predicated region
      $region63: #{conv5_block.7} parent=23 // pred_check
        %p305 = pneg %p304
      $region64: #{conv5_block.7} parent=23 // pred_check_branch
        %307 = sbr.rel (%p305) target = $region66
      $region65: #{conv5_block.7} parent=23 // pred_region
        %s308 = sand.u32 %s303, 1
        %s309 = smul.u32 %s303, 8
        %s310 = smul.u32 %s309, 3
        %s311 = smul.u32 %s20, 54
        %s312 = sadd.s32 %s310, %s311
        %s313 = smul.addr %s312, 4
        %s314 = scalar_lea.vmem %s0, %s313
        %s315 = smul.u32 %s308, 30
        %s316 = smul.addr %s315, 4
        %s317 = scalar_lea.vmem [#allocation2], %s316
        %s318 = scalar_lea.sflag [#allocation3], %s308
        %p320 = scmp.lt.u32.totalorder 120, 8
        %p321 = pneg %p320
        // Predicated region
        $region67: #{conv5_block.7} parent=65 // pred_check
          _
        $region68: #{conv5_block.7} parent=65 // pred_check_branch
          %323 = sbr.rel (%p320) target = $region70
        $region69: #{conv5_block.7} parent=65 // pred_region
          %s339 = sand.u32 120, 7
          %p340 = scmp.eq.s32.totalorder %s339, 0
          // Predicated region
          $region82: #{conv5_block.7} parent=69 // pred_check
            %p341 = pneg %p340
          $region83: #{conv5_block.7} parent=69 // pred_check_branch
            %343 = sbr.rel (%p341) target = $region85
          $region84: #{conv5_block.7} parent=69 // pred_region
            loop: start=0, step=1, limit=1
            $region86: #{conv5_block.7} parent=84 // loop_pre_header
              _
            $region87: #{conv5_block.7} parent=84 // loop_header
              %s345 = sphi 0, %s349
              %p346 = scmp.ge.s32.totalorder %s345, 1
              %s350 = sphi %s314, %s314
              %s351 = sphi %s317, %s317
            $region88: #{conv5_block.7} parent=84 // loop_header_branch
              %348 = sbr.rel (%p346) target = $region92
            $region89: #{conv5_block.7} parent=84 // loop_body
              %v352 = vld [vmem:[%s350] sm:$0xff]
              %353 = vst [vmem:[%s351] sm:$0xff] %v352
              %v354 = vld [vmem:[%s350 + $0x8] sm:$0xff]
              %355 = vst [vmem:[%s351 + $0x8] sm:$0xff] %v354
              %v356 = vld [vmem:[%s350 + $0x10] sm:$0xff]
              %357 = vst [vmem:[%s351 + $0x10] sm:$0xff] %v356
              %v358 = vld [vmem:[%s350 + $0x18] sm:$0xff]
              %359 = vst [vmem:[%s351 + $0x18] sm:$0xff] %v358
              %v360 = vld [vmem:[%s350 + $0x20] sm:$0xff]
              %361 = vst [vmem:[%s351 + $0x20] sm:$0xff] %v360
              %v362 = vld [vmem:[%s350 + $0x28] sm:$0xff]
              %363 = vst [vmem:[%s351 + $0x28] sm:$0xff] %v362
              %v364 = vld [vmem:[%s350 + $0x30] sm:$0xff]
              %365 = vst [vmem:[%s351 + $0x30] sm:$0xff] %v364
              %v366 = vld [vmem:[%s350 + $0x38] sm:$0xff]
              %367 = vst [vmem:[%s351 + $0x38] sm:$0xff] %v366
              %v368 = vld [vmem:[%s350 + $0x40] sm:$0xff]
              %369 = vst [vmem:[%s351 + $0x40] sm:$0xff] %v368
              %v370 = vld [vmem:[%s350 + $0x48] sm:$0xff]
              %371 = vst [vmem:[%s351 + $0x48] sm:$0xff] %v370
              %v372 = vld [vmem:[%s350 + $0x50] sm:$0xff]
              %373 = vst [vmem:[%s351 + $0x50] sm:$0xff] %v372
              %v374 = vld [vmem:[%s350 + $0x58] sm:$0xff]
              %375 = vst [vmem:[%s351 + $0x58] sm:$0xff] %v374
              %v376 = vld [vmem:[%s350 + $0x60] sm:$0xff]
              %377 = vst [vmem:[%s351 + $0x60] sm:$0xff] %v376
              %v378 = vld [vmem:[%s350 + $0x68] sm:$0xff]
              %379 = vst [vmem:[%s351 + $0x68] sm:$0xff] %v378
              %v380 = vld [vmem:[%s350 + $0x70] sm:$0xff]
              %381 = vst [vmem:[%s351 + $0x70] sm:$0xff] %v380
            $region90: #{conv5_block.7} parent=84 // loop_footer
              %s349 = sadd.s32 1, %s345
            $region91: #{conv5_block.7} parent=84 // loop_footer_branch
              %344 = sbr.rel target = $region87
            $region92: #{conv5_block.7} parent=84 // loop_exit
              _
          $region85: #{conv5_block.7} parent=69 // pred_fallthru
            _
          %p382 = pneg %p340
          // Predicated region
          $region93: #{conv5_block.7} parent=69 // pred_check
            _
          $region94: #{conv5_block.7} parent=69 // pred_check_branch
            %384 = sbr.rel (%p340) target = $region96
          $region95: #{conv5_block.7} parent=69 // pred_region
            %s385 = sand.u32 120, 7
          $region96: #{conv5_block.7} parent=69 // pred_fallthru
            _
        $region70: #{conv5_block.7} parent=65 // pred_fallthru
          _
        // Predicated region
        $region71: #{conv5_block.7} parent=65 // pred_check
          %p324 = pneg %p320
        $region72: #{conv5_block.7} parent=65 // pred_check_branch
          %326 = sbr.rel (%p324) target = $region74
        $region73: #{conv5_block.7} parent=65 // pred_region
          %s327 = sshll.u32 1, 120
          %s328 = ssub.s32 %s327, 1
          loop: start=0, step=1, limit=1
          $region75: #{conv5_block.7} parent=73 // loop_pre_header
            _
          $region76: #{conv5_block.7} parent=73 // loop_header
            %s330 = sphi 0, %s334
            %p331 = scmp.ge.s32.totalorder %s330, 1
            %s335 = sphi %s314, %s314
            %s336 = sphi %s317, %s317
          $region77: #{conv5_block.7} parent=73 // loop_header_branch
            %333 = sbr.rel (%p331) target = $region81
          $region78: #{conv5_block.7} parent=73 // loop_body
            %v337 = vld [vmem:[%s335] sm:%s328]
            %338 = vst [vmem:[%s336] sm:%s328] %v337
          $region79: #{conv5_block.7} parent=73 // loop_footer
            %s334 = sadd.s32 1, %s330
          $region80: #{conv5_block.7} parent=73 // loop_footer_branch
            %329 = sbr.rel target = $region76
          $region81: #{conv5_block.7} parent=73 // loop_exit
            _
        $region74: #{conv5_block.7} parent=65 // pred_fallthru
          _
        // Predicated region
        $region97: #{conv5_block.7} parent=65 // pred_check
          _
        $region98: #{conv5_block.7} parent=65 // pred_check_branch
          %388 = sbr.rel (0) target = $region100
        $region99: #{conv5_block.7} parent=65 // pred_region
          %389 = vsyncadd %s318, 1920
        $region100: #{conv5_block.7} parent=65 // pred_fallthru
          _
      $region66: #{conv5_block.7} parent=23 // pred_fallthru
        _
      %v390 = vld [vmem:[%s296] sm:$0xf]
      %v391 = vld [vmem:[%s296 + $0x4] sm:$0xf]
      %v392 = vld [vmem:[%s296 + $0x8] sm:$0xf]
      %v393 = vld [vmem:[%s296 + $0xc] sm:$0xf]
      %v394 = vld [vmem:[%s296 + $0x10] sm:$0xf]
      %v395 = vld [vmem:[%s296 + $0x14] sm:$0xf]
      %v396 = vld [vmem:[%s296 + $0x18] sm:$0xf]
      %v397 = vld [vmem:[%s296 + $0x1c] sm:$0xf]
      %v398 = vld [vmem:[%s296 + $0x20] sm:$0xf]
      %v399 = vld [vmem:[%s296 + $0x24] sm:$0xf]
      %v400 = vld [vmem:[%s296 + $0x28] sm:$0xf]
      %v401 = vld [vmem:[%s296 + $0x2c] sm:$0xf]
      %v402 = vld [vmem:[%s296 + $0x30] sm:$0xf]
      %v403 = vld [vmem:[%s296 + $0x34] sm:$0xf]
      %v404 = vld [vmem:[%s296 + $0x38] sm:$0xf]
      %v405 = vld [vmem:[%s296 + $0x3c] sm:$0xf]
      %v406 = vld [vmem:[%s296 + $0x40] sm:$0xf]
      %v407 = vld [vmem:[%s296 + $0x44] sm:$0xf]
      %v408 = vld [vmem:[%s296 + $0x48] sm:$0xf]
      %v409 = vld [vmem:[%s296 + $0x4c] sm:$0xf]
      %v410 = vld [vmem:[%s296 + $0x50] sm:$0xf]
      %v411 = vld [vmem:[%s296 + $0x54] sm:$0xf]
      %v412 = vld [vmem:[%s296 + $0x58] sm:$0xf]
      %v413 = vld [vmem:[%s296 + $0x5c] sm:$0xf]
      %v414 = vld [vmem:[%s296 + $0x60] sm:$0xf]
      %v415 = vld [vmem:[%s296 + $0x64] sm:$0xf]
      %v416 = vld [vmem:[%s296 + $0x68] sm:$0xf]
      %v417 = vld [vmem:[%s296 + $0x6c] sm:$0xf]
      %v418 = vld [vmem:[%s296 + $0x70] sm:$0xf]
      %v419 = vld [vmem:[%s296 + $0x74] sm:$0xf]
      %v420 = vld [vmem:[%s1] sm:$0xf]
      %v421 = vld [vmem:[%s1 + $0x4] sm:$0xf]
      %v422 = vld [vmem:[%s1 + $0x8] sm:$0xf]
      %v423 = vld [vmem:[%s1 + $0xc] sm:$0xf]
      %v424 = vld [vmem:[%s1 + $0x10] sm:$0xf]
      %v425 = vld [vmem:[%s1 + $0x14] sm:$0xf]
      %v426 = vld [vmem:[%s1 + $0x18] sm:$0xf]
      %v427 = vld [vmem:[%s1 + $0x1c] sm:$0xf]
      %v428 = vld [vmem:[%s1 + $0x20] sm:$0xf]
      %v429 = vld [vmem:[%s1 + $0x24] sm:$0xf]
      %v430 = vld [vmem:[%s1 + $0x28] sm:$0xf]
      %v431 = vld [vmem:[%s1 + $0x2c] sm:$0xf]
      %v432 = vld [vmem:[%s1 + $0x30] sm:$0xf]
      %v433 = vld [vmem:[%s1 + $0x34] sm:$0xf]
      %v434 = vld [vmem:[%s1 + $0x38] sm:$0xf]
      %v435 = vld [vmem:[%s1 + $0x3c] sm:$0xf]
      %vm436 = vsmask.f32 3328
      %vm437 = vsmask.f32 7440
      %vm438 = vmor %vm436, %vm437
      %v440 = vshrl.u32 %v390, 16
      %v442 = vrot.slane %v440, 4
      %v443 = vshll.u32 %v390, 16
      %v445 = vrot.slane %v443, 5
      %v446 = vor.u32 %v442, %v445
      %v447 = vrot.slane %v446, 4
      %v449 = vshll.u32 %v391, 16
      %v451 = vrot.slane %v449, 5
      %v452 = vsel %vm438, %v447, %v451
      %v453 = vshrl.u32 %v391, 16
      %v455 = vrot.slane %v453, 4
      %v456 = vor.u32 %v455, %v451
      %v457 = vrot.slane %v456, 4
      %v459 = vshll.u32 %v392, 16
      %v461 = vrot.slane %v459, 5
      %v462 = vsel %vm438, %v457, %v461
      %v464 = vshrl.u32 %v393, 16
      %v466 = vrot.slane %v464, 4
      %v467 = vshll.u32 %v393, 16
      %v469 = vrot.slane %v467, 5
      %v470 = vor.u32 %v466, %v469
      %v471 = vrot.slane %v470, 4
      %v473 = vshll.u32 %v394, 16
      %v475 = vrot.slane %v473, 5
      %v476 = vsel %vm438, %v471, %v475
      %v477 = vshrl.u32 %v394, 16
      %v479 = vrot.slane %v477, 4
      %v480 = vor.u32 %v479, %v475
      %v481 = vrot.slane %v480, 4
      %v483 = vshll.u32 %v395, 16
      %v485 = vrot.slane %v483, 5
      %v486 = vsel %vm438, %v481, %v485
      %v488 = vshrl.u32 %v396, 16
      %v490 = vrot.slane %v488, 4
      %v491 = vshll.u32 %v396, 16
      %v493 = vrot.slane %v491, 5
      %v494 = vor.u32 %v490, %v493
      %v495 = vrot.slane %v494, 4
      %v497 = vshll.u32 %v397, 16
      %v499 = vrot.slane %v497, 5
      %v500 = vsel %vm438, %v495, %v499
      %v501 = vshrl.u32 %v397, 16
      %v503 = vrot.slane %v501, 4
      %v504 = vor.u32 %v503, %v499
      %v505 = vrot.slane %v504, 4
      %v507 = vshll.u32 %v398, 16
      %v509 = vrot.slane %v507, 5
      %v510 = vsel %vm438, %v505, %v509
      %v512 = vshrl.u32 %v399, 16
      %v514 = vrot.slane %v512, 4
      %v515 = vshll.u32 %v399, 16
      %v517 = vrot.slane %v515, 5
      %v518 = vor.u32 %v514, %v517
      %v519 = vrot.slane %v518, 4
      %v521 = vshll.u32 %v400, 16
      %v523 = vrot.slane %v521, 5
      %v524 = vsel %vm438, %v519, %v523
      %v525 = vshrl.u32 %v400, 16
      %v527 = vrot.slane %v525, 4
      %v528 = vor.u32 %v527, %v523
      %v529 = vrot.slane %v528, 4
      %v531 = vshll.u32 %v401, 16
      %v533 = vrot.slane %v531, 5
      %v534 = vsel %vm438, %v529, %v533
      %v536 = vshrl.u32 %v402, 16
      %v538 = vrot.slane %v536, 4
      %v539 = vshll.u32 %v402, 16
      %v541 = vrot.slane %v539, 5
      %v542 = vor.u32 %v538, %v541
      %v543 = vrot.slane %v542, 4
      %v545 = vshll.u32 %v403, 16
      %v547 = vrot.slane %v545, 5
      %v548 = vsel %vm438, %v543, %v547
      %v549 = vshrl.u32 %v403, 16
      %v551 = vrot.slane %v549, 4
      %v552 = vor.u32 %v551, %v547
      %v553 = vrot.slane %v552, 4
      %v555 = vshll.u32 %v404, 16
      %v557 = vrot.slane %v555, 5
      %v558 = vsel %vm438, %v553, %v557
      %v560 = vshrl.u32 %v405, 16
      %v562 = vrot.slane %v560, 4
      %v563 = vshll.u32 %v405, 16
      %v565 = vrot.slane %v563, 5
      %v566 = vor.u32 %v562, %v565
      %v567 = vrot.slane %v566, 4
      %v569 = vshll.u32 %v406, 16
      %v571 = vrot.slane %v569, 5
      %v572 = vsel %vm438, %v567, %v571
      %v573 = vshrl.u32 %v406, 16
      %v575 = vrot.slane %v573, 4
      %v576 = vor.u32 %v575, %v571
      %v577 = vrot.slane %v576, 4
      %v579 = vshll.u32 %v407, 16
      %v581 = vrot.slane %v579, 5
      %v582 = vsel %vm438, %v577, %v581
      %v584 = vshrl.u32 %v408, 16
      %v586 = vrot.slane %v584, 4
      %v587 = vshll.u32 %v408, 16
      %v589 = vrot.slane %v587, 5
      %v590 = vor.u32 %v586, %v589
      %v591 = vrot.slane %v590, 4
      %v593 = vshll.u32 %v409, 16
      %v595 = vrot.slane %v593, 5
      %v596 = vsel %vm438, %v591, %v595
      %v597 = vshrl.u32 %v409, 16
      %v599 = vrot.slane %v597, 4
      %v600 = vor.u32 %v599, %v595
      %v601 = vrot.slane %v600, 4
      %v603 = vshll.u32 %v410, 16
      %v605 = vrot.slane %v603, 5
      %v606 = vsel %vm438, %v601, %v605
      %v608 = vshrl.u32 %v411, 16
      %v610 = vrot.slane %v608, 4
      %v611 = vshll.u32 %v411, 16
      %v613 = vrot.slane %v611, 5
      %v614 = vor.u32 %v610, %v613
      %v615 = vrot.slane %v614, 4
      %v617 = vshll.u32 %v412, 16
      %v619 = vrot.slane %v617, 5
      %v620 = vsel %vm438, %v615, %v619
      %v621 = vshrl.u32 %v412, 16
      %v623 = vrot.slane %v621, 4
      %v624 = vor.u32 %v623, %v619
      %v625 = vrot.slane %v624, 4
      %v627 = vshll.u32 %v413, 16
      %v629 = vrot.slane %v627, 5
      %v630 = vsel %vm438, %v625, %v629
      %s631 = scalar_lea.vmem %s1, 64
      %v632 = vld [vmem:[%s631] sm:$0xf]
      %v633 = vld [vmem:[%s631 + $0x4] sm:$0xf]
      %v634 = vld [vmem:[%s631 + $0x8] sm:$0xf]
      %v635 = vld [vmem:[%s631 + $0xc] sm:$0xf]
      %v636 = vld [vmem:[%s631 + $0x10] sm:$0xf]
      %v637 = vld [vmem:[%s631 + $0x14] sm:$0xf]
      %v638 = vld [vmem:[%s631 + $0x18] sm:$0xf]
      %v639 = vld [vmem:[%s631 + $0x1c] sm:$0xf]
      %v640 = vld [vmem:[%s631 + $0x20] sm:$0xf]
      %v641 = vld [vmem:[%s631 + $0x24] sm:$0xf]
      %v642 = vld [vmem:[%s631 + $0x28] sm:$0xf]
      %v643 = vld [vmem:[%s631 + $0x2c] sm:$0xf]
      %v644 = vld [vmem:[%s631 + $0x30] sm:$0xf]
      %v645 = vld [vmem:[%s631 + $0x34] sm:$0xf]
      %v646 = vld [vmem:[%s631 + $0x38] sm:$0xf]
      %v647 = vld [vmem:[%s631 + $0x3c] sm:$0xf]
      %v648 = vunpack.c.l.b16 %v452
      %v649 = vunpack.c.l.b16 %v462
      %v650 = vunpack.c.l.b16 %v476
      %v651 = vunpack.c.l.b16 %v486
      %v652 = vunpack.c.l.b16 %v500
      %v653 = vunpack.c.l.b16 %v510
      %v654 = vunpack.c.l.b16 %v524
      %v655 = vunpack.c.l.b16 %v534
      %v656 = vunpack.c.l.b16 %v548
      %v657 = vunpack.c.l.b16 %v558
      %v658 = vunpack.c.l.b16 %v572
      %v659 = vunpack.c.l.b16 %v582
      %v660 = vunpack.c.l.b16 %v596
      %v661 = vunpack.c.l.b16 %v606
      %v662 = vunpack.c.l.b16 %v620
      %v663 = vunpack.c.l.b16 %v630
      %v664 = vpack.c.b16 %v649, %v648
      %v665 = vpack.c.b16 %v651, %v650
      %v666 = vpack.c.b16 %v653, %v652
      %v667 = vpack.c.b16 %v655, %v654
      %v668 = vpack.c.b16 %v657, %v656
      %v669 = vpack.c.b16 %v659, %v658
      %v670 = vpack.c.b16 %v661, %v660
      %v671 = vpack.c.b16 %v663, %v662
      %v696 = vunpack.c.l.b16 %v632
      %v697 = vunpack.c.l.b16 %v633
      %v698 = vunpack.c.l.b16 %v634
      %v699 = vunpack.c.l.b16 %v635
      %v700 = vunpack.c.l.b16 %v636
      %v701 = vunpack.c.l.b16 %v637
      %v702 = vunpack.c.l.b16 %v638
      %v703 = vunpack.c.l.b16 %v639
      %v704 = vunpack.c.l.b16 %v640
      %v705 = vunpack.c.l.b16 %v641
      %v706 = vunpack.c.l.b16 %v642
      %v707 = vunpack.c.l.b16 %v643
      %v708 = vunpack.c.l.b16 %v644
      %v709 = vunpack.c.l.b16 %v645
      %v710 = vunpack.c.l.b16 %v646
      %v711 = vunpack.c.l.b16 %v647
      %v712 = vpack.c.b16 %v697, %v696
      %v713 = vpack.c.b16 %v699, %v698
      %v714 = vpack.c.b16 %v701, %v700
      %v715 = vpack.c.b16 %v703, %v702
      %v716 = vpack.c.b16 %v705, %v704
      %v717 = vpack.c.b16 %v707, %v706
      %v718 = vpack.c.b16 %v709, %v708
      %v719 = vpack.c.b16 %v711, %v710
      %728 = vmatprep.subr.bf16.mxu0 0
      %729 = vmatpush1.bf16.msra.mxu0 %v719
      %730 = vmatprep.subr.bf16.mxu0 0
      %731 = vmatpush1.bf16.msra.mxu0 %v718
      %732 = vmatprep.subr.bf16.mxu0 0
      %733 = vmatpush1.bf16.msra.mxu0 %v717
      %734 = vmatprep.subr.bf16.mxu0 0
      %735 = vmatpush1.bf16.msra.mxu0 %v716
      %736 = vmatprep.subr.bf16.mxu0 0
      %737 = vmatpush1.bf16.msra.mxu0 %v715
      %738 = vmatprep.subr.bf16.mxu0 0
      %739 = vmatpush1.bf16.msra.mxu0 %v714
      %740 = vmatprep.subr.bf16.mxu0 0
      %741 = vmatpush1.bf16.msra.mxu0 %v713
      %742 = vmatprep.subr.bf16.mxu0 0
      %743 = vmatpush1.bf16.msra.mxu0 %v712
      %744 = vmatprep.subr.bf16.mxu0 0
      %745 = vmatpush2.bf16.msra.mxu0 0
      %746 = vmatprep.subr.bf16.mxu0 0
      %747 = vmatpush2.bf16.msra.mxu0 0
      %748 = vmatprep.subr.bf16.mxu0 0
      %749 = vmatpush2.bf16.msra.mxu0 0
      %750 = vmatprep.subr.bf16.mxu0 0
      %751 = vmatpush2.bf16.msra.mxu0 0
      %752 = vmatprep.subr.bf16.mxu0 0
      %753 = vmatpush2.bf16.msra.mxu0 0
      %754 = vmatprep.subr.bf16.mxu0 0
      %755 = vmatpush2.bf16.msra.mxu0 0
      %756 = vmatprep.subr.bf16.mxu0 0
      %757 = vmatpush2.bf16.msra.mxu0 0
      %758 = vmatprep.subr.bf16.mxu0 0
      %759 = vmatpush2.bf16.msra.mxu0 0
      %760 = vmatprep.mubr.bf16.mxu0 0
      %761 = vmatmul.mubr.bf16.gmra.mxu0 %v664
      %v762 = vpop.f32.mrf.mxu0
      %v763 = vadd.f32 0.0, %v762
      %v764 = vpop.f32.mrf.mxu0
      %v765 = vpop.f32.mrf.mxu0
      %v766 = vadd.f32 0.0, %v765
      %v767 = vpop.f32.mrf.mxu0
      %768 = vmatprep.mubr.bf16.mxu0 0
      %769 = vmatmul.mubr.bf16.gmra.mxu0 %v665
      %v770 = vpop.f32.mrf.mxu0
      %v771 = vadd.f32 0.0, %v770
      %v772 = vpop.f32.mrf.mxu0
      %v773 = vpop.f32.mrf.mxu0
      %v774 = vadd.f32 0.0, %v773
      %v775 = vpop.f32.mrf.mxu0
      %776 = vmatprep.mubr.bf16.mxu0 0
      %777 = vmatmul.mubr.bf16.gmra.mxu0 %v666
      %v778 = vpop.f32.mrf.mxu0
      %v779 = vadd.f32 0.0, %v778
      %v780 = vpop.f32.mrf.mxu0
      %v781 = vpop.f32.mrf.mxu0
      %v782 = vadd.f32 0.0, %v781
      %v783 = vpop.f32.mrf.mxu0
      %784 = vmatprep.mubr.bf16.mxu0 0
      %785 = vmatmul.mubr.bf16.gmra.mxu0 %v667
      %v786 = vpop.f32.mrf.mxu0
      %v787 = vadd.f32 0.0, %v786
      %v788 = vpop.f32.mrf.mxu0
      %v789 = vpop.f32.mrf.mxu0
      %v790 = vadd.f32 0.0, %v789
      %v791 = vpop.f32.mrf.mxu0
      %792 = vmatprep.mubr.bf16.mxu0 0
      %793 = vmatmul.mubr.bf16.gmra.mxu0 %v668
      %v794 = vpop.f32.mrf.mxu0
      %v795 = vadd.f32 0.0, %v794
      %v796 = vpop.f32.mrf.mxu0
      %v797 = vpop.f32.mrf.mxu0
      %v798 = vadd.f32 0.0, %v797
      %v799 = vpop.f32.mrf.mxu0
      %800 = vmatprep.mubr.bf16.mxu0 0
      %801 = vmatmul.mubr.bf16.gmra.mxu0 %v669
      %v802 = vpop.f32.mrf.mxu0
      %v803 = vadd.f32 0.0, %v802
      %v804 = vpop.f32.mrf.mxu0
      %v805 = vpop.f32.mrf.mxu0
      %v806 = vadd.f32 0.0, %v805
      %v807 = vpop.f32.mrf.mxu0
      %808 = vmatprep.mubr.bf16.mxu0 0
      %809 = vmatmul.mubr.bf16.gmra.mxu0 %v670
      %v810 = vpop.f32.mrf.mxu0
      %v811 = vadd.f32 0.0, %v810
      %v812 = vpop.f32.mrf.mxu0
      %v813 = vpop.f32.mrf.mxu0
      %v814 = vadd.f32 0.0, %v813
      %v815 = vpop.f32.mrf.mxu0
      %816 = vmatprep.mubr.bf16.mxu0 0
      %817 = vmatmul.mubr.bf16.gmra.mxu0 %v671
      %v818 = vpop.f32.mrf.mxu0
      %v819 = vadd.f32 0.0, %v818
      %v820 = vpop.f32.mrf.mxu0
      %v821 = vpop.f32.mrf.mxu0
      %v822 = vadd.f32 0.0, %v821
      %v823 = vpop.f32.mrf.mxu0
      %824 = vdwg.mxu0
      %v841 = vunpack.c.l.b16 %v390
      %v842 = vunpack.c.l.b16 %v391
      %v843 = vunpack.c.l.b16 %v393
      %v844 = vunpack.c.l.b16 %v394
      %v845 = vunpack.c.l.b16 %v396
      %v846 = vunpack.c.l.b16 %v397
      %v847 = vunpack.c.l.b16 %v399
      %v848 = vunpack.c.l.b16 %v400
      %v849 = vunpack.c.l.b16 %v402
      %v850 = vunpack.c.l.b16 %v403
      %v851 = vunpack.c.l.b16 %v405
      %v852 = vunpack.c.l.b16 %v406
      %v853 = vunpack.c.l.b16 %v408
      %v854 = vunpack.c.l.b16 %v409
      %v855 = vunpack.c.l.b16 %v411
      %v856 = vunpack.c.l.b16 %v412
      %v857 = vpack.c.b16 %v842, %v841
      %v858 = vpack.c.b16 %v844, %v843
      %v859 = vpack.c.b16 %v846, %v845
      %v860 = vpack.c.b16 %v848, %v847
      %v861 = vpack.c.b16 %v850, %v849
      %v862 = vpack.c.b16 %v852, %v851
      %v863 = vpack.c.b16 %v854, %v853
      %v864 = vpack.c.b16 %v856, %v855
      %v889 = vunpack.c.l.b16 %v420
      %v890 = vunpack.c.l.b16 %v421
      %v891 = vunpack.c.l.b16 %v422
      %v892 = vunpack.c.l.b16 %v423
      %v893 = vunpack.c.l.b16 %v424
      %v894 = vunpack.c.l.b16 %v425
      %v895 = vunpack.c.l.b16 %v426
      %v896 = vunpack.c.l.b16 %v427
      %v897 = vunpack.c.l.b16 %v428
      %v898 = vunpack.c.l.b16 %v429
      %v899 = vunpack.c.l.b16 %v430
      %v900 = vunpack.c.l.b16 %v431
      %v901 = vunpack.c.l.b16 %v432
      %v902 = vunpack.c.l.b16 %v433
      %v903 = vunpack.c.l.b16 %v434
      %v904 = vunpack.c.l.b16 %v435
      %v905 = vpack.c.b16 %v890, %v889
      %v906 = vpack.c.b16 %v892, %v891
      %v907 = vpack.c.b16 %v894, %v893
      %v908 = vpack.c.b16 %v896, %v895
      %v909 = vpack.c.b16 %v898, %v897
      %v910 = vpack.c.b16 %v900, %v899
      %v911 = vpack.c.b16 %v902, %v901
      %v912 = vpack.c.b16 %v904, %v903
      %921 = vmatprep.subr.bf16.mxu0 0
      %922 = vmatpush1.bf16.msra.mxu0 %v912
      %923 = vmatprep.subr.bf16.mxu0 0
      %924 = vmatpush1.bf16.msra.mxu0 %v911
      %925 = vmatprep.subr.bf16.mxu0 0
      %926 = vmatpush1.bf16.msra.mxu0 %v910
      %927 = vmatprep.subr.bf16.mxu0 0
      %928 = vmatpush1.bf16.msra.mxu0 %v909
      %929 = vmatprep.subr.bf16.mxu0 0
      %930 = vmatpush1.bf16.msra.mxu0 %v908
      %931 = vmatprep.subr.bf16.mxu0 0
      %932 = vmatpush1.bf16.msra.mxu0 %v907
      %933 = vmatprep.subr.bf16.mxu0 0
      %934 = vmatpush1.bf16.msra.mxu0 %v906
      %935 = vmatprep.subr.bf16.mxu0 0
      %936 = vmatpush1.bf16.msra.mxu0 %v905
      %937 = vmatprep.subr.bf16.mxu0 0
      %938 = vmatpush2.bf16.msra.mxu0 0
      %939 = vmatprep.subr.bf16.mxu0 0
      %940 = vmatpush2.bf16.msra.mxu0 0
      %941 = vmatprep.subr.bf16.mxu0 0
      %942 = vmatpush2.bf16.msra.mxu0 0
      %943 = vmatprep.subr.bf16.mxu0 0
      %944 = vmatpush2.bf16.msra.mxu0 0
      %945 = vmatprep.subr.bf16.mxu0 0
      %946 = vmatpush2.bf16.msra.mxu0 0
      %947 = vmatprep.subr.bf16.mxu0 0
      %948 = vmatpush2.bf16.msra.mxu0 0
      %949 = vmatprep.subr.bf16.mxu0 0
      %950 = vmatpush2.bf16.msra.mxu0 0
      %951 = vmatprep.subr.bf16.mxu0 0
      %952 = vmatpush2.bf16.msra.mxu0 0
      %953 = vmatprep.mubr.bf16.mxu0 0
      %954 = vmatmul.mubr.bf16.gmra.mxu0 %v857
      %v955 = vpop.f32.mrf.mxu0
      %v956 = vadd.f32 %v763, %v955
      %v957 = vpop.f32.mrf.mxu0
      %v958 = vpop.f32.mrf.mxu0
      %v959 = vadd.f32 %v766, %v958
      %v960 = vpop.f32.mrf.mxu0
      %961 = vmatprep.mubr.bf16.mxu0 0
      %962 = vmatmul.mubr.bf16.gmra.mxu0 %v858
      %v963 = vpop.f32.mrf.mxu0
      %v964 = vadd.f32 %v771, %v963
      %v965 = vpop.f32.mrf.mxu0
      %v966 = vpop.f32.mrf.mxu0
      %v967 = vadd.f32 %v774, %v966
      %v968 = vpop.f32.mrf.mxu0
      %969 = vmatprep.mubr.bf16.mxu0 0
      %970 = vmatmul.mubr.bf16.gmra.mxu0 %v859
      %v971 = vpop.f32.mrf.mxu0
      %v972 = vadd.f32 %v779, %v971
      %v973 = vpop.f32.mrf.mxu0
      %v974 = vpop.f32.mrf.mxu0
      %v975 = vadd.f32 %v782, %v974
      %v976 = vpop.f32.mrf.mxu0
      %977 = vmatprep.mubr.bf16.mxu0 0
      %978 = vmatmul.mubr.bf16.gmra.mxu0 %v860
      %v979 = vpop.f32.mrf.mxu0
      %v980 = vadd.f32 %v787, %v979
      %v981 = vpop.f32.mrf.mxu0
      %v982 = vpop.f32.mrf.mxu0
      %v983 = vadd.f32 %v790, %v982
      %v984 = vpop.f32.mrf.mxu0
      %985 = vmatprep.mubr.bf16.mxu0 0
      %986 = vmatmul.mubr.bf16.gmra.mxu0 %v861
      %v987 = vpop.f32.mrf.mxu0
      %v988 = vadd.f32 %v795, %v987
      %v989 = vpop.f32.mrf.mxu0
      %v990 = vpop.f32.mrf.mxu0
      %v991 = vadd.f32 %v798, %v990
      %v992 = vpop.f32.mrf.mxu0
      %993 = vmatprep.mubr.bf16.mxu0 0
      %994 = vmatmul.mubr.bf16.gmra.mxu0 %v862
      %v995 = vpop.f32.mrf.mxu0
      %v996 = vadd.f32 %v803, %v995
      %v997 = vpop.f32.mrf.mxu0
      %v998 = vpop.f32.mrf.mxu0
      %v999 = vadd.f32 %v806, %v998
      %v1000 = vpop.f32.mrf.mxu0
      %1001 = vmatprep.mubr.bf16.mxu0 0
      %1002 = vmatmul.mubr.bf16.gmra.mxu0 %v863
      %v1003 = vpop.f32.mrf.mxu0
      %v1004 = vadd.f32 %v811, %v1003
      %v1005 = vpop.f32.mrf.mxu0
      %v1006 = vpop.f32.mrf.mxu0
      %v1007 = vadd.f32 %v814, %v1006
      %v1008 = vpop.f32.mrf.mxu0
      %1009 = vmatprep.mubr.bf16.mxu0 0
      %1010 = vmatmul.mubr.bf16.gmra.mxu0 %v864
      %v1011 = vpop.f32.mrf.mxu0
      %v1012 = vadd.f32 %v819, %v1011
      %v1013 = vpop.f32.mrf.mxu0
      %v1014 = vpop.f32.mrf.mxu0
      %v1015 = vadd.f32 %v822, %v1014
      %v1016 = vpop.f32.mrf.mxu0
      %1017 = vdwg.mxu0
      %vm1026 = vcmask 1042432
      %vm1027 = vcmask 1046532
      %vm1028 = vmor %vm1026, %vm1027
      %v1029 = vrot.slane %v390, 5
      %v1030 = vrot.slane %v1029, 4
      %v1031 = vrot.slane %v391, 5
      %v1032 = vsel %vm1028, %v1030, %v1031
      %v1033 = vrot.slane %v1031, 4
      %v1034 = vrot.slane %v392, 5
      %v1035 = vsel %vm1028, %v1033, %v1034
      %v1036 = vrot.slane %v393, 5
      %v1037 = vrot.slane %v1036, 4
      %v1038 = vrot.slane %v394, 5
      %v1039 = vsel %vm1028, %v1037, %v1038
      %v1040 = vrot.slane %v1038, 4
      %v1041 = vrot.slane %v395, 5
      %v1042 = vsel %vm1028, %v1040, %v1041
      %v1043 = vrot.slane %v396, 5
      %v1044 = vrot.slane %v1043, 4
      %v1045 = vrot.slane %v397, 5
      %v1046 = vsel %vm1028, %v1044, %v1045
      %v1047 = vrot.slane %v1045, 4
      %v1048 = vrot.slane %v398, 5
      %v1049 = vsel %vm1028, %v1047, %v1048
      %v1050 = vrot.slane %v399, 5
      %v1051 = vrot.slane %v1050, 4
      %v1052 = vrot.slane %v400, 5
      %v1053 = vsel %vm1028, %v1051, %v1052
      %v1054 = vrot.slane %v1052, 4
      %v1055 = vrot.slane %v401, 5
      %v1056 = vsel %vm1028, %v1054, %v1055
      %v1057 = vrot.slane %v402, 5
      %v1058 = vrot.slane %v1057, 4
      %v1059 = vrot.slane %v403, 5
      %v1060 = vsel %vm1028, %v1058, %v1059
      %v1061 = vrot.slane %v1059, 4
      %v1062 = vrot.slane %v404, 5
      %v1063 = vsel %vm1028, %v1061, %v1062
      %v1064 = vrot.slane %v405, 5
      %v1065 = vrot.slane %v1064, 4
      %v1066 = vrot.slane %v406, 5
      %v1067 = vsel %vm1028, %v1065, %v1066
      %v1068 = vrot.slane %v1066, 4
      %v1069 = vrot.slane %v407, 5
      %v1070 = vsel %vm1028, %v1068, %v1069
      %v1071 = vrot.slane %v408, 5
      %v1072 = vrot.slane %v1071, 4
      %v1073 = vrot.slane %v409, 5
      %v1074 = vsel %vm1028, %v1072, %v1073
      %v1075 = vrot.slane %v1073, 4
      %v1076 = vrot.slane %v410, 5
      %v1077 = vsel %vm1028, %v1075, %v1076
      %v1078 = vrot.slane %v411, 5
      %v1079 = vrot.slane %v1078, 4
      %v1080 = vrot.slane %v412, 5
      %v1081 = vsel %vm1028, %v1079, %v1080
      %v1082 = vrot.slane %v1080, 4
      %v1083 = vrot.slane %v413, 5
      %v1084 = vsel %vm1028, %v1082, %v1083
      %s1085 = scalar_lea.vmem %s1, 128
      %v1086 = vld [vmem:[%s1085] sm:$0xf]
      %v1087 = vld [vmem:[%s1085 + $0x4] sm:$0xf]
      %v1088 = vld [vmem:[%s1085 + $0x8] sm:$0xf]
      %v1089 = vld [vmem:[%s1085 + $0xc] sm:$0xf]
      %v1090 = vld [vmem:[%s1085 + $0x10] sm:$0xf]
      %v1091 = vld [vmem:[%s1085 + $0x14] sm:$0xf]
      %v1092 = vld [vmem:[%s1085 + $0x18] sm:$0xf]
      %v1093 = vld [vmem:[%s1085 + $0x1c] sm:$0xf]
      %v1094 = vld [vmem:[%s1085 + $0x20] sm:$0xf]
      %v1095 = vld [vmem:[%s1085 + $0x24] sm:$0xf]
      %v1096 = vld [vmem:[%s1085 + $0x28] sm:$0xf]
      %v1097 = vld [vmem:[%s1085 + $0x2c] sm:$0xf]
      %v1098 = vld [vmem:[%s1085 + $0x30] sm:$0xf]
      %v1099 = vld [vmem:[%s1085 + $0x34] sm:$0xf]
      %v1100 = vld [vmem:[%s1085 + $0x38] sm:$0xf]
      %v1101 = vld [vmem:[%s1085 + $0x3c] sm:$0xf]
      %v1102 = vunpack.c.l.b16 %v1032
      %v1103 = vunpack.c.l.b16 %v1035
      %v1104 = vunpack.c.l.b16 %v1039
      %v1105 = vunpack.c.l.b16 %v1042
      %v1106 = vunpack.c.l.b16 %v1046
      %v1107 = vunpack.c.l.b16 %v1049
      %v1108 = vunpack.c.l.b16 %v1053
      %v1109 = vunpack.c.l.b16 %v1056
      %v1110 = vunpack.c.l.b16 %v1060
      %v1111 = vunpack.c.l.b16 %v1063
      %v1112 = vunpack.c.l.b16 %v1067
      %v1113 = vunpack.c.l.b16 %v1070
      %v1114 = vunpack.c.l.b16 %v1074
      %v1115 = vunpack.c.l.b16 %v1077
      %v1116 = vunpack.c.l.b16 %v1081
      %v1117 = vunpack.c.l.b16 %v1084
      %v1118 = vpack.c.b16 %v1103, %v1102
      %v1119 = vpack.c.b16 %v1105, %v1104
      %v1120 = vpack.c.b16 %v1107, %v1106
      %v1121 = vpack.c.b16 %v1109, %v1108
      %v1122 = vpack.c.b16 %v1111, %v1110
      %v1123 = vpack.c.b16 %v1113, %v1112
      %v1124 = vpack.c.b16 %v1115, %v1114
      %v1125 = vpack.c.b16 %v1117, %v1116
      %v1150 = vunpack.c.l.b16 %v1086
      %v1151 = vunpack.c.l.b16 %v1087
      %v1152 = vunpack.c.l.b16 %v1088
      %v1153 = vunpack.c.l.b16 %v1089
      %v1154 = vunpack.c.l.b16 %v1090
      %v1155 = vunpack.c.l.b16 %v1091
      %v1156 = vunpack.c.l.b16 %v1092
      %v1157 = vunpack.c.l.b16 %v1093
      %v1158 = vunpack.c.l.b16 %v1094
      %v1159 = vunpack.c.l.b16 %v1095
      %v1160 = vunpack.c.l.b16 %v1096
      %v1161 = vunpack.c.l.b16 %v1097
      %v1162 = vunpack.c.l.b16 %v1098
      %v1163 = vunpack.c.l.b16 %v1099
      %v1164 = vunpack.c.l.b16 %v1100
      %v1165 = vunpack.c.l.b16 %v1101
      %v1166 = vpack.c.b16 %v1151, %v1150
      %v1167 = vpack.c.b16 %v1153, %v1152
      %v1168 = vpack.c.b16 %v1155, %v1154
      %v1169 = vpack.c.b16 %v1157, %v1156
      %v1170 = vpack.c.b16 %v1159, %v1158
      %v1171 = vpack.c.b16 %v1161, %v1160
      %v1172 = vpack.c.b16 %v1163, %v1162
      %v1173 = vpack.c.b16 %v1165, %v1164
      %1182 = vmatprep.subr.bf16.mxu0 0
      %1183 = vmatpush1.bf16.msra.mxu0 %v1173
      %1184 = vmatprep.subr.bf16.mxu0 0
      %1185 = vmatpush1.bf16.msra.mxu0 %v1172
      %1186 = vmatprep.subr.bf16.mxu0 0
      %1187 = vmatpush1.bf16.msra.mxu0 %v1171
      %1188 = vmatprep.subr.bf16.mxu0 0
      %1189 = vmatpush1.bf16.msra.mxu0 %v1170
      %1190 = vmatprep.subr.bf16.mxu0 0
      %1191 = vmatpush1.bf16.msra.mxu0 %v1169
      %1192 = vmatprep.subr.bf16.mxu0 0
      %1193 = vmatpush1.bf16.msra.mxu0 %v1168
      %1194 = vmatprep.subr.bf16.mxu0 0
      %1195 = vmatpush1.bf16.msra.mxu0 %v1167
      %1196 = vmatprep.subr.bf16.mxu0 0
      %1197 = vmatpush1.bf16.msra.mxu0 %v1166
      %1198 = vmatprep.subr.bf16.mxu0 0
      %1199 = vmatpush2.bf16.msra.mxu0 0
      %1200 = vmatprep.subr.bf16.mxu0 0
      %1201 = vmatpush2.bf16.msra.mxu0 0
      %1202 = vmatprep.subr.bf16.mxu0 0
      %1203 = vmatpush2.bf16.msra.mxu0 0
      %1204 = vmatprep.subr.bf16.mxu0 0
      %1205 = vmatpush2.bf16.msra.mxu0 0
      %1206 = vmatprep.subr.bf16.mxu0 0
      %1207 = vmatpush2.bf16.msra.mxu0 0
      %1208 = vmatprep.subr.bf16.mxu0 0
      %1209 = vmatpush2.bf16.msra.mxu0 0
      %1210 = vmatprep.subr.bf16.mxu0 0
      %1211 = vmatpush2.bf16.msra.mxu0 0
      %1212 = vmatprep.subr.bf16.mxu0 0
      %1213 = vmatpush2.bf16.msra.mxu0 0
      %1214 = vmatprep.mubr.bf16.mxu0 0
      %1215 = vmatmul.mubr.bf16.gmra.mxu0 %v1118
      %v1216 = vpop.f32.mrf.mxu0
      %v1217 = vadd.f32 0.0, %v1216
      %v1218 = vpop.f32.mrf.mxu0
      %v1219 = vpop.f32.mrf.mxu0
      %v1220 = vadd.f32 0.0, %v1219
      %v1221 = vpop.f32.mrf.mxu0
      %1222 = vmatprep.mubr.bf16.mxu0 0
      %1223 = vmatmul.mubr.bf16.gmra.mxu0 %v1119
      %v1224 = vpop.f32.mrf.mxu0
      %v1225 = vadd.f32 0.0, %v1224
      %v1226 = vpop.f32.mrf.mxu0
      %v1227 = vpop.f32.mrf.mxu0
      %v1228 = vadd.f32 0.0, %v1227
      %v1229 = vpop.f32.mrf.mxu0
      %1230 = vmatprep.mubr.bf16.mxu0 0
      %1231 = vmatmul.mubr.bf16.gmra.mxu0 %v1120
      %v1232 = vpop.f32.mrf.mxu0
      %v1233 = vadd.f32 0.0, %v1232
      %v1234 = vpop.f32.mrf.mxu0
      %v1235 = vpop.f32.mrf.mxu0
      %v1236 = vadd.f32 0.0, %v1235
      %v1237 = vpop.f32.mrf.mxu0
      %1238 = vmatprep.mubr.bf16.mxu0 0
      %1239 = vmatmul.mubr.bf16.gmra.mxu0 %v1121
      %v1240 = vpop.f32.mrf.mxu0
      %v1241 = vadd.f32 0.0, %v1240
      %v1242 = vpop.f32.mrf.mxu0
      %v1243 = vpop.f32.mrf.mxu0
      %v1244 = vadd.f32 0.0, %v1243
      %v1245 = vpop.f32.mrf.mxu0
      %1246 = vmatprep.mubr.bf16.mxu0 0
      %1247 = vmatmul.mubr.bf16.gmra.mxu0 %v1122
      %v1248 = vpop.f32.mrf.mxu0
      %v1249 = vadd.f32 0.0, %v1248
      %v1250 = vpop.f32.mrf.mxu0
      %v1251 = vpop.f32.mrf.mxu0
      %v1252 = vadd.f32 0.0, %v1251
      %v1253 = vpop.f32.mrf.mxu0
      %1254 = vmatprep.mubr.bf16.mxu0 0
      %1255 = vmatmul.mubr.bf16.gmra.mxu0 %v1123
      %v1256 = vpop.f32.mrf.mxu0
      %v1257 = vadd.f32 0.0, %v1256
      %v1258 = vpop.f32.mrf.mxu0
      %v1259 = vpop.f32.mrf.mxu0
      %v1260 = vadd.f32 0.0, %v1259
      %v1261 = vpop.f32.mrf.mxu0
      %1262 = vmatprep.mubr.bf16.mxu0 0
      %1263 = vmatmul.mubr.bf16.gmra.mxu0 %v1124
      %v1264 = vpop.f32.mrf.mxu0
      %v1265 = vadd.f32 0.0, %v1264
      %v1266 = vpop.f32.mrf.mxu0
      %v1267 = vpop.f32.mrf.mxu0
      %v1268 = vadd.f32 0.0, %v1267
      %v1269 = vpop.f32.mrf.mxu0
      %1270 = vmatprep.mubr.bf16.mxu0 0
      %1271 = vmatmul.mubr.bf16.gmra.mxu0 %v1125
      %v1272 = vpop.f32.mrf.mxu0
      %v1273 = vadd.f32 0.0, %v1272
      %v1274 = vpop.f32.mrf.mxu0
      %v1275 = vpop.f32.mrf.mxu0
      %v1276 = vadd.f32 0.0, %v1275
      %v1277 = vpop.f32.mrf.mxu0
      %1278 = vdwg.mxu0
      %v1279 = vadd.f32 %v956, %v1217
      %v1280 = vadd.f32 %v959, %v1220
      %v1281 = vadd.f32 %v964, %v1225
      %v1282 = vadd.f32 %v967, %v1228
      %v1283 = vadd.f32 %v972, %v1233
      %v1284 = vadd.f32 %v975, %v1236
      %v1285 = vadd.f32 %v980, %v1241
      %v1286 = vadd.f32 %v983, %v1244
      %v1287 = vadd.f32 %v988, %v1249
      %v1288 = vadd.f32 %v991, %v1252
      %v1289 = vadd.f32 %v996, %v1257
      %v1290 = vadd.f32 %v999, %v1260
      %v1291 = vadd.f32 %v1004, %v1265
      %v1292 = vadd.f32 %v1007, %v1268
      %v1293 = vadd.f32 %v1012, %v1273
      %v1294 = vadd.f32 %v1015, %v1276
      %s1295 = scalar_lea.vmem %s1, 192
      %v1296 = vld [vmem:[%s1295] sm:$0xf]
      %v1297 = vld [vmem:[%s1295 + $0x4] sm:$0xf]
      %v1298 = vld [vmem:[%s1295 + $0x8] sm:$0xf]
      %v1299 = vld [vmem:[%s1295 + $0xc] sm:$0xf]
      %v1300 = vld [vmem:[%s1295 + $0x10] sm:$0xf]
      %v1301 = vld [vmem:[%s1295 + $0x14] sm:$0xf]
      %v1302 = vld [vmem:[%s1295 + $0x18] sm:$0xf]
      %v1303 = vld [vmem:[%s1295 + $0x1c] sm:$0xf]
      %v1304 = vld [vmem:[%s1295 + $0x20] sm:$0xf]
      %v1305 = vld [vmem:[%s1295 + $0x24] sm:$0xf]
      %v1306 = vld [vmem:[%s1295 + $0x28] sm:$0xf]
      %v1307 = vld [vmem:[%s1295 + $0x2c] sm:$0xf]
      %v1308 = vld [vmem:[%s1295 + $0x30] sm:$0xf]
      %v1309 = vld [vmem:[%s1295 + $0x34] sm:$0xf]
      %v1310 = vld [vmem:[%s1295 + $0x38] sm:$0xf]
      %v1311 = vld [vmem:[%s1295 + $0x3c] sm:$0xf]
      %v1314 = vunpack.c.l.b16 %v414
      %v1315 = vunpack.c.l.b16 %v415
      %v1316 = vpack.c.b16 %v1315, %v1314
      %v1334 = vunpack.c.l.b16 %v1296
      %v1335 = vunpack.c.l.b16 %v1297
      %v1336 = vunpack.c.l.b16 %v1298
      %v1337 = vunpack.c.l.b16 %v1299
      %v1338 = vunpack.c.l.b16 %v1300
      %v1339 = vunpack.c.l.b16 %v1301
      %v1340 = vunpack.c.l.b16 %v1302
      %v1341 = vunpack.c.l.b16 %v1303
      %v1342 = vunpack.c.l.b16 %v1304
      %v1343 = vunpack.c.l.b16 %v1305
      %v1344 = vunpack.c.l.b16 %v1306
      %v1345 = vunpack.c.l.b16 %v1307
      %v1346 = vunpack.c.l.b16 %v1308
      %v1347 = vunpack.c.l.b16 %v1309
      %v1348 = vunpack.c.l.b16 %v1310
      %v1349 = vunpack.c.l.b16 %v1311
      %v1350 = vpack.c.b16 %v1335, %v1334
      %v1351 = vpack.c.b16 %v1337, %v1336
      %v1352 = vpack.c.b16 %v1339, %v1338
      %v1353 = vpack.c.b16 %v1341, %v1340
      %v1354 = vpack.c.b16 %v1343, %v1342
      %v1355 = vpack.c.b16 %v1345, %v1344
      %v1356 = vpack.c.b16 %v1347, %v1346
      %v1357 = vpack.c.b16 %v1349, %v1348
      %1366 = vmatprep.subr.bf16.mxu0 0
      %1367 = vmatpush1.bf16.msra.mxu0 %v1357
      %1368 = vmatprep.subr.bf16.mxu0 0
      %1369 = vmatpush1.bf16.msra.mxu0 %v1356
      %1370 = vmatprep.subr.bf16.mxu0 0
      %1371 = vmatpush1.bf16.msra.mxu0 %v1355
      %1372 = vmatprep.subr.bf16.mxu0 0
      %1373 = vmatpush1.bf16.msra.mxu0 %v1354
      %1374 = vmatprep.subr.bf16.mxu0 0
      %1375 = vmatpush1.bf16.msra.mxu0 %v1353
      %1376 = vmatprep.subr.bf16.mxu0 0
      %1377 = vmatpush1.bf16.msra.mxu0 %v1352
      %1378 = vmatprep.subr.bf16.mxu0 0
      %1379 = vmatpush1.bf16.msra.mxu0 %v1351
      %1380 = vmatprep.subr.bf16.mxu0 0
      %1381 = vmatpush1.bf16.msra.mxu0 %v1350
      %1382 = vmatprep.subr.bf16.mxu0 0
      %1383 = vmatpush2.bf16.msra.mxu0 0
      %1384 = vmatprep.subr.bf16.mxu0 0
      %1385 = vmatpush2.bf16.msra.mxu0 0
      %1386 = vmatprep.subr.bf16.mxu0 0
      %1387 = vmatpush2.bf16.msra.mxu0 0
      %1388 = vmatprep.subr.bf16.mxu0 0
      %1389 = vmatpush2.bf16.msra.mxu0 0
      %1390 = vmatprep.subr.bf16.mxu0 0
      %1391 = vmatpush2.bf16.msra.mxu0 0
      %1392 = vmatprep.subr.bf16.mxu0 0
      %1393 = vmatpush2.bf16.msra.mxu0 0
      %1394 = vmatprep.subr.bf16.mxu0 0
      %1395 = vmatpush2.bf16.msra.mxu0 0
      %1396 = vmatprep.subr.bf16.mxu0 0
      %1397 = vmatpush2.bf16.msra.mxu0 0
      %1398 = vmatprep.mubr.bf16.mxu0 0
      %1399 = vmatmul.mubr.bf16.gmra.mxu0 %v858
      %v1400 = vpop.f32.mrf.mxu0
      %v1401 = vadd.f32 0.0, %v1400
      %v1402 = vpop.f32.mrf.mxu0
      %v1403 = vpop.f32.mrf.mxu0
      %v1404 = vadd.f32 0.0, %v1403
      %v1405 = vpop.f32.mrf.mxu0
      %1406 = vmatprep.mubr.bf16.mxu0 0
      %1407 = vmatmul.mubr.bf16.gmra.mxu0 %v859
      %v1408 = vpop.f32.mrf.mxu0
      %v1409 = vadd.f32 0.0, %v1408
      %v1410 = vpop.f32.mrf.mxu0
      %v1411 = vpop.f32.mrf.mxu0
      %v1412 = vadd.f32 0.0, %v1411
      %v1413 = vpop.f32.mrf.mxu0
      %1414 = vmatprep.mubr.bf16.mxu0 0
      %1415 = vmatmul.mubr.bf16.gmra.mxu0 %v860
      %v1416 = vpop.f32.mrf.mxu0
      %v1417 = vadd.f32 0.0, %v1416
      %v1418 = vpop.f32.mrf.mxu0
      %v1419 = vpop.f32.mrf.mxu0
      %v1420 = vadd.f32 0.0, %v1419
      %v1421 = vpop.f32.mrf.mxu0
      %1422 = vmatprep.mubr.bf16.mxu0 0
      %1423 = vmatmul.mubr.bf16.gmra.mxu0 %v861
      %v1424 = vpop.f32.mrf.mxu0
      %v1425 = vadd.f32 0.0, %v1424
      %v1426 = vpop.f32.mrf.mxu0
      %v1427 = vpop.f32.mrf.mxu0
      %v1428 = vadd.f32 0.0, %v1427
      %v1429 = vpop.f32.mrf.mxu0
      %1430 = vmatprep.mubr.bf16.mxu0 0
      %1431 = vmatmul.mubr.bf16.gmra.mxu0 %v862
      %v1432 = vpop.f32.mrf.mxu0
      %v1433 = vadd.f32 0.0, %v1432
      %v1434 = vpop.f32.mrf.mxu0
      %v1435 = vpop.f32.mrf.mxu0
      %v1436 = vadd.f32 0.0, %v1435
      %v1437 = vpop.f32.mrf.mxu0
      %1438 = vmatprep.mubr.bf16.mxu0 0
      %1439 = vmatmul.mubr.bf16.gmra.mxu0 %v863
      %v1440 = vpop.f32.mrf.mxu0
      %v1441 = vadd.f32 0.0, %v1440
      %v1442 = vpop.f32.mrf.mxu0
      %v1443 = vpop.f32.mrf.mxu0
      %v1444 = vadd.f32 0.0, %v1443
      %v1445 = vpop.f32.mrf.mxu0
      %1446 = vmatprep.mubr.bf16.mxu0 0
      %1447 = vmatmul.mubr.bf16.gmra.mxu0 %v864
      %v1448 = vpop.f32.mrf.mxu0
      %v1449 = vadd.f32 0.0, %v1448
      %v1450 = vpop.f32.mrf.mxu0
      %v1451 = vpop.f32.mrf.mxu0
      %v1452 = vadd.f32 0.0, %v1451
      %v1453 = vpop.f32.mrf.mxu0
      %1454 = vmatprep.mubr.bf16.mxu0 0
      %1455 = vmatmul.mubr.bf16.gmra.mxu0 %v1316
      %v1456 = vpop.f32.mrf.mxu0
      %v1457 = vadd.f32 0.0, %v1456
      %v1458 = vpop.f32.mrf.mxu0
      %v1459 = vpop.f32.mrf.mxu0
      %v1460 = vadd.f32 0.0, %v1459
      %v1461 = vpop.f32.mrf.mxu0
      %1462 = vdwg.mxu0
      %v1463 = vadd.f32 %v1279, %v1401
      %v1464 = vadd.f32 %v1280, %v1404
      %v1465 = vadd.f32 %v1281, %v1409
      %v1466 = vadd.f32 %v1282, %v1412
      %v1467 = vadd.f32 %v1283, %v1417
      %v1468 = vadd.f32 %v1284, %v1420
      %v1469 = vadd.f32 %v1285, %v1425
      %v1470 = vadd.f32 %v1286, %v1428
      %v1471 = vadd.f32 %v1287, %v1433
      %v1472 = vadd.f32 %v1288, %v1436
      %v1473 = vadd.f32 %v1289, %v1441
      %v1474 = vadd.f32 %v1290, %v1444
      %v1475 = vadd.f32 %v1291, %v1449
      %v1476 = vadd.f32 %v1292, %v1452
      %v1477 = vadd.f32 %v1293, %v1457
      %v1478 = vadd.f32 %v1294, %v1460
      %v1480 = vshrl.u32 %v414, 16
      %v1482 = vrot.slane %v1480, 4
      %v1483 = vshll.u32 %v414, 16
      %v1485 = vrot.slane %v1483, 5
      %v1486 = vor.u32 %v1482, %v1485
      %v1487 = vrot.slane %v1486, 4
      %v1489 = vshll.u32 %v415, 16
      %v1491 = vrot.slane %v1489, 5
      %v1492 = vsel %vm438, %v1487, %v1491
      %v1493 = vshrl.u32 %v415, 16
      %v1495 = vrot.slane %v1493, 4
      %v1496 = vor.u32 %v1495, %v1491
      %v1497 = vrot.slane %v1496, 4
      %v1499 = vshll.u32 %v416, 16
      %v1501 = vrot.slane %v1499, 5
      %v1502 = vsel %vm438, %v1497, %v1501
      %s1503 = scalar_lea.vmem %s1, 256
      %v1504 = vld [vmem:[%s1503] sm:$0xf]
      %v1505 = vld [vmem:[%s1503 + $0x4] sm:$0xf]
      %v1506 = vld [vmem:[%s1503 + $0x8] sm:$0xf]
      %v1507 = vld [vmem:[%s1503 + $0xc] sm:$0xf]
      %v1508 = vld [vmem:[%s1503 + $0x10] sm:$0xf]
      %v1509 = vld [vmem:[%s1503 + $0x14] sm:$0xf]
      %v1510 = vld [vmem:[%s1503 + $0x18] sm:$0xf]
      %v1511 = vld [vmem:[%s1503 + $0x1c] sm:$0xf]
      %v1512 = vld [vmem:[%s1503 + $0x20] sm:$0xf]
      %v1513 = vld [vmem:[%s1503 + $0x24] sm:$0xf]
      %v1514 = vld [vmem:[%s1503 + $0x28] sm:$0xf]
      %v1515 = vld [vmem:[%s1503 + $0x2c] sm:$0xf]
      %v1516 = vld [vmem:[%s1503 + $0x30] sm:$0xf]
      %v1517 = vld [vmem:[%s1503 + $0x34] sm:$0xf]
      %v1518 = vld [vmem:[%s1503 + $0x38] sm:$0xf]
      %v1519 = vld [vmem:[%s1503 + $0x3c] sm:$0xf]
      %v1520 = vunpack.c.l.b16 %v1492
      %v1521 = vunpack.c.l.b16 %v1502
      %v1522 = vpack.c.b16 %v1521, %v1520
      %v1540 = vunpack.c.l.b16 %v1504
      %v1541 = vunpack.c.l.b16 %v1505
      %v1542 = vunpack.c.l.b16 %v1506
      %v1543 = vunpack.c.l.b16 %v1507
      %v1544 = vunpack.c.l.b16 %v1508
      %v1545 = vunpack.c.l.b16 %v1509
      %v1546 = vunpack.c.l.b16 %v1510
      %v1547 = vunpack.c.l.b16 %v1511
      %v1548 = vunpack.c.l.b16 %v1512
      %v1549 = vunpack.c.l.b16 %v1513
      %v1550 = vunpack.c.l.b16 %v1514
      %v1551 = vunpack.c.l.b16 %v1515
      %v1552 = vunpack.c.l.b16 %v1516
      %v1553 = vunpack.c.l.b16 %v1517
      %v1554 = vunpack.c.l.b16 %v1518
      %v1555 = vunpack.c.l.b16 %v1519
      %v1556 = vpack.c.b16 %v1541, %v1540
      %v1557 = vpack.c.b16 %v1543, %v1542
      %v1558 = vpack.c.b16 %v1545, %v1544
      %v1559 = vpack.c.b16 %v1547, %v1546
      %v1560 = vpack.c.b16 %v1549, %v1548
      %v1561 = vpack.c.b16 %v1551, %v1550
      %v1562 = vpack.c.b16 %v1553, %v1552
      %v1563 = vpack.c.b16 %v1555, %v1554
      %1572 = vmatprep.subr.bf16.mxu0 0
      %1573 = vmatpush1.bf16.msra.mxu0 %v1563
      %1574 = vmatprep.subr.bf16.mxu0 0
      %1575 = vmatpush1.bf16.msra.mxu0 %v1562
      %1576 = vmatprep.subr.bf16.mxu0 0
      %1577 = vmatpush1.bf16.msra.mxu0 %v1561
      %1578 = vmatprep.subr.bf16.mxu0 0
      %1579 = vmatpush1.bf16.msra.mxu0 %v1560
      %1580 = vmatprep.subr.bf16.mxu0 0
      %1581 = vmatpush1.bf16.msra.mxu0 %v1559
      %1582 = vmatprep.subr.bf16.mxu0 0
      %1583 = vmatpush1.bf16.msra.mxu0 %v1558
      %1584 = vmatprep.subr.bf16.mxu0 0
      %1585 = vmatpush1.bf16.msra.mxu0 %v1557
      %1586 = vmatprep.subr.bf16.mxu0 0
      %1587 = vmatpush1.bf16.msra.mxu0 %v1556
      %1588 = vmatprep.subr.bf16.mxu0 0
      %1589 = vmatpush2.bf16.msra.mxu0 0
      %1590 = vmatprep.subr.bf16.mxu0 0
      %1591 = vmatpush2.bf16.msra.mxu0 0
      %1592 = vmatprep.subr.bf16.mxu0 0
      %1593 = vmatpush2.bf16.msra.mxu0 0
      %1594 = vmatprep.subr.bf16.mxu0 0
      %1595 = vmatpush2.bf16.msra.mxu0 0
      %1596 = vmatprep.subr.bf16.mxu0 0
      %1597 = vmatpush2.bf16.msra.mxu0 0
      %1598 = vmatprep.subr.bf16.mxu0 0
      %1599 = vmatpush2.bf16.msra.mxu0 0
      %1600 = vmatprep.subr.bf16.mxu0 0
      %1601 = vmatpush2.bf16.msra.mxu0 0
      %1602 = vmatprep.subr.bf16.mxu0 0
      %1603 = vmatpush2.bf16.msra.mxu0 0
      %1604 = vmatprep.mubr.bf16.mxu0 0
      %1605 = vmatmul.mubr.bf16.gmra.mxu0 %v665
      %v1606 = vpop.f32.mrf.mxu0
      %v1607 = vadd.f32 0.0, %v1606
      %v1608 = vpop.f32.mrf.mxu0
      %v1609 = vpop.f32.mrf.mxu0
      %v1610 = vadd.f32 0.0, %v1609
      %v1611 = vpop.f32.mrf.mxu0
      %1612 = vmatprep.mubr.bf16.mxu0 0
      %1613 = vmatmul.mubr.bf16.gmra.mxu0 %v666
      %v1614 = vpop.f32.mrf.mxu0
      %v1615 = vadd.f32 0.0, %v1614
      %v1616 = vpop.f32.mrf.mxu0
      %v1617 = vpop.f32.mrf.mxu0
      %v1618 = vadd.f32 0.0, %v1617
      %v1619 = vpop.f32.mrf.mxu0
      %1620 = vmatprep.mubr.bf16.mxu0 0
      %1621 = vmatmul.mubr.bf16.gmra.mxu0 %v667
      %v1622 = vpop.f32.mrf.mxu0
      %v1623 = vadd.f32 0.0, %v1622
      %v1624 = vpop.f32.mrf.mxu0
      %v1625 = vpop.f32.mrf.mxu0
      %v1626 = vadd.f32 0.0, %v1625
      %v1627 = vpop.f32.mrf.mxu0
      %1628 = vmatprep.mubr.bf16.mxu0 0
      %1629 = vmatmul.mubr.bf16.gmra.mxu0 %v668
      %v1630 = vpop.f32.mrf.mxu0
      %v1631 = vadd.f32 0.0, %v1630
      %v1632 = vpop.f32.mrf.mxu0
      %v1633 = vpop.f32.mrf.mxu0
      %v1634 = vadd.f32 0.0, %v1633
      %v1635 = vpop.f32.mrf.mxu0
      %1636 = vmatprep.mubr.bf16.mxu0 0
      %1637 = vmatmul.mubr.bf16.gmra.mxu0 %v669
      %v1638 = vpop.f32.mrf.mxu0
      %v1639 = vadd.f32 0.0, %v1638
      %v1640 = vpop.f32.mrf.mxu0
      %v1641 = vpop.f32.mrf.mxu0
      %v1642 = vadd.f32 0.0, %v1641
      %v1643 = vpop.f32.mrf.mxu0
      %1644 = vmatprep.mubr.bf16.mxu0 0
      %1645 = vmatmul.mubr.bf16.gmra.mxu0 %v670
      %v1646 = vpop.f32.mrf.mxu0
      %v1647 = vadd.f32 0.0, %v1646
      %v1648 = vpop.f32.mrf.mxu0
      %v1649 = vpop.f32.mrf.mxu0
      %v1650 = vadd.f32 0.0, %v1649
      %v1651 = vpop.f32.mrf.mxu0
      %1652 = vmatprep.mubr.bf16.mxu0 0
      %1653 = vmatmul.mubr.bf16.gmra.mxu0 %v671
      %v1654 = vpop.f32.mrf.mxu0
      %v1655 = vadd.f32 0.0, %v1654
      %v1656 = vpop.f32.mrf.mxu0
      %v1657 = vpop.f32.mrf.mxu0
      %v1658 = vadd.f32 0.0, %v1657
      %v1659 = vpop.f32.mrf.mxu0
      %1660 = vmatprep.mubr.bf16.mxu0 0
      %1661 = vmatmul.mubr.bf16.gmra.mxu0 %v1522
      %v1662 = vpop.f32.mrf.mxu0
      %v1663 = vadd.f32 0.0, %v1662
      %v1664 = vpop.f32.mrf.mxu0
      %v1665 = vpop.f32.mrf.mxu0
      %v1666 = vadd.f32 0.0, %v1665
      %v1667 = vpop.f32.mrf.mxu0
      %1668 = vdwg.mxu0
      %v1669 = vadd.f32 %v1463, %v1607
      %v1670 = vadd.f32 %v1464, %v1610
      %v1671 = vadd.f32 %v1465, %v1615
      %v1672 = vadd.f32 %v1466, %v1618
      %v1673 = vadd.f32 %v1467, %v1623
      %v1674 = vadd.f32 %v1468, %v1626
      %v1675 = vadd.f32 %v1469, %v1631
      %v1676 = vadd.f32 %v1470, %v1634
      %v1677 = vadd.f32 %v1471, %v1639
      %v1678 = vadd.f32 %v1472, %v1642
      %v1679 = vadd.f32 %v1473, %v1647
      %v1680 = vadd.f32 %v1474, %v1650
      %v1681 = vadd.f32 %v1475, %v1655
      %v1682 = vadd.f32 %v1476, %v1658
      %v1683 = vadd.f32 %v1477, %v1663
      %v1684 = vadd.f32 %v1478, %v1666
      %v1686 = vrot.slane %v414, 5
      %v1687 = vrot.slane %v1686, 4
      %v1688 = vrot.slane %v415, 5
      %v1689 = vsel %vm1028, %v1687, %v1688
      %v1690 = vrot.slane %v1688, 4
      %v1691 = vrot.slane %v416, 5
      %v1692 = vsel %vm1028, %v1690, %v1691
      %s1693 = scalar_lea.vmem %s1, 320
      %v1694 = vld [vmem:[%s1693] sm:$0xf]
      %v1695 = vld [vmem:[%s1693 + $0x4] sm:$0xf]
      %v1696 = vld [vmem:[%s1693 + $0x8] sm:$0xf]
      %v1697 = vld [vmem:[%s1693 + $0xc] sm:$0xf]
      %v1698 = vld [vmem:[%s1693 + $0x10] sm:$0xf]
      %v1699 = vld [vmem:[%s1693 + $0x14] sm:$0xf]
      %v1700 = vld [vmem:[%s1693 + $0x18] sm:$0xf]
      %v1701 = vld [vmem:[%s1693 + $0x1c] sm:$0xf]
      %v1702 = vld [vmem:[%s1693 + $0x20] sm:$0xf]
      %v1703 = vld [vmem:[%s1693 + $0x24] sm:$0xf]
      %v1704 = vld [vmem:[%s1693 + $0x28] sm:$0xf]
      %v1705 = vld [vmem:[%s1693 + $0x2c] sm:$0xf]
      %v1706 = vld [vmem:[%s1693 + $0x30] sm:$0xf]
      %v1707 = vld [vmem:[%s1693 + $0x34] sm:$0xf]
      %v1708 = vld [vmem:[%s1693 + $0x38] sm:$0xf]
      %v1709 = vld [vmem:[%s1693 + $0x3c] sm:$0xf]
      %v1710 = vunpack.c.l.b16 %v1689
      %v1711 = vunpack.c.l.b16 %v1692
      %v1712 = vpack.c.b16 %v1711, %v1710
      %v1730 = vunpack.c.l.b16 %v1694
      %v1731 = vunpack.c.l.b16 %v1695
      %v1732 = vunpack.c.l.b16 %v1696
      %v1733 = vunpack.c.l.b16 %v1697
      %v1734 = vunpack.c.l.b16 %v1698
      %v1735 = vunpack.c.l.b16 %v1699
      %v1736 = vunpack.c.l.b16 %v1700
      %v1737 = vunpack.c.l.b16 %v1701
      %v1738 = vunpack.c.l.b16 %v1702
      %v1739 = vunpack.c.l.b16 %v1703
      %v1740 = vunpack.c.l.b16 %v1704
      %v1741 = vunpack.c.l.b16 %v1705
      %v1742 = vunpack.c.l.b16 %v1706
      %v1743 = vunpack.c.l.b16 %v1707
      %v1744 = vunpack.c.l.b16 %v1708
      %v1745 = vunpack.c.l.b16 %v1709
      %v1746 = vpack.c.b16 %v1731, %v1730
      %v1747 = vpack.c.b16 %v1733, %v1732
      %v1748 = vpack.c.b16 %v1735, %v1734
      %v1749 = vpack.c.b16 %v1737, %v1736
      %v1750 = vpack.c.b16 %v1739, %v1738
      %v1751 = vpack.c.b16 %v1741, %v1740
      %v1752 = vpack.c.b16 %v1743, %v1742
      %v1753 = vpack.c.b16 %v1745, %v1744
      %1762 = vmatprep.subr.bf16.mxu0 0
      %1763 = vmatpush1.bf16.msra.mxu0 %v1753
      %1764 = vmatprep.subr.bf16.mxu0 0
      %1765 = vmatpush1.bf16.msra.mxu0 %v1752
      %1766 = vmatprep.subr.bf16.mxu0 0
      %1767 = vmatpush1.bf16.msra.mxu0 %v1751
      %1768 = vmatprep.subr.bf16.mxu0 0
      %1769 = vmatpush1.bf16.msra.mxu0 %v1750
      %1770 = vmatprep.subr.bf16.mxu0 0
      %1771 = vmatpush1.bf16.msra.mxu0 %v1749
      %1772 = vmatprep.subr.bf16.mxu0 0
      %1773 = vmatpush1.bf16.msra.mxu0 %v1748
      %1774 = vmatprep.subr.bf16.mxu0 0
      %1775 = vmatpush1.bf16.msra.mxu0 %v1747
      %1776 = vmatprep.subr.bf16.mxu0 0
      %1777 = vmatpush1.bf16.msra.mxu0 %v1746
      %1778 = vmatprep.subr.bf16.mxu0 0
      %1779 = vmatpush2.bf16.msra.mxu0 0
      %1780 = vmatprep.subr.bf16.mxu0 0
      %1781 = vmatpush2.bf16.msra.mxu0 0
      %1782 = vmatprep.subr.bf16.mxu0 0
      %1783 = vmatpush2.bf16.msra.mxu0 0
      %1784 = vmatprep.subr.bf16.mxu0 0
      %1785 = vmatpush2.bf16.msra.mxu0 0
      %1786 = vmatprep.subr.bf16.mxu0 0
      %1787 = vmatpush2.bf16.msra.mxu0 0
      %1788 = vmatprep.subr.bf16.mxu0 0
      %1789 = vmatpush2.bf16.msra.mxu0 0
      %1790 = vmatprep.subr.bf16.mxu0 0
      %1791 = vmatpush2.bf16.msra.mxu0 0
      %1792 = vmatprep.subr.bf16.mxu0 0
      %1793 = vmatpush2.bf16.msra.mxu0 0
      %1794 = vmatprep.mubr.bf16.mxu0 0
      %1795 = vmatmul.mubr.bf16.gmra.mxu0 %v1119
      %v1796 = vpop.f32.mrf.mxu0
      %v1797 = vadd.f32 0.0, %v1796
      %v1798 = vpop.f32.mrf.mxu0
      %v1799 = vpop.f32.mrf.mxu0
      %v1800 = vadd.f32 0.0, %v1799
      %v1801 = vpop.f32.mrf.mxu0
      %1802 = vmatprep.mubr.bf16.mxu0 0
      %1803 = vmatmul.mubr.bf16.gmra.mxu0 %v1120
      %v1804 = vpop.f32.mrf.mxu0
      %v1805 = vadd.f32 0.0, %v1804
      %v1806 = vpop.f32.mrf.mxu0
      %v1807 = vpop.f32.mrf.mxu0
      %v1808 = vadd.f32 0.0, %v1807
      %v1809 = vpop.f32.mrf.mxu0
      %1810 = vmatprep.mubr.bf16.mxu0 0
      %1811 = vmatmul.mubr.bf16.gmra.mxu0 %v1121
      %v1812 = vpop.f32.mrf.mxu0
      %v1813 = vadd.f32 0.0, %v1812
      %v1814 = vpop.f32.mrf.mxu0
      %v1815 = vpop.f32.mrf.mxu0
      %v1816 = vadd.f32 0.0, %v1815
      %v1817 = vpop.f32.mrf.mxu0
      %1818 = vmatprep.mubr.bf16.mxu0 0
      %1819 = vmatmul.mubr.bf16.gmra.mxu0 %v1122
      %v1820 = vpop.f32.mrf.mxu0
      %v1821 = vadd.f32 0.0, %v1820
      %v1822 = vpop.f32.mrf.mxu0
      %v1823 = vpop.f32.mrf.mxu0
      %v1824 = vadd.f32 0.0, %v1823
      %v1825 = vpop.f32.mrf.mxu0
      %1826 = vmatprep.mubr.bf16.mxu0 0
      %1827 = vmatmul.mubr.bf16.gmra.mxu0 %v1123
      %v1828 = vpop.f32.mrf.mxu0
      %v1829 = vadd.f32 0.0, %v1828
      %v1830 = vpop.f32.mrf.mxu0
      %v1831 = vpop.f32.mrf.mxu0
      %v1832 = vadd.f32 0.0, %v1831
      %v1833 = vpop.f32.mrf.mxu0
      %1834 = vmatprep.mubr.bf16.mxu0 0
      %1835 = vmatmul.mubr.bf16.gmra.mxu0 %v1124
      %v1836 = vpop.f32.mrf.mxu0
      %v1837 = vadd.f32 0.0, %v1836
      %v1838 = vpop.f32.mrf.mxu0
      %v1839 = vpop.f32.mrf.mxu0
      %v1840 = vadd.f32 0.0, %v1839
      %v1841 = vpop.f32.mrf.mxu0
      %1842 = vmatprep.mubr.bf16.mxu0 0
      %1843 = vmatmul.mubr.bf16.gmra.mxu0 %v1125
      %v1844 = vpop.f32.mrf.mxu0
      %v1845 = vadd.f32 0.0, %v1844
      %v1846 = vpop.f32.mrf.mxu0
      %v1847 = vpop.f32.mrf.mxu0
      %v1848 = vadd.f32 0.0, %v1847
      %v1849 = vpop.f32.mrf.mxu0
      %1850 = vmatprep.mubr.bf16.mxu0 0
      %1851 = vmatmul.mubr.bf16.gmra.mxu0 %v1712
      %v1852 = vpop.f32.mrf.mxu0
      %v1853 = vadd.f32 0.0, %v1852
      %v1854 = vpop.f32.mrf.mxu0
      %v1855 = vpop.f32.mrf.mxu0
      %v1856 = vadd.f32 0.0, %v1855
      %v1857 = vpop.f32.mrf.mxu0
      %1858 = vdwg.mxu0
      %v1859 = vadd.f32 %v1669, %v1797
      %v1860 = vadd.f32 %v1670, %v1800
      %v1861 = vadd.f32 %v1671, %v1805
      %v1862 = vadd.f32 %v1672, %v1808
      %v1863 = vadd.f32 %v1673, %v1813
      %v1864 = vadd.f32 %v1674, %v1816
      %v1865 = vadd.f32 %v1675, %v1821
      %v1866 = vadd.f32 %v1676, %v1824
      %v1867 = vadd.f32 %v1677, %v1829
      %v1868 = vadd.f32 %v1678, %v1832
      %v1869 = vadd.f32 %v1679, %v1837
      %v1870 = vadd.f32 %v1680, %v1840
      %v1871 = vadd.f32 %v1681, %v1845
      %v1872 = vadd.f32 %v1682, %v1848
      %v1873 = vadd.f32 %v1683, %v1853
      %v1874 = vadd.f32 %v1684, %v1856
      %s1875 = scalar_lea.vmem %s1, 384
      %v1876 = vld [vmem:[%s1875] sm:$0xf]
      %v1877 = vld [vmem:[%s1875 + $0x4] sm:$0xf]
      %v1878 = vld [vmem:[%s1875 + $0x8] sm:$0xf]
      %v1879 = vld [vmem:[%s1875 + $0xc] sm:$0xf]
      %v1880 = vld [vmem:[%s1875 + $0x10] sm:$0xf]
      %v1881 = vld [vmem:[%s1875 + $0x14] sm:$0xf]
      %v1882 = vld [vmem:[%s1875 + $0x18] sm:$0xf]
      %v1883 = vld [vmem:[%s1875 + $0x1c] sm:$0xf]
      %v1884 = vld [vmem:[%s1875 + $0x20] sm:$0xf]
      %v1885 = vld [vmem:[%s1875 + $0x24] sm:$0xf]
      %v1886 = vld [vmem:[%s1875 + $0x28] sm:$0xf]
      %v1887 = vld [vmem:[%s1875 + $0x2c] sm:$0xf]
      %v1888 = vld [vmem:[%s1875 + $0x30] sm:$0xf]
      %v1889 = vld [vmem:[%s1875 + $0x34] sm:$0xf]
      %v1890 = vld [vmem:[%s1875 + $0x38] sm:$0xf]
      %v1891 = vld [vmem:[%s1875 + $0x3c] sm:$0xf]
      %v1894 = vunpack.c.l.b16 %v417
      %v1895 = vunpack.c.l.b16 %v418
      %v1896 = vpack.c.b16 %v1895, %v1894
      %v1914 = vunpack.c.l.b16 %v1876
      %v1915 = vunpack.c.l.b16 %v1877
      %v1916 = vunpack.c.l.b16 %v1878
      %v1917 = vunpack.c.l.b16 %v1879
      %v1918 = vunpack.c.l.b16 %v1880
      %v1919 = vunpack.c.l.b16 %v1881
      %v1920 = vunpack.c.l.b16 %v1882
      %v1921 = vunpack.c.l.b16 %v1883
      %v1922 = vunpack.c.l.b16 %v1884
      %v1923 = vunpack.c.l.b16 %v1885
      %v1924 = vunpack.c.l.b16 %v1886
      %v1925 = vunpack.c.l.b16 %v1887
      %v1926 = vunpack.c.l.b16 %v1888
      %v1927 = vunpack.c.l.b16 %v1889
      %v1928 = vunpack.c.l.b16 %v1890
      %v1929 = vunpack.c.l.b16 %v1891
      %v1930 = vpack.c.b16 %v1915, %v1914
      %v1931 = vpack.c.b16 %v1917, %v1916
      %v1932 = vpack.c.b16 %v1919, %v1918
      %v1933 = vpack.c.b16 %v1921, %v1920
      %v1934 = vpack.c.b16 %v1923, %v1922
      %v1935 = vpack.c.b16 %v1925, %v1924
      %v1936 = vpack.c.b16 %v1927, %v1926
      %v1937 = vpack.c.b16 %v1929, %v1928
      %1946 = vmatprep.subr.bf16.mxu0 0
      %1947 = vmatpush1.bf16.msra.mxu0 %v1937
      %1948 = vmatprep.subr.bf16.mxu0 0
      %1949 = vmatpush1.bf16.msra.mxu0 %v1936
      %1950 = vmatprep.subr.bf16.mxu0 0
      %1951 = vmatpush1.bf16.msra.mxu0 %v1935
      %1952 = vmatprep.subr.bf16.mxu0 0
      %1953 = vmatpush1.bf16.msra.mxu0 %v1934
      %1954 = vmatprep.subr.bf16.mxu0 0
      %1955 = vmatpush1.bf16.msra.mxu0 %v1933
      %1956 = vmatprep.subr.bf16.mxu0 0
      %1957 = vmatpush1.bf16.msra.mxu0 %v1932
      %1958 = vmatprep.subr.bf16.mxu0 0
      %1959 = vmatpush1.bf16.msra.mxu0 %v1931
      %1960 = vmatprep.subr.bf16.mxu0 0
      %1961 = vmatpush1.bf16.msra.mxu0 %v1930
      %1962 = vmatprep.subr.bf16.mxu0 0
      %1963 = vmatpush2.bf16.msra.mxu0 0
      %1964 = vmatprep.subr.bf16.mxu0 0
      %1965 = vmatpush2.bf16.msra.mxu0 0
      %1966 = vmatprep.subr.bf16.mxu0 0
      %1967 = vmatpush2.bf16.msra.mxu0 0
      %1968 = vmatprep.subr.bf16.mxu0 0
      %1969 = vmatpush2.bf16.msra.mxu0 0
      %1970 = vmatprep.subr.bf16.mxu0 0
      %1971 = vmatpush2.bf16.msra.mxu0 0
      %1972 = vmatprep.subr.bf16.mxu0 0
      %1973 = vmatpush2.bf16.msra.mxu0 0
      %1974 = vmatprep.subr.bf16.mxu0 0
      %1975 = vmatpush2.bf16.msra.mxu0 0
      %1976 = vmatprep.subr.bf16.mxu0 0
      %1977 = vmatpush2.bf16.msra.mxu0 0
      %1978 = vmatprep.mubr.bf16.mxu0 0
      %1979 = vmatmul.mubr.bf16.gmra.mxu0 %v859
      %v1980 = vpop.f32.mrf.mxu0
      %v1981 = vadd.f32 0.0, %v1980
      %v1982 = vpop.f32.mrf.mxu0
      %v1983 = vpop.f32.mrf.mxu0
      %v1984 = vadd.f32 0.0, %v1983
      %v1985 = vpop.f32.mrf.mxu0
      %1986 = vmatprep.mubr.bf16.mxu0 0
      %1987 = vmatmul.mubr.bf16.gmra.mxu0 %v860
      %v1988 = vpop.f32.mrf.mxu0
      %v1989 = vadd.f32 0.0, %v1988
      %v1990 = vpop.f32.mrf.mxu0
      %v1991 = vpop.f32.mrf.mxu0
      %v1992 = vadd.f32 0.0, %v1991
      %v1993 = vpop.f32.mrf.mxu0
      %1994 = vmatprep.mubr.bf16.mxu0 0
      %1995 = vmatmul.mubr.bf16.gmra.mxu0 %v861
      %v1996 = vpop.f32.mrf.mxu0
      %v1997 = vadd.f32 0.0, %v1996
      %v1998 = vpop.f32.mrf.mxu0
      %v1999 = vpop.f32.mrf.mxu0
      %v2000 = vadd.f32 0.0, %v1999
      %v2001 = vpop.f32.mrf.mxu0
      %2002 = vmatprep.mubr.bf16.mxu0 0
      %2003 = vmatmul.mubr.bf16.gmra.mxu0 %v862
      %v2004 = vpop.f32.mrf.mxu0
      %v2005 = vadd.f32 0.0, %v2004
      %v2006 = vpop.f32.mrf.mxu0
      %v2007 = vpop.f32.mrf.mxu0
      %v2008 = vadd.f32 0.0, %v2007
      %v2009 = vpop.f32.mrf.mxu0
      %2010 = vmatprep.mubr.bf16.mxu0 0
      %2011 = vmatmul.mubr.bf16.gmra.mxu0 %v863
      %v2012 = vpop.f32.mrf.mxu0
      %v2013 = vadd.f32 0.0, %v2012
      %v2014 = vpop.f32.mrf.mxu0
      %v2015 = vpop.f32.mrf.mxu0
      %v2016 = vadd.f32 0.0, %v2015
      %v2017 = vpop.f32.mrf.mxu0
      %2018 = vmatprep.mubr.bf16.mxu0 0
      %2019 = vmatmul.mubr.bf16.gmra.mxu0 %v864
      %v2020 = vpop.f32.mrf.mxu0
      %v2021 = vadd.f32 0.0, %v2020
      %v2022 = vpop.f32.mrf.mxu0
      %v2023 = vpop.f32.mrf.mxu0
      %v2024 = vadd.f32 0.0, %v2023
      %v2025 = vpop.f32.mrf.mxu0
      %2026 = vmatprep.mubr.bf16.mxu0 0
      %2027 = vmatmul.mubr.bf16.gmra.mxu0 %v1316
      %v2028 = vpop.f32.mrf.mxu0
      %v2029 = vadd.f32 0.0, %v2028
      %v2030 = vpop.f32.mrf.mxu0
      %v2031 = vpop.f32.mrf.mxu0
      %v2032 = vadd.f32 0.0, %v2031
      %v2033 = vpop.f32.mrf.mxu0
      %2034 = vmatprep.mubr.bf16.mxu0 0
      %2035 = vmatmul.mubr.bf16.gmra.mxu0 %v1896
      %v2036 = vpop.f32.mrf.mxu0
      %v2037 = vadd.f32 0.0, %v2036
      %v2038 = vpop.f32.mrf.mxu0
      %v2039 = vpop.f32.mrf.mxu0
      %v2040 = vadd.f32 0.0, %v2039
      %v2041 = vpop.f32.mrf.mxu0
      %2042 = vdwg.mxu0
      %v2043 = vadd.f32 %v1859, %v1981
      %v2044 = vadd.f32 %v1860, %v1984
      %v2045 = vadd.f32 %v1861, %v1989
      %v2046 = vadd.f32 %v1862, %v1992
      %v2047 = vadd.f32 %v1863, %v1997
      %v2048 = vadd.f32 %v1864, %v2000
      %v2049 = vadd.f32 %v1865, %v2005
      %v2050 = vadd.f32 %v1866, %v2008
      %v2051 = vadd.f32 %v1867, %v2013
      %v2052 = vadd.f32 %v1868, %v2016
      %v2053 = vadd.f32 %v1869, %v2021
      %v2054 = vadd.f32 %v1870, %v2024
      %v2055 = vadd.f32 %v1871, %v2029
      %v2056 = vadd.f32 %v1872, %v2032
      %v2057 = vadd.f32 %v1873, %v2037
      %v2058 = vadd.f32 %v1874, %v2040
      %v2060 = vshrl.u32 %v417, 16
      %v2062 = vrot.slane %v2060, 4
      %v2063 = vshll.u32 %v417, 16
      %v2065 = vrot.slane %v2063, 5
      %v2066 = vor.u32 %v2062, %v2065
      %v2067 = vrot.slane %v2066, 4
      %v2069 = vshll.u32 %v418, 16
      %v2071 = vrot.slane %v2069, 5
      %v2072 = vsel %vm438, %v2067, %v2071
      %v2073 = vshrl.u32 %v418, 16
      %v2075 = vrot.slane %v2073, 4
      %v2076 = vor.u32 %v2075, %v2071
      %v2077 = vrot.slane %v2076, 4
      %v2079 = vshll.u32 %v419, 16
      %v2081 = vrot.slane %v2079, 5
      %v2082 = vsel %vm438, %v2077, %v2081
      %s2083 = scalar_lea.vmem %s1, 448
      %v2084 = vld [vmem:[%s2083] sm:$0xf]
      %v2085 = vld [vmem:[%s2083 + $0x4] sm:$0xf]
      %v2086 = vld [vmem:[%s2083 + $0x8] sm:$0xf]
      %v2087 = vld [vmem:[%s2083 + $0xc] sm:$0xf]
      %v2088 = vld [vmem:[%s2083 + $0x10] sm:$0xf]
      %v2089 = vld [vmem:[%s2083 + $0x14] sm:$0xf]
      %v2090 = vld [vmem:[%s2083 + $0x18] sm:$0xf]
      %v2091 = vld [vmem:[%s2083 + $0x1c] sm:$0xf]
      %v2092 = vld [vmem:[%s2083 + $0x20] sm:$0xf]
      %v2093 = vld [vmem:[%s2083 + $0x24] sm:$0xf]
      %v2094 = vld [vmem:[%s2083 + $0x28] sm:$0xf]
      %v2095 = vld [vmem:[%s2083 + $0x2c] sm:$0xf]
      %v2096 = vld [vmem:[%s2083 + $0x30] sm:$0xf]
      %v2097 = vld [vmem:[%s2083 + $0x34] sm:$0xf]
      %v2098 = vld [vmem:[%s2083 + $0x38] sm:$0xf]
      %v2099 = vld [vmem:[%s2083 + $0x3c] sm:$0xf]
      %v2100 = vunpack.c.l.b16 %v2072
      %v2101 = vunpack.c.l.b16 %v2082
      %v2102 = vpack.c.b16 %v2101, %v2100
      %v2120 = vunpack.c.l.b16 %v2084
      %v2121 = vunpack.c.l.b16 %v2085
      %v2122 = vunpack.c.l.b16 %v2086
      %v2123 = vunpack.c.l.b16 %v2087
      %v2124 = vunpack.c.l.b16 %v2088
      %v2125 = vunpack.c.l.b16 %v2089
      %v2126 = vunpack.c.l.b16 %v2090
      %v2127 = vunpack.c.l.b16 %v2091
      %v2128 = vunpack.c.l.b16 %v2092
      %v2129 = vunpack.c.l.b16 %v2093
      %v2130 = vunpack.c.l.b16 %v2094
      %v2131 = vunpack.c.l.b16 %v2095
      %v2132 = vunpack.c.l.b16 %v2096
      %v2133 = vunpack.c.l.b16 %v2097
      %v2134 = vunpack.c.l.b16 %v2098
      %v2135 = vunpack.c.l.b16 %v2099
      %v2136 = vpack.c.b16 %v2121, %v2120
      %v2137 = vpack.c.b16 %v2123, %v2122
      %v2138 = vpack.c.b16 %v2125, %v2124
      %v2139 = vpack.c.b16 %v2127, %v2126
      %v2140 = vpack.c.b16 %v2129, %v2128
      %v2141 = vpack.c.b16 %v2131, %v2130
      %v2142 = vpack.c.b16 %v2133, %v2132
      %v2143 = vpack.c.b16 %v2135, %v2134
      %2152 = vmatprep.subr.bf16.mxu0 0
      %2153 = vmatpush1.bf16.msra.mxu0 %v2143
      %2154 = vmatprep.subr.bf16.mxu0 0
      %2155 = vmatpush1.bf16.msra.mxu0 %v2142
      %2156 = vmatprep.subr.bf16.mxu0 0
      %2157 = vmatpush1.bf16.msra.mxu0 %v2141
      %2158 = vmatprep.subr.bf16.mxu0 0
      %2159 = vmatpush1.bf16.msra.mxu0 %v2140
      %2160 = vmatprep.subr.bf16.mxu0 0
      %2161 = vmatpush1.bf16.msra.mxu0 %v2139
      %2162 = vmatprep.subr.bf16.mxu0 0
      %2163 = vmatpush1.bf16.msra.mxu0 %v2138
      %2164 = vmatprep.subr.bf16.mxu0 0
      %2165 = vmatpush1.bf16.msra.mxu0 %v2137
      %2166 = vmatprep.subr.bf16.mxu0 0
      %2167 = vmatpush1.bf16.msra.mxu0 %v2136
      %2168 = vmatprep.subr.bf16.mxu0 0
      %2169 = vmatpush2.bf16.msra.mxu0 0
      %2170 = vmatprep.subr.bf16.mxu0 0
      %2171 = vmatpush2.bf16.msra.mxu0 0
      %2172 = vmatprep.subr.bf16.mxu0 0
      %2173 = vmatpush2.bf16.msra.mxu0 0
      %2174 = vmatprep.subr.bf16.mxu0 0
      %2175 = vmatpush2.bf16.msra.mxu0 0
      %2176 = vmatprep.subr.bf16.mxu0 0
      %2177 = vmatpush2.bf16.msra.mxu0 0
      %2178 = vmatprep.subr.bf16.mxu0 0
      %2179 = vmatpush2.bf16.msra.mxu0 0
      %2180 = vmatprep.subr.bf16.mxu0 0
      %2181 = vmatpush2.bf16.msra.mxu0 0
      %2182 = vmatprep.subr.bf16.mxu0 0
      %2183 = vmatpush2.bf16.msra.mxu0 0
      %2184 = vmatprep.mubr.bf16.mxu0 0
      %2185 = vmatmul.mubr.bf16.gmra.mxu0 %v666
      %v2186 = vpop.f32.mrf.mxu0
      %v2187 = vadd.f32 0.0, %v2186
      %v2188 = vpop.f32.mrf.mxu0
      %v2189 = vpop.f32.mrf.mxu0
      %v2190 = vadd.f32 0.0, %v2189
      %v2191 = vpop.f32.mrf.mxu0
      %2192 = vmatprep.mubr.bf16.mxu0 0
      %2193 = vmatmul.mubr.bf16.gmra.mxu0 %v667
      %v2194 = vpop.f32.mrf.mxu0
      %v2195 = vadd.f32 0.0, %v2194
      %v2196 = vpop.f32.mrf.mxu0
      %v2197 = vpop.f32.mrf.mxu0
      %v2198 = vadd.f32 0.0, %v2197
      %v2199 = vpop.f32.mrf.mxu0
      %2200 = vmatprep.mubr.bf16.mxu0 0
      %2201 = vmatmul.mubr.bf16.gmra.mxu0 %v668
      %v2202 = vpop.f32.mrf.mxu0
      %v2203 = vadd.f32 0.0, %v2202
      %v2204 = vpop.f32.mrf.mxu0
      %v2205 = vpop.f32.mrf.mxu0
      %v2206 = vadd.f32 0.0, %v2205
      %v2207 = vpop.f32.mrf.mxu0
      %2208 = vmatprep.mubr.bf16.mxu0 0
      %2209 = vmatmul.mubr.bf16.gmra.mxu0 %v669
      %v2210 = vpop.f32.mrf.mxu0
      %v2211 = vadd.f32 0.0, %v2210
      %v2212 = vpop.f32.mrf.mxu0
      %v2213 = vpop.f32.mrf.mxu0
      %v2214 = vadd.f32 0.0, %v2213
      %v2215 = vpop.f32.mrf.mxu0
      %2216 = vmatprep.mubr.bf16.mxu0 0
      %2217 = vmatmul.mubr.bf16.gmra.mxu0 %v670
      %v2218 = vpop.f32.mrf.mxu0
      %v2219 = vadd.f32 0.0, %v2218
      %v2220 = vpop.f32.mrf.mxu0
      %v2221 = vpop.f32.mrf.mxu0
      %v2222 = vadd.f32 0.0, %v2221
      %v2223 = vpop.f32.mrf.mxu0
      %2224 = vmatprep.mubr.bf16.mxu0 0
      %2225 = vmatmul.mubr.bf16.gmra.mxu0 %v671
      %v2226 = vpop.f32.mrf.mxu0
      %v2227 = vadd.f32 0.0, %v2226
      %v2228 = vpop.f32.mrf.mxu0
      %v2229 = vpop.f32.mrf.mxu0
      %v2230 = vadd.f32 0.0, %v2229
      %v2231 = vpop.f32.mrf.mxu0
      %2232 = vmatprep.mubr.bf16.mxu0 0
      %2233 = vmatmul.mubr.bf16.gmra.mxu0 %v1522
      %v2234 = vpop.f32.mrf.mxu0
      %v2235 = vadd.f32 0.0, %v2234
      %v2236 = vpop.f32.mrf.mxu0
      %v2237 = vpop.f32.mrf.mxu0
      %v2238 = vadd.f32 0.0, %v2237
      %v2239 = vpop.f32.mrf.mxu0
      %2240 = vmatprep.mubr.bf16.mxu0 0
      %2241 = vmatmul.mubr.bf16.gmra.mxu0 %v2102
      %v2242 = vpop.f32.mrf.mxu0
      %v2243 = vadd.f32 0.0, %v2242
      %v2244 = vpop.f32.mrf.mxu0
      %v2245 = vpop.f32.mrf.mxu0
      %v2246 = vadd.f32 0.0, %v2245
      %v2247 = vpop.f32.mrf.mxu0
      %2248 = vdwg.mxu0
      %v2249 = vadd.f32 %v2043, %v2187
      %v2250 = vadd.f32 %v2044, %v2190
      %v2251 = vadd.f32 %v2045, %v2195
      %v2252 = vadd.f32 %v2046, %v2198
      %v2253 = vadd.f32 %v2047, %v2203
      %v2254 = vadd.f32 %v2048, %v2206
      %v2255 = vadd.f32 %v2049, %v2211
      %v2256 = vadd.f32 %v2050, %v2214
      %v2257 = vadd.f32 %v2051, %v2219
      %v2258 = vadd.f32 %v2052, %v2222
      %v2259 = vadd.f32 %v2053, %v2227
      %v2260 = vadd.f32 %v2054, %v2230
      %v2261 = vadd.f32 %v2055, %v2235
      %v2262 = vadd.f32 %v2056, %v2238
      %v2263 = vadd.f32 %v2057, %v2243
      %v2264 = vadd.f32 %v2058, %v2246
      %v2266 = vrot.slane %v417, 5
      %v2267 = vrot.slane %v2266, 4
      %v2268 = vrot.slane %v418, 5
      %v2269 = vsel %vm1028, %v2267, %v2268
      %v2270 = vrot.slane %v2268, 4
      %v2271 = vrot.slane %v419, 5
      %v2272 = vsel %vm1028, %v2270, %v2271
      %s2273 = scalar_lea.vmem %s1, 512
      %v2274 = vld [vmem:[%s2273] sm:$0xf]
      %v2275 = vld [vmem:[%s2273 + $0x4] sm:$0xf]
      %v2276 = vld [vmem:[%s2273 + $0x8] sm:$0xf]
      %v2277 = vld [vmem:[%s2273 + $0xc] sm:$0xf]
      %v2278 = vld [vmem:[%s2273 + $0x10] sm:$0xf]
      %v2279 = vld [vmem:[%s2273 + $0x14] sm:$0xf]
      %v2280 = vld [vmem:[%s2273 + $0x18] sm:$0xf]
      %v2281 = vld [vmem:[%s2273 + $0x1c] sm:$0xf]
      %v2282 = vld [vmem:[%s2273 + $0x20] sm:$0xf]
      %v2283 = vld [vmem:[%s2273 + $0x24] sm:$0xf]
      %v2284 = vld [vmem:[%s2273 + $0x28] sm:$0xf]
      %v2285 = vld [vmem:[%s2273 + $0x2c] sm:$0xf]
      %v2286 = vld [vmem:[%s2273 + $0x30] sm:$0xf]
      %v2287 = vld [vmem:[%s2273 + $0x34] sm:$0xf]
      %v2288 = vld [vmem:[%s2273 + $0x38] sm:$0xf]
      %v2289 = vld [vmem:[%s2273 + $0x3c] sm:$0xf]
      %v2290 = vunpack.c.l.b16 %v2269
      %v2291 = vunpack.c.l.b16 %v2272
      %v2292 = vpack.c.b16 %v2291, %v2290
      %v2310 = vunpack.c.l.b16 %v2274
      %v2311 = vunpack.c.l.b16 %v2275
      %v2312 = vunpack.c.l.b16 %v2276
      %v2313 = vunpack.c.l.b16 %v2277
      %v2314 = vunpack.c.l.b16 %v2278
      %v2315 = vunpack.c.l.b16 %v2279
      %v2316 = vunpack.c.l.b16 %v2280
      %v2317 = vunpack.c.l.b16 %v2281
      %v2318 = vunpack.c.l.b16 %v2282
      %v2319 = vunpack.c.l.b16 %v2283
      %v2320 = vunpack.c.l.b16 %v2284
      %v2321 = vunpack.c.l.b16 %v2285
      %v2322 = vunpack.c.l.b16 %v2286
      %v2323 = vunpack.c.l.b16 %v2287
      %v2324 = vunpack.c.l.b16 %v2288
      %v2325 = vunpack.c.l.b16 %v2289
      %v2326 = vpack.c.b16 %v2311, %v2310
      %v2327 = vpack.c.b16 %v2313, %v2312
      %v2328 = vpack.c.b16 %v2315, %v2314
      %v2329 = vpack.c.b16 %v2317, %v2316
      %v2330 = vpack.c.b16 %v2319, %v2318
      %v2331 = vpack.c.b16 %v2321, %v2320
      %v2332 = vpack.c.b16 %v2323, %v2322
      %v2333 = vpack.c.b16 %v2325, %v2324
      %2342 = vmatprep.subr.bf16.mxu0 0
      %2343 = vmatpush1.bf16.msra.mxu0 %v2333
      %2344 = vmatprep.subr.bf16.mxu0 0
      %2345 = vmatpush1.bf16.msra.mxu0 %v2332
      %2346 = vmatprep.subr.bf16.mxu0 0
      %2347 = vmatpush1.bf16.msra.mxu0 %v2331
      %2348 = vmatprep.subr.bf16.mxu0 0
      %2349 = vmatpush1.bf16.msra.mxu0 %v2330
      %2350 = vmatprep.subr.bf16.mxu0 0
      %2351 = vmatpush1.bf16.msra.mxu0 %v2329
      %2352 = vmatprep.subr.bf16.mxu0 0
      %2353 = vmatpush1.bf16.msra.mxu0 %v2328
      %2354 = vmatprep.subr.bf16.mxu0 0
      %2355 = vmatpush1.bf16.msra.mxu0 %v2327
      %2356 = vmatprep.subr.bf16.mxu0 0
      %2357 = vmatpush1.bf16.msra.mxu0 %v2326
      %2358 = vmatprep.subr.bf16.mxu0 0
      %2359 = vmatpush2.bf16.msra.mxu0 0
      %2360 = vmatprep.subr.bf16.mxu0 0
      %2361 = vmatpush2.bf16.msra.mxu0 0
      %2362 = vmatprep.subr.bf16.mxu0 0
      %2363 = vmatpush2.bf16.msra.mxu0 0
      %2364 = vmatprep.subr.bf16.mxu0 0
      %2365 = vmatpush2.bf16.msra.mxu0 0
      %2366 = vmatprep.subr.bf16.mxu0 0
      %2367 = vmatpush2.bf16.msra.mxu0 0
      %2368 = vmatprep.subr.bf16.mxu0 0
      %2369 = vmatpush2.bf16.msra.mxu0 0
      %2370 = vmatprep.subr.bf16.mxu0 0
      %2371 = vmatpush2.bf16.msra.mxu0 0
      %2372 = vmatprep.subr.bf16.mxu0 0
      %2373 = vmatpush2.bf16.msra.mxu0 0
      %2374 = vmatprep.mubr.bf16.mxu0 0
      %2375 = vmatmul.mubr.bf16.gmra.mxu0 %v1120
      %v2376 = vpop.f32.mrf.mxu0
      %v2377 = vadd.f32 0.0, %v2376
      %v2378 = vpop.f32.mrf.mxu0
      %v2379 = vpop.f32.mrf.mxu0
      %v2380 = vadd.f32 0.0, %v2379
      %v2381 = vpop.f32.mrf.mxu0
      %2382 = vmatprep.mubr.bf16.mxu0 0
      %2383 = vmatmul.mubr.bf16.gmra.mxu0 %v1121
      %v2384 = vpop.f32.mrf.mxu0
      %v2385 = vadd.f32 0.0, %v2384
      %v2386 = vpop.f32.mrf.mxu0
      %v2387 = vpop.f32.mrf.mxu0
      %v2388 = vadd.f32 0.0, %v2387
      %v2389 = vpop.f32.mrf.mxu0
      %2390 = vmatprep.mubr.bf16.mxu0 0
      %2391 = vmatmul.mubr.bf16.gmra.mxu0 %v1122
      %v2392 = vpop.f32.mrf.mxu0
      %v2393 = vadd.f32 0.0, %v2392
      %v2394 = vpop.f32.mrf.mxu0
      %v2395 = vpop.f32.mrf.mxu0
      %v2396 = vadd.f32 0.0, %v2395
      %v2397 = vpop.f32.mrf.mxu0
      %2398 = vmatprep.mubr.bf16.mxu0 0
      %2399 = vmatmul.mubr.bf16.gmra.mxu0 %v1123
      %v2400 = vpop.f32.mrf.mxu0
      %v2401 = vadd.f32 0.0, %v2400
      %v2402 = vpop.f32.mrf.mxu0
      %v2403 = vpop.f32.mrf.mxu0
      %v2404 = vadd.f32 0.0, %v2403
      %v2405 = vpop.f32.mrf.mxu0
      %2406 = vmatprep.mubr.bf16.mxu0 0
      %2407 = vmatmul.mubr.bf16.gmra.mxu0 %v1124
      %v2408 = vpop.f32.mrf.mxu0
      %v2409 = vadd.f32 0.0, %v2408
      %v2410 = vpop.f32.mrf.mxu0
      %v2411 = vpop.f32.mrf.mxu0
      %v2412 = vadd.f32 0.0, %v2411
      %v2413 = vpop.f32.mrf.mxu0
      %2414 = vmatprep.mubr.bf16.mxu0 0
      %2415 = vmatmul.mubr.bf16.gmra.mxu0 %v1125
      %v2416 = vpop.f32.mrf.mxu0
      %v2417 = vadd.f32 0.0, %v2416
      %v2418 = vpop.f32.mrf.mxu0
      %v2419 = vpop.f32.mrf.mxu0
      %v2420 = vadd.f32 0.0, %v2419
      %v2421 = vpop.f32.mrf.mxu0
      %2422 = vmatprep.mubr.bf16.mxu0 0
      %2423 = vmatmul.mubr.bf16.gmra.mxu0 %v1712
      %v2424 = vpop.f32.mrf.mxu0
      %v2425 = vadd.f32 0.0, %v2424
      %v2426 = vpop.f32.mrf.mxu0
      %v2427 = vpop.f32.mrf.mxu0
      %v2428 = vadd.f32 0.0, %v2427
      %v2429 = vpop.f32.mrf.mxu0
      %2430 = vmatprep.mubr.bf16.mxu0 0
      %2431 = vmatmul.mubr.bf16.gmra.mxu0 %v2292
      %v2432 = vpop.f32.mrf.mxu0
      %v2433 = vadd.f32 0.0, %v2432
      %v2434 = vpop.f32.mrf.mxu0
      %v2435 = vpop.f32.mrf.mxu0
      %v2436 = vadd.f32 0.0, %v2435
      %v2437 = vpop.f32.mrf.mxu0
      %2438 = vdwg.mxu0
      %v2439 = vadd.f32 %v2249, %v2377
      %v2440 = vadd.f32 %v2250, %v2380
      %v2441 = vadd.f32 %v2251, %v2385
      %v2442 = vadd.f32 %v2252, %v2388
      %v2443 = vadd.f32 %v2253, %v2393
      %v2444 = vadd.f32 %v2254, %v2396
      %v2445 = vadd.f32 %v2255, %v2401
      %v2446 = vadd.f32 %v2256, %v2404
      %v2447 = vadd.f32 %v2257, %v2409
      %v2448 = vadd.f32 %v2258, %v2412
      %v2449 = vadd.f32 %v2259, %v2417
      %v2450 = vadd.f32 %v2260, %v2420
      %v2451 = vadd.f32 %v2261, %v2425
      %v2452 = vadd.f32 %v2262, %v2428
      %v2453 = vadd.f32 %v2263, %v2433
      %v2454 = vadd.f32 %v2264, %v2436
      %v2455 = vpack.c.bf16 %v2440, %v2439
      %v2456 = vpack.c.bf16 %v2442, %v2441
      %v2457 = vpack.c.bf16 %v2444, %v2443
      %v2458 = vpack.c.bf16 %v2446, %v2445
      %v2459 = vpack.c.bf16 %v2448, %v2447
      %v2460 = vpack.c.bf16 %v2450, %v2449
      %v2461 = vpack.c.bf16 %v2452, %v2451
      %v2462 = vpack.c.bf16 %v2454, %v2453
      %v2471 = vunpack.c.l.b16 %v2455
      %v2472 = vunpack.c.h.b16 %v2455
      %v2473 = vunpack.c.l.b16 %v2456
      %v2474 = vunpack.c.h.b16 %v2456
      %v2475 = vunpack.c.l.b16 %v2457
      %v2476 = vunpack.c.h.b16 %v2457
      %v2477 = vunpack.c.l.b16 %v2458
      %v2478 = vunpack.c.h.b16 %v2458
      %v2479 = vunpack.c.l.b16 %v2459
      %v2480 = vunpack.c.h.b16 %v2459
      %v2481 = vunpack.c.l.b16 %v2460
      %v2482 = vunpack.c.h.b16 %v2460
      %v2483 = vunpack.c.l.b16 %v2461
      %v2484 = vunpack.c.h.b16 %v2461
      %v2485 = vunpack.c.l.b16 %v2462
      %v2486 = vunpack.c.h.b16 %v2462
      %v2487 = vpack.c.b16 %v2471, %v2471
      %v2488 = vpack.c.b16 %v2472, %v2472
      %v2489 = vpack.c.b16 %v2473, %v2473
      %v2490 = vpack.c.b16 %v2474, %v2474
      %v2491 = vpack.c.b16 %v2475, %v2475
      %v2492 = vpack.c.b16 %v2476, %v2476
      %v2493 = vpack.c.b16 %v2477, %v2477
      %v2494 = vpack.c.b16 %v2478, %v2478
      %v2495 = vpack.c.b16 %v2479, %v2479
      %v2496 = vpack.c.b16 %v2480, %v2480
      %v2497 = vpack.c.b16 %v2481, %v2481
      %v2498 = vpack.c.b16 %v2482, %v2482
      %v2499 = vpack.c.b16 %v2483, %v2483
      %v2500 = vpack.c.b16 %v2484, %v2484
      %v2501 = vpack.c.b16 %v2485, %v2485
      %v2502 = vpack.c.b16 %v2486, %v2486
      %2519 = vst [vmem:[%s198] sm:$0xf] %v2487
      %2520 = vst [vmem:[%s198 + $0x4] sm:$0xf] %v2488
      %2521 = vst [vmem:[%s198 + $0x8] sm:$0xf] %v2489
      %2522 = vst [vmem:[%s198 + $0xc] sm:$0xf] %v2490
      %2523 = vst [vmem:[%s198 + $0x10] sm:$0xf] %v2491
      %2524 = vst [vmem:[%s198 + $0x14] sm:$0xf] %v2492
      %2525 = vst [vmem:[%s198 + $0x18] sm:$0xf] %v2493
      %2526 = vst [vmem:[%s198 + $0x1c] sm:$0xf] %v2494
      %2527 = vst [vmem:[%s198 + $0x20] sm:$0xf] %v2495
      %2528 = vst [vmem:[%s198 + $0x24] sm:$0xf] %v2496
      %2529 = vst [vmem:[%s198 + $0x28] sm:$0xf] %v2497
      %2530 = vst [vmem:[%s198 + $0x2c] sm:$0xf] %v2498
      %2531 = vst [vmem:[%s198 + $0x30] sm:$0xf] %v2499
      %2532 = vst [vmem:[%s198 + $0x34] sm:$0xf] %v2500
      %2533 = vst [vmem:[%s198 + $0x38] sm:$0xf] %v2501
      %2534 = vst [vmem:[%s198 + $0x3c] sm:$0xf] %v2502
      %v2535 = vadd.f32 %v2439, %v2440
      %v2536 = vadd.f32 %v2535, %v2441
      %v2537 = vadd.f32 %v2536, %v2442
      %v2538 = vadd.f32 %v2537, %v2443
      %v2539 = vadd.f32 %v2538, %v2444
      %v2540 = vadd.f32 %v2539, %v2445
      %v2541 = vadd.f32 %v2540, %v2446
      %v2542 = vadd.f32 %v2541, %v2447
      %v2543 = vadd.f32 %v2542, %v2448
      %v2544 = vadd.f32 %v2543, %v2449
      %v2545 = vadd.f32 %v2544, %v2450
      %v2546 = vadd.f32 %v2545, %v2451
      %v2547 = vadd.f32 %v2546, %v2452
      %v2548 = vadd.f32 %v2547, %v2453
      %v2549 = vadd.f32 %v2548, %v2454
      %v2550 = vrot.slane %v2549, 4
      %v2551 = vadd.f32 %v2549, %v2550
      %v2552 = vrot.slane %v2551, 2
      %v2553 = vadd.f32 %v2551, %v2552
      %v2554 = vrot.slane %v2553, 1
      %v2555 = vadd.f32 %v2553, %v2554
      %2556 = vst [vmem:[%s206] sm:$0x1] %v2555
      %v2557 = vmul.f32 %v2439, %v2439
      %v2558 = vmul.f32 %v2440, %v2440
      %v2559 = vmul.f32 %v2441, %v2441
      %v2560 = vmul.f32 %v2442, %v2442
      %v2561 = vmul.f32 %v2443, %v2443
      %v2562 = vmul.f32 %v2444, %v2444
      %v2563 = vmul.f32 %v2445, %v2445
      %v2564 = vmul.f32 %v2446, %v2446
      %v2565 = vmul.f32 %v2447, %v2447
      %v2566 = vmul.f32 %v2448, %v2448
      %v2567 = vmul.f32 %v2449, %v2449
      %v2568 = vmul.f32 %v2450, %v2450
      %v2569 = vmul.f32 %v2451, %v2451
      %v2570 = vmul.f32 %v2452, %v2452
      %v2571 = vmul.f32 %v2453, %v2453
      %v2572 = vmul.f32 %v2454, %v2454
      %v2573 = vadd.f32 %v2557, %v2558
      %v2574 = vadd.f32 %v2573, %v2559
      %v2575 = vadd.f32 %v2574, %v2560
      %v2576 = vadd.f32 %v2575, %v2561
      %v2577 = vadd.f32 %v2576, %v2562
      %v2578 = vadd.f32 %v2577, %v2563
      %v2579 = vadd.f32 %v2578, %v2564
      %v2580 = vadd.f32 %v2579, %v2565
      %v2581 = vadd.f32 %v2580, %v2566
      %v2582 = vadd.f32 %v2581, %v2567
      %v2583 = vadd.f32 %v2582, %v2568
      %v2584 = vadd.f32 %v2583, %v2569
      %v2585 = vadd.f32 %v2584, %v2570
      %v2586 = vadd.f32 %v2585, %v2571
      %v2587 = vadd.f32 %v2586, %v2572
      %v2588 = vrot.slane %v2587, 4
      %v2589 = vadd.f32 %v2587, %v2588
      %v2590 = vrot.slane %v2589, 2
      %v2591 = vadd.f32 %v2589, %v2590
      %v2592 = vrot.slane %v2591, 1
      %v2593 = vadd.f32 %v2591, %v2592
      %2594 = vst [vmem:[%s213] sm:$0x1] %v2593
      %s2595 = smul.u32 8, %s21
      %p2596 = scmp.lt.s32.totalorder %s20, 1
      %s2597 = scalar_select %p2596, %s20, 1
      %p2598 = scmp.lt.s32.totalorder %s2595, 15
      %s2599 = scalar_select %p2598, %s2595, 15
      %s2600 = smul.addr %s2599, 2
      %s2601 = smul.addr %s2597, 32
      %s2602 = sadd.s32 %s2600, %s2601
      %s2603 = smul.addr %s2602, 4
      %s2604 = scalar_lea.vmem %s2, %s2603
      %p2605 = scmp.lt.s32.totalorder %s20, 1
      %s2606 = scalar_select %p2605, %s20, 1
      %p2607 = scmp.lt.s32.totalorder %s21, 1
      %s2608 = scalar_select %p2607, %s21, 1
      %s2609 = smul.addr %s2606, 2
      %s2610 = sadd.s32 %s2608, %s2609
      %s2611 = scalar_lea.vmem %s3, %s2610
      %p2612 = scmp.lt.s32.totalorder %s20, 1
      %s2613 = scalar_select %p2612, %s20, 1
      %p2614 = scmp.lt.s32.totalorder %s21, 1
      %s2615 = scalar_select %p2614, %s21, 1
      %s2616 = smul.addr %s2613, 2
      %s2617 = sadd.s32 %s2615, %s2616
      %s2618 = scalar_lea.vmem %s4, %s2617
      // Predicated region
      $region101: #{conv5_block.7} parent=23 // pred_check
        %p2619 = pneg %p69
      $region102: #{conv5_block.7} parent=23 // pred_check_branch
        %2621 = sbr.rel (%p2619) target = $region104
      $region103: #{conv5_block.7} parent=23 // pred_region
        %s2622 = smul.u32 8, %s21
      $region104: #{conv5_block.7} parent=23 // pred_fallthru
        _
      // Predicated region
      $region105: #{conv5_block.7} parent=23 // pred_check
        %p2623 = pneg %p97
      $region106: #{conv5_block.7} parent=23 // pred_check_branch
        %2625 = sbr.rel (%p2623) target = $region108
      $region107: #{conv5_block.7} parent=23 // pred_region
        _
      $region108: #{conv5_block.7} parent=23 // pred_fallthru
        _
      // Predicated region
      $region109: #{conv5_block.7} parent=23 // pred_check
        %p2626 = pneg %p125
      $region110: #{conv5_block.7} parent=23 // pred_check_branch
        %2628 = sbr.rel (%p2626) target = $region112
      $region111: #{conv5_block.7} parent=23 // pred_region
        _
      $region112: #{conv5_block.7} parent=23 // pred_fallthru
        _
    $region24: #{conv5_block.7} parent=5 // pred_fallthru
      _
    %p2629 = scmp.le.s32.totalorder 2, %s11
    // Predicated region
    $region113: #{conv5_block.7} parent=5 // pred_check
      %p2630 = pneg %p2629
    $region114: #{conv5_block.7} parent=5 // pred_check_branch
      %2632 = sbr.rel (%p2630) target = $region116
    $region115: #{conv5_block.7} parent=5 // pred_region
      %s2633 = ssub.s32 %s11, 2
      // Predicated region
      $region117: #{conv5_block.7} parent=115 // pred_check
        %p2634 = pneg %p75
      $region118: #{conv5_block.7} parent=115 // pred_check_branch
        %2636 = sbr.rel (%p2634) target = $region120
      $region119: #{conv5_block.7} parent=115 // pred_region
        %s2637 = smul.u32 8, %s23
        %p2638 = scmp.lt.s32.totalorder %s22, 1
        %s2639 = scalar_select %p2638, %s22, 1
        %p2640 = scmp.lt.s32.totalorder %s2637, 15
        %s2641 = scalar_select %p2640, %s2637, 15
        %s2642 = smul.addr %s2641, 2
        %s2643 = smul.addr %s2639, 32
        %s2644 = sadd.s32 %s2642, %s2643
        %s2645 = smul.addr %s2644, 4
        %s2646 = scalar_lea.vmem %s2, %s2645
      $region120: #{conv5_block.7} parent=115 // pred_fallthru
        _
      // Predicated region
      $region121: #{conv5_block.7} parent=115 // pred_check
        %p2647 = pneg %p103
      $region122: #{conv5_block.7} parent=115 // pred_check_branch
        %2649 = sbr.rel (%p2647) target = $region124
      $region123: #{conv5_block.7} parent=115 // pred_region
        %p2650 = scmp.lt.s32.totalorder %s22, 1
        %s2651 = scalar_select %p2650, %s22, 1
        %p2652 = scmp.lt.s32.totalorder %s23, 1
        %s2653 = scalar_select %p2652, %s23, 1
        %s2654 = smul.addr %s2651, 2
        %s2655 = sadd.s32 %s2653, %s2654
        %s2656 = scalar_lea.vmem %s3, %s2655
      $region124: #{conv5_block.7} parent=115 // pred_fallthru
        _
      // Predicated region
      $region125: #{conv5_block.7} parent=115 // pred_check
        %p2657 = pneg %p131
      $region126: #{conv5_block.7} parent=115 // pred_check_branch
        %2659 = sbr.rel (%p2657) target = $region128
      $region127: #{conv5_block.7} parent=115 // pred_region
        %p2660 = scmp.lt.s32.totalorder %s22, 1
        %s2661 = scalar_select %p2660, %s22, 1
        %p2662 = scmp.lt.s32.totalorder %s23, 1
        %s2663 = scalar_select %p2662, %s23, 1
        %s2664 = smul.addr %s2661, 2
        %s2665 = sadd.s32 %s2663, %s2664
        %s2666 = scalar_lea.vmem %s4, %s2665
      $region128: #{conv5_block.7} parent=115 // pred_fallthru
        _
    $region116: #{conv5_block.7} parent=5 // pred_fallthru
      _
  $region6: #{conv5_block.7} parent=0 // loop_footer
    %s15 = sadd.s32 1, %s11
  $region7: #{conv5_block.7} parent=0 // loop_footer_branch
    %10 = sbr.rel target = $region3
  $region8: #{conv5_block.7} parent=0 // loop_exit
    _
  %2667 = vsyncmov [#allocation3]
  %s2668 = vpop.sfrf %2667
  %p2669 = scmp.eq.s32.totalorder %s2668, 0
  %p2670 = pneg %p2669
  %2672 = shalt.err (%p2670)
  %s2673 = scalar_lea.sflag [#allocation3], 1
  %2674 = vsyncmov %s2673
  %s2675 = vpop.sfrf %2674
  %p2676 = scmp.eq.s32.totalorder %s2675, 0
  %p2677 = pneg %p2676
  %2679 = shalt.err (%p2677)

</llo_original>
